<compile_context>
chip_gen: v7x
topology: tpu7x:2x2x1
jax: 0.10.0
libtpu: 0.0.40
codegen_flags: <defaults>
</compile_context>

<pallas_src>
import jax
import jax.numpy as jnp
from jax import lax
from jax.experimental import pallas as pl
from jax.experimental.pallas import tpu as pltpu

EMBEDDING_DIM = 50
LSTM_UNITS = 128
NUM_CLASSES = 2
NUM_WORDS = 100


def _make_blstm_kernel(T, Bp, H):
    """Kernel with static T (timesteps), Bp (padded batch), H (lstm units)."""

    def kernel(x_ref, wih_ref, whhf_ref, whhb_ref, out_ref, gates_ref):
        # (1) Hoisted input->hidden matmul for ALL timesteps and BOTH
        #     directions in one well-shaped bf16 MXU matmul, bias folded in
        #     via the constant-1 input column.
        #     x_ref: (T*Bp, Kp) bf16, wih_ref: (Kp, 8H) bf16 -> f32 scratch.
        gates_ref[...] = jnp.dot(x_ref[...], wih_ref[...],
                                 preferred_element_type=jnp.float32)

        def gate_update(g, c):
            # PyTorch gate order [i, f, g, o]; all elementwise math in f32.
            i = jax.nn.sigmoid(g[:, 0 * H:1 * H])
            f = jax.nn.sigmoid(g[:, 1 * H:2 * H])
            gg = jnp.tanh(g[:, 2 * H:3 * H])
            o = jax.nn.sigmoid(g[:, 3 * H:4 * H])
            c_new = f * c + i * gg
            h_new = o * jnp.tanh(c_new)
            return h_new, c_new

        h_f = jnp.zeros((Bp, H), jnp.float32)
        c_f = jnp.zeros((Bp, H), jnp.float32)
        h_b = jnp.zeros((Bp, H), jnp.float32)
        c_b = jnp.zeros((Bp, H), jnp.float32)

        # (2) Fused bidirectional recurrence, statically unrolled (T is small
        #     and compile-time).  Forward consumes gate row block t, backward
        #     consumes row block T-1-t; only the two bf16 (Bp,H)@(H,4H)
        #     recurrent matmuls remain on the serial critical path.
        # TODO(synk): for T > ~16 switch to lax.fori_loop(..., unroll=8) and
        # chunk the T axis with a grid so the gates scratch stays within
        # v7x's smaller (64 MiB) VMEM; optionally keep whh resident in the
        # MXU across steps via pltpu.matmul_push_rhs/acc_lhs/pop.
        for t in range(T):
            g_f = gates_ref[pl.ds(t * Bp, Bp), 0:4 * H] + jnp.dot(
                h_f.astype(jnp.bfloat16), whhf_ref[...],
                preferred_element_type=jnp.float32)
            g_b = gates_ref[pl.ds((T - 1 - t) * Bp, Bp), 4 * H:8 * H] + jnp.dot(
                h_b.astype(jnp.bfloat16), whhb_ref[...],
                preferred_element_type=jnp.float32)
            h_f, c_f = gate_update(g_f, c_f)
            h_b, c_b = gate_update(g_b, c_b)

        # == concat(h_fwd_final, h_bwd_final): exactly the PyTorch return
        # value (lstm_out[:, -1, :H] | lstm_out[:, 0, H:]).
        out_ref[:, 0:H] = h_f
        out_ref[:, H:2 * H] = h_b

    return kernel


def blstm_forward(x_tokens, params):
    """x_tokens: int32 (B, T). Returns lstm_out of shape (B, 2*LSTM_UNITS)."""
    B, T = x_tokens.shape
    H = LSTM_UNITS
    E = EMBEDDING_DIM

    # --- JAX glue: embedding gather + time-major layout --------------------
    # TODO(synk): fuse the gather in-kernel (scalar-prefetched tokens + VMEM
    # embedding table) once B*T is large enough for the HBM round trip of the
    # padded activations to matter; negligible at these toy shapes.
    emb = params["embedding"][x_tokens].astype(jnp.float32)        # (B, T, E)
    x_tm = jnp.transpose(emb, (1, 0, 2))                           # (T, B, E)

    # --- pad to TPU-friendly shapes; bias folded into a constant-1 column ---
    Bp = ((B + 7) // 8) * 8                                        # sublane multiple
    Kp = ((E + 1 + 127) // 128) * 128                              # lane multiple
    ones = jnp.ones((T, B, 1), jnp.float32)
    x_aug = jnp.concatenate([x_tm, ones], axis=-1)                 # (T, B, E+1)
    x_aug = jnp.pad(x_aug, ((0, 0), (0, Bp - B), (0, Kp - (E + 1))))
    x2d = x_aug.reshape(T * Bp, Kp).astype(jnp.bfloat16)           # (T*Bp, Kp)

    # --- one-time weight re-layout (outside the kernel) ---------------------
    # Input->hidden: forward gates in cols 0:4H, backward gates in cols 4H:8H;
    # row E carries the (ih + hh) bias, matched by the constant-1 input column.
    w_ih = jnp.zeros((Kp, 8 * H), jnp.float32)
    w_ih = w_ih.at[:E, 0:4 * H].set(params["weight_ih_l0"].T)
    w_ih = w_ih.at[:E, 4 * H:8 * H].set(params["weight_ih_l0_reverse"].T)
    w_ih = w_ih.at[E, 0:4 * H].set(params["bias_ih_l0"] + params["bias_hh_l0"])
    w_ih = w_ih.at[E, 4 * H:8 * H].set(
        params["bias_ih_l0_reverse"] + params["bias_hh_l0_reverse"])
    w_ih = w_ih.astype(jnp.bfloat16)                               # (Kp, 8H)
    # Recurrent weights: two DENSE per-direction blocks (no zero padding).
    whh_f = params["weight_hh_l0"].T.astype(jnp.bfloat16)          # (H, 4H)
    whh_b = params["weight_hh_l0_reverse"].T.astype(jnp.bfloat16)  # (H, 4H)

    vmem = pl.BlockSpec(memory_space=pltpu.MemorySpace.VMEM)
    out = pl.pallas_call(
        _make_blstm_kernel(T, Bp, H),
        out_shape=jax.ShapeDtypeStruct((Bp, 2 * H), jnp.float32),
        in_specs=[vmem, vmem, vmem, vmem],
        out_specs=vmem,
        scratch_shapes=[pltpu.VMEM((T * Bp, 8 * H), jnp.float32)],
        # NOTE: the fc layer of the PyTorch module does not affect its returned
        # value (forward returns lstm_out), so it is intentionally not computed.
    )(x2d, w_ih, whh_f, whh_b)
    return out[:B]


def init_params(key):
    E, H, C, V = EMBEDDING_DIM, LSTM_UNITS, NUM_CLASSES, NUM_WORDS
    ks = jax.random.split(key, 12)
    k_lstm = 1.0 / jnp.sqrt(H)
    k_fc = 1.0 / jnp.sqrt(2 * H)
    u = lambda k, shape, bound: jax.random.uniform(
        k, shape, jnp.float32, minval=-bound, maxval=bound)
    return {
        "embedding": jax.random.normal(ks[0], (V, E), jnp.float32),
        "weight_ih_l0": u(ks[1], (4 * H, E), k_lstm),
        "weight_hh_l0": u(ks[2], (4 * H, H), k_lstm),
        "bias_ih_l0": u(ks[3], (4 * H,), k_lstm),
        "bias_hh_l0": u(ks[4], (4 * H,), k_lstm),
        "weight_ih_l0_reverse": u(ks[5], (4 * H, E), k_lstm),
        "weight_hh_l0_reverse": u(ks[6], (4 * H, H), k_lstm),
        "bias_ih_l0_reverse": u(ks[7], (4 * H,), k_lstm),
        "bias_hh_l0_reverse": u(ks[8], (4 * H,), k_lstm),
        "fc_weight": u(ks[9], (C, 2 * H), k_fc),   # kept for module parity;
        "fc_bias": u(ks[10], (C,), k_fc),          # unused by the return value
    }


def blstm_reference(x_tokens, params):
    """Pure-JAX f32 reference of the same forward pass (for validation)."""
    H = LSTM_UNITS
    emb = params["embedding"][x_tokens].astype(jnp.float32)  # (B, T, E)
    B, T, _ = emb.shape

    def run_dir(xs, wih, whh, b_ih, b_hh):
        wih_t, whh_t, b = wih.T, whh.T, (b_ih + b_hh)[None, :]

        def step(carry, x_t):
            h, c = carry
            g = x_t @ wih_t + h @ whh_t + b
            i = jax.nn.sigmoid(g[:, 0:H])
            f = jax.nn.sigmoid(g[:, H:2 * H])
            gg = jnp.tanh(g[:, 2 * H:3 * H])
            o = jax.nn.sigmoid(g[:, 3 * H:4 * H])
            c_new = f * c + i * gg
            h_new = o * jnp.tanh(c_new)
            return (h_new, c_new), None

        (h, _), _ = lax.scan(step, (jnp.zeros((B, H)), jnp.zeros((B, H))), xs)
        return h

    xs = jnp.transpose(emb, (1, 0, 2))  # (T, B, E)
    h_fwd = run_dir(xs, params["weight_ih_l0"], params["weight_hh_l0"],
                    params["bias_ih_l0"], params["bias_hh_l0"])
    h_bwd = run_dir(xs[::-1], params["weight_ih_l0_reverse"],
                    params["weight_hh_l0_reverse"],
                    params["bias_ih_l0_reverse"], params["bias_hh_l0_reverse"])
    return jnp.concatenate([h_fwd, h_bwd], axis=1)


if __name__ == "__main__":
    key = jax.random.PRNGKey(0)
    pkey, xkey = jax.random.split(key)
    params = init_params(pkey)

    # B=8 fills all 8 sublanes; T=8 — small/toy shapes consistent with the module.
    B, T = 8, 8
    x = jax.random.randint(xkey, (B, T), 0, NUM_WORDS, dtype=jnp.int32)

    out = jax.block_until_ready(blstm_forward(x, params))
    assert out.shape == (B, 2 * LSTM_UNITS), out.shape
    assert bool(jnp.all(jnp.isfinite(out)))

    ref = jax.block_until_ready(blstm_reference(x, params))
    assert bool(jnp.allclose(out, ref, atol=1e-2, rtol=1e-2))

    print("KERNEL_OK")
</pallas_src>

<mosaic_0001>
module attributes {stable_mosaic.version = 11 : i64} {
  func.func @kernel(%arg0: memref<64x128xbf16, #tpu.memory_space<vmem>>, %arg1: memref<128x1024xbf16, #tpu.memory_space<vmem>>, %arg2: memref<128x512xbf16, #tpu.memory_space<vmem>>, %arg3: memref<128x512xbf16, #tpu.memory_space<vmem>>, %arg4: memref<8x256xf32, #tpu.memory_space<vmem>>, %arg5: memref<64x1024xf32, #tpu.memory_space<vmem>>) attributes {dimension_semantics = [], scalar_prefetch = 0 : i64, scratch_operands = 1 : i64, tpu.core_type = #tpu.core_type<tc>} {
    %c0 = arith.constant 0 : index
    %c0_0 = arith.constant 0 : index
    %0 = vector.load %arg0[%c0, %c0_0] : memref<64x128xbf16, #tpu.memory_space<vmem>>, vector<64x128xbf16>
    %c0_1 = arith.constant 0 : index
    %c0_2 = arith.constant 0 : index
    %1 = vector.load %arg1[%c0_1, %c0_2] : memref<128x1024xbf16, #tpu.memory_space<vmem>>, vector<128x1024xbf16>
    %cst = arith.constant dense<0.000000e+00> : vector<64x1024xf32>
    %2 = tpu.matmul %0, %1, %cst {dimension_numbers = #tpu.dot_dimension_numbers<[1], [0], [0], [1], [0, 0, 1, 1], [], []>} : vector<64x128xbf16>, vector<128x1024xbf16>, vector<64x1024xf32> -> vector<64x1024xf32>
    %c0_3 = arith.constant 0 : index
    %c0_4 = arith.constant 0 : index
    %3 = vector.load %arg5[%c0_3, %c0_4] : memref<64x1024xf32, #tpu.memory_space<vmem>>, vector<64x1024xf32>
    tpu.vector_store %arg5[%c0_3, %c0_4], %2 {strides = array<i32>} : memref<64x1024xf32, #tpu.memory_space<vmem>>, vector<64x1024xf32>,
    %cst_5 = arith.constant 0.000000e+00 : f32
    %4 = vector.broadcast %cst_5 : f32 to vector<8x128xf32>
    %cst_6 = arith.constant 0.000000e+00 : f32
    %5 = vector.broadcast %cst_6 : f32 to vector<8x128xf32>
    %cst_7 = arith.constant 0.000000e+00 : f32
    %6 = vector.broadcast %cst_7 : f32 to vector<8x128xf32>
    %cst_8 = arith.constant 0.000000e+00 : f32
    %7 = vector.broadcast %cst_8 : f32 to vector<8x128xf32>
    %c0_9 = arith.constant 0 : index
    %c0_10 = arith.constant 0 : index
    %8 = vector.load %arg5[%c0_9, %c0_10] : memref<64x1024xf32, #tpu.memory_space<vmem>>, vector<8x512xf32>
    %9 = arith.truncf %4 : vector<8x128xf32> to vector<8x128xbf16>
    %c0_11 = arith.constant 0 : index
    %c0_12 = arith.constant 0 : index
    %10 = vector.load %arg2[%c0_11, %c0_12] : memref<128x512xbf16, #tpu.memory_space<vmem>>, vector<128x512xbf16>
    %cst_13 = arith.constant dense<0.000000e+00> : vector<8x512xf32>
    %11 = tpu.matmul %9, %10, %cst_13 {dimension_numbers = #tpu.dot_dimension_numbers<[1], [0], [0], [1], [0, 0, 1, 1], [], []>} : vector<8x128xbf16>, vector<128x512xbf16>, vector<8x512xf32> -> vector<8x512xf32>
    %12 = arith.addf %8, %11 : vector<8x512xf32>
    %c56 = arith.constant 56 : index
    %c512 = arith.constant 512 : index
    %13 = vector.load %arg5[%c56, %c512] : memref<64x1024xf32, #tpu.memory_space<vmem>>, vector<8x512xf32>
    %14 = arith.truncf %6 : vector<8x128xf32> to vector<8x128xbf16>
    %c0_14 = arith.constant 0 : index
    %c0_15 = arith.constant 0 : index
    %15 = vector.load %arg3[%c0_14, %c0_15] : memref<128x512xbf16, #tpu.memory_space<vmem>>, vector<128x512xbf16>
    %cst_16 = arith.constant dense<0.000000e+00> : vector<8x512xf32>
    %16 = tpu.matmul %14, %15, %cst_16 {dimension_numbers = #tpu.dot_dimension_numbers<[1], [0], [0], [1], [0, 0, 1, 1], [], []>} : vector<8x128xbf16>, vector<128x512xbf16>, vector<8x512xf32> -> vector<8x512xf32>
    %17 = arith.addf %13, %16 : vector<8x512xf32>
    %18 = vector.extract_strided_slice %12 {offsets = [0, 0], sizes = [8, 128], strides = [1, 1]} : vector<8x512xf32> to vector<8x128xf32>
    %19 = arith.negf %18 : vector<8x128xf32>
    %20 = math.exp %19 : vector<8x128xf32>
    %cst_17 = arith.constant 1.000000e+00 : f32
    %21 = vector.broadcast %cst_17 : f32 to vector<8x128xf32>
    %22 = arith.addf %21, %20 : vector<8x128xf32>
    %23 = arith.divf %21, %22 : vector<8x128xf32>
    %24 = vector.extract_strided_slice %12 {offsets = [0, 128], sizes = [8, 128], strides = [1, 1]} : vector<8x512xf32> to vector<8x128xf32>
    %25 = arith.negf %24 : vector<8x128xf32>
    %26 = math.exp %25 : vector<8x128xf32>
    %cst_18 = arith.constant 1.000000e+00 : f32
    %27 = vector.broadcast %cst_18 : f32 to vector<8x128xf32>
    %28 = arith.addf %27, %26 : vector<8x128xf32>
    %29 = arith.divf %27, %28 : vector<8x128xf32>
    %30 = vector.extract_strided_slice %12 {offsets = [0, 256], sizes = [8, 128], strides = [1, 1]} : vector<8x512xf32> to vector<8x128xf32>
    %31 = math.tanh %30 : vector<8x128xf32>
    %32 = vector.extract_strided_slice %12 {offsets = [0, 384], sizes = [8, 128], strides = [1, 1]} : vector<8x512xf32> to vector<8x128xf32>
    %33 = arith.negf %32 : vector<8x128xf32>
    %34 = math.exp %33 : vector<8x128xf32>
    %cst_19 = arith.constant 1.000000e+00 : f32
    %35 = vector.broadcast %cst_19 : f32 to vector<8x128xf32>
    %36 = arith.addf %35, %34 : vector<8x128xf32>
    %37 = arith.divf %35, %36 : vector<8x128xf32>
    %38 = arith.mulf %29, %5 : vector<8x128xf32>
    %39 = arith.mulf %23, %31 : vector<8x128xf32>
    %40 = arith.addf %38, %39 : vector<8x128xf32>
    %41 = math.tanh %40 : vector<8x128xf32>
    %42 = arith.mulf %37, %41 : vector<8x128xf32>
    %43 = vector.extract_strided_slice %17 {offsets = [0, 0], sizes = [8, 128], strides = [1, 1]} : vector<8x512xf32> to vector<8x128xf32>
    %44 = arith.negf %43 : vector<8x128xf32>
    %45 = math.exp %44 : vector<8x128xf32>
    %cst_20 = arith.constant 1.000000e+00 : f32
    %46 = vector.broadcast %cst_20 : f32 to vector<8x128xf32>
    %47 = arith.addf %46, %45 : vector<8x128xf32>
    %48 = arith.divf %46, %47 : vector<8x128xf32>
    %49 = vector.extract_strided_slice %17 {offsets = [0, 128], sizes = [8, 128], strides = [1, 1]} : vector<8x512xf32> to vector<8x128xf32>
    %50 = arith.negf %49 : vector<8x128xf32>
    %51 = math.exp %50 : vector<8x128xf32>
    %cst_21 = arith.constant 1.000000e+00 : f32
    %52 = vector.broadcast %cst_21 : f32 to vector<8x128xf32>
    %53 = arith.addf %52, %51 : vector<8x128xf32>
    %54 = arith.divf %52, %53 : vector<8x128xf32>
    %55 = vector.extract_strided_slice %17 {offsets = [0, 256], sizes = [8, 128], strides = [1, 1]} : vector<8x512xf32> to vector<8x128xf32>
    %56 = math.tanh %55 : vector<8x128xf32>
    %57 = vector.extract_strided_slice %17 {offsets = [0, 384], sizes = [8, 128], strides = [1, 1]} : vector<8x512xf32> to vector<8x128xf32>
    %58 = arith.negf %57 : vector<8x128xf32>
    %59 = math.exp %58 : vector<8x128xf32>
    %cst_22 = arith.constant 1.000000e+00 : f32
    %60 = vector.broadcast %cst_22 : f32 to vector<8x128xf32>
    %61 = arith.addf %60, %59 : vector<8x128xf32>
    %62 = arith.divf %60, %61 : vector<8x128xf32>
    %63 = arith.mulf %54, %7 : vector<8x128xf32>
    %64 = arith.mulf %48, %56 : vector<8x128xf32>
    %65 = arith.addf %63, %64 : vector<8x128xf32>
    %66 = math.tanh %65 : vector<8x128xf32>
    %67 = arith.mulf %62, %66 : vector<8x128xf32>
    %c8 = arith.constant 8 : index
    %c0_23 = arith.constant 0 : index
    %68 = vector.load %arg5[%c8, %c0_23] : memref<64x1024xf32, #tpu.memory_space<vmem>>, vector<8x512xf32>
    %69 = arith.truncf %42 : vector<8x128xf32> to vector<8x128xbf16>
    %c0_24 = arith.constant 0 : index
    %c0_25 = arith.constant 0 : index
    %70 = vector.load %arg2[%c0_24, %c0_25] : memref<128x512xbf16, #tpu.memory_space<vmem>>, vector<128x512xbf16>
    %cst_26 = arith.constant dense<0.000000e+00> : vector<8x512xf32>
    %71 = tpu.matmul %69, %70, %cst_26 {dimension_numbers = #tpu.dot_dimension_numbers<[1], [0], [0], [1], [0, 0, 1, 1], [], []>} : vector<8x128xbf16>, vector<128x512xbf16>, vector<8x512xf32> -> vector<8x512xf32>
    %72 = arith.addf %68, %71 : vector<8x512xf32>
    %c48 = arith.constant 48 : index
    %c512_27 = arith.constant 512 : index
    %73 = vector.load %arg5[%c48, %c512_27] : memref<64x1024xf32, #tpu.memory_space<vmem>>, vector<8x512xf32>
    %74 = arith.truncf %67 : vector<8x128xf32> to vector<8x128xbf16>
    %c0_28 = arith.constant 0 : index
    %c0_29 = arith.constant 0 : index
    %75 = vector.load %arg3[%c0_28, %c0_29] : memref<128x512xbf16, #tpu.memory_space<vmem>>, vector<128x512xbf16>
    %cst_30 = arith.constant dense<0.000000e+00> : vector<8x512xf32>
    %76 = tpu.matmul %74, %75, %cst_30 {dimension_numbers = #tpu.dot_dimension_numbers<[1], [0], [0], [1], [0, 0, 1, 1], [], []>} : vector<8x128xbf16>, vector<128x512xbf16>, vector<8x512xf32> -> vector<8x512xf32>
    %77 = arith.addf %73, %76 : vector<8x512xf32>
    %78 = vector.extract_strided_slice %72 {offsets = [0, 0], sizes = [8, 128], strides = [1, 1]} : vector<8x512xf32> to vector<8x128xf32>
    %79 = arith.negf %78 : vector<8x128xf32>
    %80 = math.exp %79 : vector<8x128xf32>
    %cst_31 = arith.constant 1.000000e+00 : f32
    %81 = vector.broadcast %cst_31 : f32 to vector<8x128xf32>
    %82 = arith.addf %81, %80 : vector<8x128xf32>
    %83 = arith.divf %81, %82 : vector<8x128xf32>
    %84 = vector.extract_strided_slice %72 {offsets = [0, 128], sizes = [8, 128], strides = [1, 1]} : vector<8x512xf32> to vector<8x128xf32>
    %85 = arith.negf %84 : vector<8x128xf32>
    %86 = math.exp %85 : vector<8x128xf32>
    %cst_32 = arith.constant 1.000000e+00 : f32
    %87 = vector.broadcast %cst_32 : f32 to vector<8x128xf32>
    %88 = arith.addf %87, %86 : vector<8x128xf32>
    %89 = arith.divf %87, %88 : vector<8x128xf32>
    %90 = vector.extract_strided_slice %72 {offsets = [0, 256], sizes = [8, 128], strides = [1, 1]} : vector<8x512xf32> to vector<8x128xf32>
    %91 = math.tanh %90 : vector<8x128xf32>
    %92 = vector.extract_strided_slice %72 {offsets = [0, 384], sizes = [8, 128], strides = [1, 1]} : vector<8x512xf32> to vector<8x128xf32>
    %93 = arith.negf %92 : vector<8x128xf32>
    %94 = math.exp %93 : vector<8x128xf32>
    %cst_33 = arith.constant 1.000000e+00 : f32
    %95 = vector.broadcast %cst_33 : f32 to vector<8x128xf32>
    %96 = arith.addf %95, %94 : vector<8x128xf32>
    %97 = arith.divf %95, %96 : vector<8x128xf32>
    %98 = arith.mulf %89, %40 : vector<8x128xf32>
    %99 = arith.mulf %83, %91 : vector<8x128xf32>
    %100 = arith.addf %98, %99 : vector<8x128xf32>
    %101 = math.tanh %100 : vector<8x128xf32>
    %102 = arith.mulf %97, %101 : vector<8x128xf32>
    %103 = vector.extract_strided_slice %77 {offsets = [0, 0], sizes = [8, 128], strides = [1, 1]} : vector<8x512xf32> to vector<8x128xf32>
    %104 = arith.negf %103 : vector<8x128xf32>
    %105 = math.exp %104 : vector<8x128xf32>
    %cst_34 = arith.constant 1.000000e+00 : f32
    %106 = vector.broadcast %cst_34 : f32 to vector<8x128xf32>
    %107 = arith.addf %106, %105 : vector<8x128xf32>
    %108 = arith.divf %106, %107 : vector<8x128xf32>
    %109 = vector.extract_strided_slice %77 {offsets = [0, 128], sizes = [8, 128], strides = [1, 1]} : vector<8x512xf32> to vector<8x128xf32>
    %110 = arith.negf %109 : vector<8x128xf32>
    %111 = math.exp %110 : vector<8x128xf32>
    %cst_35 = arith.constant 1.000000e+00 : f32
    %112 = vector.broadcast %cst_35 : f32 to vector<8x128xf32>
    %113 = arith.addf %112, %111 : vector<8x128xf32>
    %114 = arith.divf %112, %113 : vector<8x128xf32>
    %115 = vector.extract_strided_slice %77 {offsets = [0, 256], sizes = [8, 128], strides = [1, 1]} : vector<8x512xf32> to vector<8x128xf32>
    %116 = math.tanh %115 : vector<8x128xf32>
    %117 = vector.extract_strided_slice %77 {offsets = [0, 384], sizes = [8, 128], strides = [1, 1]} : vector<8x512xf32> to vector<8x128xf32>
    %118 = arith.negf %117 : vector<8x128xf32>
    %119 = math.exp %118 : vector<8x128xf32>
    %cst_36 = arith.constant 1.000000e+00 : f32
    %120 = vector.broadcast %cst_36 : f32 to vector<8x128xf32>
    %121 = arith.addf %120, %119 : vector<8x128xf32>
    %122 = arith.divf %120, %121 : vector<8x128xf32>
    %123 = arith.mulf %114, %65 : vector<8x128xf32>
    %124 = arith.mulf %108, %116 : vector<8x128xf32>
    %125 = arith.addf %123, %124 : vector<8x128xf32>
    %126 = math.tanh %125 : vector<8x128xf32>
    %127 = arith.mulf %122, %126 : vector<8x128xf32>
    %c16 = arith.constant 16 : index
    %c0_37 = arith.constant 0 : index
    %128 = vector.load %arg5[%c16, %c0_37] : memref<64x1024xf32, #tpu.memory_space<vmem>>, vector<8x512xf32>
    %129 = arith.truncf %102 : vector<8x128xf32> to vector<8x128xbf16>
    %c0_38 = arith.constant 0 : index
    %c0_39 = arith.constant 0 : index
    %130 = vector.load %arg2[%c0_38, %c0_39] : memref<128x512xbf16, #tpu.memory_space<vmem>>, vector<128x512xbf16>
    %cst_40 = arith.constant dense<0.000000e+00> : vector<8x512xf32>
    %131 = tpu.matmul %129, %130, %cst_40 {dimension_numbers = #tpu.dot_dimension_numbers<[1], [0], [0], [1], [0, 0, 1, 1], [], []>} : vector<8x128xbf16>, vector<128x512xbf16>, vector<8x512xf32> -> vector<8x512xf32>
    %132 = arith.addf %128, %131 : vector<8x512xf32>
    %c40 = arith.constant 40 : index
    %c512_41 = arith.constant 512 : index
    %133 = vector.load %arg5[%c40, %c512_41] : memref<64x1024xf32, #tpu.memory_space<vmem>>, vector<8x512xf32>
    %134 = arith.truncf %127 : vector<8x128xf32> to vector<8x128xbf16>
    %c0_42 = arith.constant 0 : index
    %c0_43 = arith.constant 0 : index
    %135 = vector.load %arg3[%c0_42, %c0_43] : memref<128x512xbf16, #tpu.memory_space<vmem>>, vector<128x512xbf16>
    %cst_44 = arith.constant dense<0.000000e+00> : vector<8x512xf32>
    %136 = tpu.matmul %134, %135, %cst_44 {dimension_numbers = #tpu.dot_dimension_numbers<[1], [0], [0], [1], [0, 0, 1, 1], [], []>} : vector<8x128xbf16>, vector<128x512xbf16>, vector<8x512xf32> -> vector<8x512xf32>
    %137 = arith.addf %133, %136 : vector<8x512xf32>
    %138 = vector.extract_strided_slice %132 {offsets = [0, 0], sizes = [8, 128], strides = [1, 1]} : vector<8x512xf32> to vector<8x128xf32>
    %139 = arith.negf %138 : vector<8x128xf32>
    %140 = math.exp %139 : vector<8x128xf32>
    %cst_45 = arith.constant 1.000000e+00 : f32
    %141 = vector.broadcast %cst_45 : f32 to vector<8x128xf32>
    %142 = arith.addf %141, %140 : vector<8x128xf32>
    %143 = arith.divf %141, %142 : vector<8x128xf32>
    %144 = vector.extract_strided_slice %132 {offsets = [0, 128], sizes = [8, 128], strides = [1, 1]} : vector<8x512xf32> to vector<8x128xf32>
    %145 = arith.negf %144 : vector<8x128xf32>
    %146 = math.exp %145 : vector<8x128xf32>
    %cst_46 = arith.constant 1.000000e+00 : f32
    %147 = vector.broadcast %cst_46 : f32 to vector<8x128xf32>
    %148 = arith.addf %147, %146 : vector<8x128xf32>
    %149 = arith.divf %147, %148 : vector<8x128xf32>
    %150 = vector.extract_strided_slice %132 {offsets = [0, 256], sizes = [8, 128], strides = [1, 1]} : vector<8x512xf32> to vector<8x128xf32>
    %151 = math.tanh %150 : vector<8x128xf32>
    %152 = vector.extract_strided_slice %132 {offsets = [0, 384], sizes = [8, 128], strides = [1, 1]} : vector<8x512xf32> to vector<8x128xf32>
    %153 = arith.negf %152 : vector<8x128xf32>
    %154 = math.exp %153 : vector<8x128xf32>
    %cst_47 = arith.constant 1.000000e+00 : f32
    %155 = vector.broadcast %cst_47 : f32 to vector<8x128xf32>
    %156 = arith.addf %155, %154 : vector<8x128xf32>
    %157 = arith.divf %155, %156 : vector<8x128xf32>
    %158 = arith.mulf %149, %100 : vector<8x128xf32>
    %159 = arith.mulf %143, %151 : vector<8x128xf32>
    %160 = arith.addf %158, %159 : vector<8x128xf32>
    %161 = math.tanh %160 : vector<8x128xf32>
    %162 = arith.mulf %157, %161 : vector<8x128xf32>
    %163 = vector.extract_strided_slice %137 {offsets = [0, 0], sizes = [8, 128], strides = [1, 1]} : vector<8x512xf32> to vector<8x128xf32>
    %164 = arith.negf %163 : vector<8x128xf32>
    %165 = math.exp %164 : vector<8x128xf32>
    %cst_48 = arith.constant 1.000000e+00 : f32
    %166 = vector.broadcast %cst_48 : f32 to vector<8x128xf32>
    %167 = arith.addf %166, %165 : vector<8x128xf32>
    %168 = arith.divf %166, %167 : vector<8x128xf32>
    %169 = vector.extract_strided_slice %137 {offsets = [0, 128], sizes = [8, 128], strides = [1, 1]} : vector<8x512xf32> to vector<8x128xf32>
    %170 = arith.negf %169 : vector<8x128xf32>
    %171 = math.exp %170 : vector<8x128xf32>
    %cst_49 = arith.constant 1.000000e+00 : f32
    %172 = vector.broadcast %cst_49 : f32 to vector<8x128xf32>
    %173 = arith.addf %172, %171 : vector<8x128xf32>
    %174 = arith.divf %172, %173 : vector<8x128xf32>
    %175 = vector.extract_strided_slice %137 {offsets = [0, 256], sizes = [8, 128], strides = [1, 1]} : vector<8x512xf32> to vector<8x128xf32>
    %176 = math.tanh %175 : vector<8x128xf32>
    %177 = vector.extract_strided_slice %137 {offsets = [0, 384], sizes = [8, 128], strides = [1, 1]} : vector<8x512xf32> to vector<8x128xf32>
    %178 = arith.negf %177 : vector<8x128xf32>
    %179 = math.exp %178 : vector<8x128xf32>
    %cst_50 = arith.constant 1.000000e+00 : f32
    %180 = vector.broadcast %cst_50 : f32 to vector<8x128xf32>
    %181 = arith.addf %180, %179 : vector<8x128xf32>
    %182 = arith.divf %180, %181 : vector<8x128xf32>
    %183 = arith.mulf %174, %125 : vector<8x128xf32>
    %184 = arith.mulf %168, %176 : vector<8x128xf32>
    %185 = arith.addf %183, %184 : vector<8x128xf32>
    %186 = math.tanh %185 : vector<8x128xf32>
    %187 = arith.mulf %182, %186 : vector<8x128xf32>
    %c24 = arith.constant 24 : index
    %c0_51 = arith.constant 0 : index
    %188 = vector.load %arg5[%c24, %c0_51] : memref<64x1024xf32, #tpu.memory_space<vmem>>, vector<8x512xf32>
    %189 = arith.truncf %162 : vector<8x128xf32> to vector<8x128xbf16>
    %c0_52 = arith.constant 0 : index
    %c0_53 = arith.constant 0 : index
    %190 = vector.load %arg2[%c0_52, %c0_53] : memref<128x512xbf16, #tpu.memory_space<vmem>>, vector<128x512xbf16>
    %cst_54 = arith.constant dense<0.000000e+00> : vector<8x512xf32>
    %191 = tpu.matmul %189, %190, %cst_54 {dimension_numbers = #tpu.dot_dimension_numbers<[1], [0], [0], [1], [0, 0, 1, 1], [], []>} : vector<8x128xbf16>, vector<128x512xbf16>, vector<8x512xf32> -> vector<8x512xf32>
    %192 = arith.addf %188, %191 : vector<8x512xf32>
    %c32 = arith.constant 32 : index
    %c512_55 = arith.constant 512 : index
    %193 = vector.load %arg5[%c32, %c512_55] : memref<64x1024xf32, #tpu.memory_space<vmem>>, vector<8x512xf32>
    %194 = arith.truncf %187 : vector<8x128xf32> to vector<8x128xbf16>
    %c0_56 = arith.constant 0 : index
    %c0_57 = arith.constant 0 : index
    %195 = vector.load %arg3[%c0_56, %c0_57] : memref<128x512xbf16, #tpu.memory_space<vmem>>, vector<128x512xbf16>
    %cst_58 = arith.constant dense<0.000000e+00> : vector<8x512xf32>
    %196 = tpu.matmul %194, %195, %cst_58 {dimension_numbers = #tpu.dot_dimension_numbers<[1], [0], [0], [1], [0, 0, 1, 1], [], []>} : vector<8x128xbf16>, vector<128x512xbf16>, vector<8x512xf32> -> vector<8x512xf32>
    %197 = arith.addf %193, %196 : vector<8x512xf32>
    %198 = vector.extract_strided_slice %192 {offsets = [0, 0], sizes = [8, 128], strides = [1, 1]} : vector<8x512xf32> to vector<8x128xf32>
    %199 = arith.negf %198 : vector<8x128xf32>
    %200 = math.exp %199 : vector<8x128xf32>
    %cst_59 = arith.constant 1.000000e+00 : f32
    %201 = vector.broadcast %cst_59 : f32 to vector<8x128xf32>
    %202 = arith.addf %201, %200 : vector<8x128xf32>
    %203 = arith.divf %201, %202 : vector<8x128xf32>
    %204 = vector.extract_strided_slice %192 {offsets = [0, 128], sizes = [8, 128], strides = [1, 1]} : vector<8x512xf32> to vector<8x128xf32>
    %205 = arith.negf %204 : vector<8x128xf32>
    %206 = math.exp %205 : vector<8x128xf32>
    %cst_60 = arith.constant 1.000000e+00 : f32
    %207 = vector.broadcast %cst_60 : f32 to vector<8x128xf32>
    %208 = arith.addf %207, %206 : vector<8x128xf32>
    %209 = arith.divf %207, %208 : vector<8x128xf32>
    %210 = vector.extract_strided_slice %192 {offsets = [0, 256], sizes = [8, 128], strides = [1, 1]} : vector<8x512xf32> to vector<8x128xf32>
    %211 = math.tanh %210 : vector<8x128xf32>
    %212 = vector.extract_strided_slice %192 {offsets = [0, 384], sizes = [8, 128], strides = [1, 1]} : vector<8x512xf32> to vector<8x128xf32>
    %213 = arith.negf %212 : vector<8x128xf32>
    %214 = math.exp %213 : vector<8x128xf32>
    %cst_61 = arith.constant 1.000000e+00 : f32
    %215 = vector.broadcast %cst_61 : f32 to vector<8x128xf32>
    %216 = arith.addf %215, %214 : vector<8x128xf32>
    %217 = arith.divf %215, %216 : vector<8x128xf32>
    %218 = arith.mulf %209, %160 : vector<8x128xf32>
    %219 = arith.mulf %203, %211 : vector<8x128xf32>
    %220 = arith.addf %218, %219 : vector<8x128xf32>
    %221 = math.tanh %220 : vector<8x128xf32>
    %222 = arith.mulf %217, %221 : vector<8x128xf32>
    %223 = vector.extract_strided_slice %197 {offsets = [0, 0], sizes = [8, 128], strides = [1, 1]} : vector<8x512xf32> to vector<8x128xf32>
    %224 = arith.negf %223 : vector<8x128xf32>
    %225 = math.exp %224 : vector<8x128xf32>
    %cst_62 = arith.constant 1.000000e+00 : f32
    %226 = vector.broadcast %cst_62 : f32 to vector<8x128xf32>
    %227 = arith.addf %226, %225 : vector<8x128xf32>
    %228 = arith.divf %226, %227 : vector<8x128xf32>
    %229 = vector.extract_strided_slice %197 {offsets = [0, 128], sizes = [8, 128], strides = [1, 1]} : vector<8x512xf32> to vector<8x128xf32>
    %230 = arith.negf %229 : vector<8x128xf32>
    %231 = math.exp %230 : vector<8x128xf32>
    %cst_63 = arith.constant 1.000000e+00 : f32
    %232 = vector.broadcast %cst_63 : f32 to vector<8x128xf32>
    %233 = arith.addf %232, %231 : vector<8x128xf32>
    %234 = arith.divf %232, %233 : vector<8x128xf32>
    %235 = vector.extract_strided_slice %197 {offsets = [0, 256], sizes = [8, 128], strides = [1, 1]} : vector<8x512xf32> to vector<8x128xf32>
    %236 = math.tanh %235 : vector<8x128xf32>
    %237 = vector.extract_strided_slice %197 {offsets = [0, 384], sizes = [8, 128], strides = [1, 1]} : vector<8x512xf32> to vector<8x128xf32>
    %238 = arith.negf %237 : vector<8x128xf32>
    %239 = math.exp %238 : vector<8x128xf32>
    %cst_64 = arith.constant 1.000000e+00 : f32
    %240 = vector.broadcast %cst_64 : f32 to vector<8x128xf32>
    %241 = arith.addf %240, %239 : vector<8x128xf32>
    %242 = arith.divf %240, %241 : vector<8x128xf32>
    %243 = arith.mulf %234, %185 : vector<8x128xf32>
    %244 = arith.mulf %228, %236 : vector<8x128xf32>
    %245 = arith.addf %243, %244 : vector<8x128xf32>
    %246 = math.tanh %245 : vector<8x128xf32>
    %247 = arith.mulf %242, %246 : vector<8x128xf32>
    %c32_65 = arith.constant 32 : index
    %c0_66 = arith.constant 0 : index
    %248 = vector.load %arg5[%c32_65, %c0_66] : memref<64x1024xf32, #tpu.memory_space<vmem>>, vector<8x512xf32>
    %249 = arith.truncf %222 : vector<8x128xf32> to vector<8x128xbf16>
    %c0_67 = arith.constant 0 : index
    %c0_68 = arith.constant 0 : index
    %250 = vector.load %arg2[%c0_67, %c0_68] : memref<128x512xbf16, #tpu.memory_space<vmem>>, vector<128x512xbf16>
    %cst_69 = arith.constant dense<0.000000e+00> : vector<8x512xf32>
    %251 = tpu.matmul %249, %250, %cst_69 {dimension_numbers = #tpu.dot_dimension_numbers<[1], [0], [0], [1], [0, 0, 1, 1], [], []>} : vector<8x128xbf16>, vector<128x512xbf16>, vector<8x512xf32> -> vector<8x512xf32>
    %252 = arith.addf %248, %251 : vector<8x512xf32>
    %c24_70 = arith.constant 24 : index
    %c512_71 = arith.constant 512 : index
    %253 = vector.load %arg5[%c24_70, %c512_71] : memref<64x1024xf32, #tpu.memory_space<vmem>>, vector<8x512xf32>
    %254 = arith.truncf %247 : vector<8x128xf32> to vector<8x128xbf16>
    %c0_72 = arith.constant 0 : index
    %c0_73 = arith.constant 0 : index
    %255 = vector.load %arg3[%c0_72, %c0_73] : memref<128x512xbf16, #tpu.memory_space<vmem>>, vector<128x512xbf16>
    %cst_74 = arith.constant dense<0.000000e+00> : vector<8x512xf32>
    %256 = tpu.matmul %254, %255, %cst_74 {dimension_numbers = #tpu.dot_dimension_numbers<[1], [0], [0], [1], [0, 0, 1, 1], [], []>} : vector<8x128xbf16>, vector<128x512xbf16>, vector<8x512xf32> -> vector<8x512xf32>
    %257 = arith.addf %253, %256 : vector<8x512xf32>
    %258 = vector.extract_strided_slice %252 {offsets = [0, 0], sizes = [8, 128], strides = [1, 1]} : vector<8x512xf32> to vector<8x128xf32>
    %259 = arith.negf %258 : vector<8x128xf32>
    %260 = math.exp %259 : vector<8x128xf32>
    %cst_75 = arith.constant 1.000000e+00 : f32
    %261 = vector.broadcast %cst_75 : f32 to vector<8x128xf32>
    %262 = arith.addf %261, %260 : vector<8x128xf32>
    %263 = arith.divf %261, %262 : vector<8x128xf32>
    %264 = vector.extract_strided_slice %252 {offsets = [0, 128], sizes = [8, 128], strides = [1, 1]} : vector<8x512xf32> to vector<8x128xf32>
    %265 = arith.negf %264 : vector<8x128xf32>
    %266 = math.exp %265 : vector<8x128xf32>
    %cst_76 = arith.constant 1.000000e+00 : f32
    %267 = vector.broadcast %cst_76 : f32 to vector<8x128xf32>
    %268 = arith.addf %267, %266 : vector<8x128xf32>
    %269 = arith.divf %267, %268 : vector<8x128xf32>
    %270 = vector.extract_strided_slice %252 {offsets = [0, 256], sizes = [8, 128], strides = [1, 1]} : vector<8x512xf32> to vector<8x128xf32>
    %271 = math.tanh %270 : vector<8x128xf32>
    %272 = vector.extract_strided_slice %252 {offsets = [0, 384], sizes = [8, 128], strides = [1, 1]} : vector<8x512xf32> to vector<8x128xf32>
    %273 = arith.negf %272 : vector<8x128xf32>
    %274 = math.exp %273 : vector<8x128xf32>
    %cst_77 = arith.constant 1.000000e+00 : f32
    %275 = vector.broadcast %cst_77 : f32 to vector<8x128xf32>
    %276 = arith.addf %275, %274 : vector<8x128xf32>
    %277 = arith.divf %275, %276 : vector<8x128xf32>
    %278 = arith.mulf %269, %220 : vector<8x128xf32>
    %279 = arith.mulf %263, %271 : vector<8x128xf32>
    %280 = arith.addf %278, %279 : vector<8x128xf32>
    %281 = math.tanh %280 : vector<8x128xf32>
    %282 = arith.mulf %277, %281 : vector<8x128xf32>
    %283 = vector.extract_strided_slice %257 {offsets = [0, 0], sizes = [8, 128], strides = [1, 1]} : vector<8x512xf32> to vector<8x128xf32>
    %284 = arith.negf %283 : vector<8x128xf32>
    %285 = math.exp %284 : vector<8x128xf32>
    %cst_78 = arith.constant 1.000000e+00 : f32
    %286 = vector.broadcast %cst_78 : f32 to vector<8x128xf32>
    %287 = arith.addf %286, %285 : vector<8x128xf32>
    %288 = arith.divf %286, %287 : vector<8x128xf32>
    %289 = vector.extract_strided_slice %257 {offsets = [0, 128], sizes = [8, 128], strides = [1, 1]} : vector<8x512xf32> to vector<8x128xf32>
    %290 = arith.negf %289 : vector<8x128xf32>
    %291 = math.exp %290 : vector<8x128xf32>
    %cst_79 = arith.constant 1.000000e+00 : f32
    %292 = vector.broadcast %cst_79 : f32 to vector<8x128xf32>
    %293 = arith.addf %292, %291 : vector<8x128xf32>
    %294 = arith.divf %292, %293 : vector<8x128xf32>
    %295 = vector.extract_strided_slice %257 {offsets = [0, 256], sizes = [8, 128], strides = [1, 1]} : vector<8x512xf32> to vector<8x128xf32>
    %296 = math.tanh %295 : vector<8x128xf32>
    %297 = vector.extract_strided_slice %257 {offsets = [0, 384], sizes = [8, 128], strides = [1, 1]} : vector<8x512xf32> to vector<8x128xf32>
    %298 = arith.negf %297 : vector<8x128xf32>
    %299 = math.exp %298 : vector<8x128xf32>
    %cst_80 = arith.constant 1.000000e+00 : f32
    %300 = vector.broadcast %cst_80 : f32 to vector<8x128xf32>
    %301 = arith.addf %300, %299 : vector<8x128xf32>
    %302 = arith.divf %300, %301 : vector<8x128xf32>
    %303 = arith.mulf %294, %245 : vector<8x128xf32>
    %304 = arith.mulf %288, %296 : vector<8x128xf32>
    %305 = arith.addf %303, %304 : vector<8x128xf32>
    %306 = math.tanh %305 : vector<8x128xf32>
    %307 = arith.mulf %302, %306 : vector<8x128xf32>
    %c40_81 = arith.constant 40 : index
    %c0_82 = arith.constant 0 : index
    %308 = vector.load %arg5[%c40_81, %c0_82] : memref<64x1024xf32, #tpu.memory_space<vmem>>, vector<8x512xf32>
    %309 = arith.truncf %282 : vector<8x128xf32> to vector<8x128xbf16>
    %c0_83 = arith.constant 0 : index
    %c0_84 = arith.constant 0 : index
    %310 = vector.load %arg2[%c0_83, %c0_84] : memref<128x512xbf16, #tpu.memory_space<vmem>>, vector<128x512xbf16>
    %cst_85 = arith.constant dense<0.000000e+00> : vector<8x512xf32>
    %311 = tpu.matmul %309, %310, %cst_85 {dimension_numbers = #tpu.dot_dimension_numbers<[1], [0], [0], [1], [0, 0, 1, 1], [], []>} : vector<8x128xbf16>, vector<128x512xbf16>, vector<8x512xf32> -> vector<8x512xf32>
    %312 = arith.addf %308, %311 : vector<8x512xf32>
    %c16_86 = arith.constant 16 : index
    %c512_87 = arith.constant 512 : index
    %313 = vector.load %arg5[%c16_86, %c512_87] : memref<64x1024xf32, #tpu.memory_space<vmem>>, vector<8x512xf32>
    %314 = arith.truncf %307 : vector<8x128xf32> to vector<8x128xbf16>
    %c0_88 = arith.constant 0 : index
    %c0_89 = arith.constant 0 : index
    %315 = vector.load %arg3[%c0_88, %c0_89] : memref<128x512xbf16, #tpu.memory_space<vmem>>, vector<128x512xbf16>
    %cst_90 = arith.constant dense<0.000000e+00> : vector<8x512xf32>
    %316 = tpu.matmul %314, %315, %cst_90 {dimension_numbers = #tpu.dot_dimension_numbers<[1], [0], [0], [1], [0, 0, 1, 1], [], []>} : vector<8x128xbf16>, vector<128x512xbf16>, vector<8x512xf32> -> vector<8x512xf32>
    %317 = arith.addf %313, %316 : vector<8x512xf32>
    %318 = vector.extract_strided_slice %312 {offsets = [0, 0], sizes = [8, 128], strides = [1, 1]} : vector<8x512xf32> to vector<8x128xf32>
    %319 = arith.negf %318 : vector<8x128xf32>
    %320 = math.exp %319 : vector<8x128xf32>
    %cst_91 = arith.constant 1.000000e+00 : f32
    %321 = vector.broadcast %cst_91 : f32 to vector<8x128xf32>
    %322 = arith.addf %321, %320 : vector<8x128xf32>
    %323 = arith.divf %321, %322 : vector<8x128xf32>
    %324 = vector.extract_strided_slice %312 {offsets = [0, 128], sizes = [8, 128], strides = [1, 1]} : vector<8x512xf32> to vector<8x128xf32>
    %325 = arith.negf %324 : vector<8x128xf32>
    %326 = math.exp %325 : vector<8x128xf32>
    %cst_92 = arith.constant 1.000000e+00 : f32
    %327 = vector.broadcast %cst_92 : f32 to vector<8x128xf32>
    %328 = arith.addf %327, %326 : vector<8x128xf32>
    %329 = arith.divf %327, %328 : vector<8x128xf32>
    %330 = vector.extract_strided_slice %312 {offsets = [0, 256], sizes = [8, 128], strides = [1, 1]} : vector<8x512xf32> to vector<8x128xf32>
    %331 = math.tanh %330 : vector<8x128xf32>
    %332 = vector.extract_strided_slice %312 {offsets = [0, 384], sizes = [8, 128], strides = [1, 1]} : vector<8x512xf32> to vector<8x128xf32>
    %333 = arith.negf %332 : vector<8x128xf32>
    %334 = math.exp %333 : vector<8x128xf32>
    %cst_93 = arith.constant 1.000000e+00 : f32
    %335 = vector.broadcast %cst_93 : f32 to vector<8x128xf32>
    %336 = arith.addf %335, %334 : vector<8x128xf32>
    %337 = arith.divf %335, %336 : vector<8x128xf32>
    %338 = arith.mulf %329, %280 : vector<8x128xf32>
    %339 = arith.mulf %323, %331 : vector<8x128xf32>
    %340 = arith.addf %338, %339 : vector<8x128xf32>
    %341 = math.tanh %340 : vector<8x128xf32>
    %342 = arith.mulf %337, %341 : vector<8x128xf32>
    %343 = vector.extract_strided_slice %317 {offsets = [0, 0], sizes = [8, 128], strides = [1, 1]} : vector<8x512xf32> to vector<8x128xf32>
    %344 = arith.negf %343 : vector<8x128xf32>
    %345 = math.exp %344 : vector<8x128xf32>
    %cst_94 = arith.constant 1.000000e+00 : f32
    %346 = vector.broadcast %cst_94 : f32 to vector<8x128xf32>
    %347 = arith.addf %346, %345 : vector<8x128xf32>
    %348 = arith.divf %346, %347 : vector<8x128xf32>
    %349 = vector.extract_strided_slice %317 {offsets = [0, 128], sizes = [8, 128], strides = [1, 1]} : vector<8x512xf32> to vector<8x128xf32>
    %350 = arith.negf %349 : vector<8x128xf32>
    %351 = math.exp %350 : vector<8x128xf32>
    %cst_95 = arith.constant 1.000000e+00 : f32
    %352 = vector.broadcast %cst_95 : f32 to vector<8x128xf32>
    %353 = arith.addf %352, %351 : vector<8x128xf32>
    %354 = arith.divf %352, %353 : vector<8x128xf32>
    %355 = vector.extract_strided_slice %317 {offsets = [0, 256], sizes = [8, 128], strides = [1, 1]} : vector<8x512xf32> to vector<8x128xf32>
    %356 = math.tanh %355 : vector<8x128xf32>
    %357 = vector.extract_strided_slice %317 {offsets = [0, 384], sizes = [8, 128], strides = [1, 1]} : vector<8x512xf32> to vector<8x128xf32>
    %358 = arith.negf %357 : vector<8x128xf32>
    %359 = math.exp %358 : vector<8x128xf32>
    %cst_96 = arith.constant 1.000000e+00 : f32
    %360 = vector.broadcast %cst_96 : f32 to vector<8x128xf32>
    %361 = arith.addf %360, %359 : vector<8x128xf32>
    %362 = arith.divf %360, %361 : vector<8x128xf32>
    %363 = arith.mulf %354, %305 : vector<8x128xf32>
    %364 = arith.mulf %348, %356 : vector<8x128xf32>
    %365 = arith.addf %363, %364 : vector<8x128xf32>
    %366 = math.tanh %365 : vector<8x128xf32>
    %367 = arith.mulf %362, %366 : vector<8x128xf32>
    %c48_97 = arith.constant 48 : index
    %c0_98 = arith.constant 0 : index
    %368 = vector.load %arg5[%c48_97, %c0_98] : memref<64x1024xf32, #tpu.memory_space<vmem>>, vector<8x512xf32>
    %369 = arith.truncf %342 : vector<8x128xf32> to vector<8x128xbf16>
    %c0_99 = arith.constant 0 : index
    %c0_100 = arith.constant 0 : index
    %370 = vector.load %arg2[%c0_99, %c0_100] : memref<128x512xbf16, #tpu.memory_space<vmem>>, vector<128x512xbf16>
    %cst_101 = arith.constant dense<0.000000e+00> : vector<8x512xf32>
    %371 = tpu.matmul %369, %370, %cst_101 {dimension_numbers = #tpu.dot_dimension_numbers<[1], [0], [0], [1], [0, 0, 1, 1], [], []>} : vector<8x128xbf16>, vector<128x512xbf16>, vector<8x512xf32> -> vector<8x512xf32>
    %372 = arith.addf %368, %371 : vector<8x512xf32>
    %c8_102 = arith.constant 8 : index
    %c512_103 = arith.constant 512 : index
    %373 = vector.load %arg5[%c8_102, %c512_103] : memref<64x1024xf32, #tpu.memory_space<vmem>>, vector<8x512xf32>
    %374 = arith.truncf %367 : vector<8x128xf32> to vector<8x128xbf16>
    %c0_104 = arith.constant 0 : index
    %c0_105 = arith.constant 0 : index
    %375 = vector.load %arg3[%c0_104, %c0_105] : memref<128x512xbf16, #tpu.memory_space<vmem>>, vector<128x512xbf16>
    %cst_106 = arith.constant dense<0.000000e+00> : vector<8x512xf32>
    %376 = tpu.matmul %374, %375, %cst_106 {dimension_numbers = #tpu.dot_dimension_numbers<[1], [0], [0], [1], [0, 0, 1, 1], [], []>} : vector<8x128xbf16>, vector<128x512xbf16>, vector<8x512xf32> -> vector<8x512xf32>
    %377 = arith.addf %373, %376 : vector<8x512xf32>
    %378 = vector.extract_strided_slice %372 {offsets = [0, 0], sizes = [8, 128], strides = [1, 1]} : vector<8x512xf32> to vector<8x128xf32>
    %379 = arith.negf %378 : vector<8x128xf32>
    %380 = math.exp %379 : vector<8x128xf32>
    %cst_107 = arith.constant 1.000000e+00 : f32
    %381 = vector.broadcast %cst_107 : f32 to vector<8x128xf32>
    %382 = arith.addf %381, %380 : vector<8x128xf32>
    %383 = arith.divf %381, %382 : vector<8x128xf32>
    %384 = vector.extract_strided_slice %372 {offsets = [0, 128], sizes = [8, 128], strides = [1, 1]} : vector<8x512xf32> to vector<8x128xf32>
    %385 = arith.negf %384 : vector<8x128xf32>
    %386 = math.exp %385 : vector<8x128xf32>
    %cst_108 = arith.constant 1.000000e+00 : f32
    %387 = vector.broadcast %cst_108 : f32 to vector<8x128xf32>
    %388 = arith.addf %387, %386 : vector<8x128xf32>
    %389 = arith.divf %387, %388 : vector<8x128xf32>
    %390 = vector.extract_strided_slice %372 {offsets = [0, 256], sizes = [8, 128], strides = [1, 1]} : vector<8x512xf32> to vector<8x128xf32>
    %391 = math.tanh %390 : vector<8x128xf32>
    %392 = vector.extract_strided_slice %372 {offsets = [0, 384], sizes = [8, 128], strides = [1, 1]} : vector<8x512xf32> to vector<8x128xf32>
    %393 = arith.negf %392 : vector<8x128xf32>
    %394 = math.exp %393 : vector<8x128xf32>
    %cst_109 = arith.constant 1.000000e+00 : f32
    %395 = vector.broadcast %cst_109 : f32 to vector<8x128xf32>
    %396 = arith.addf %395, %394 : vector<8x128xf32>
    %397 = arith.divf %395, %396 : vector<8x128xf32>
    %398 = arith.mulf %389, %340 : vector<8x128xf32>
    %399 = arith.mulf %383, %391 : vector<8x128xf32>
    %400 = arith.addf %398, %399 : vector<8x128xf32>
    %401 = math.tanh %400 : vector<8x128xf32>
    %402 = arith.mulf %397, %401 : vector<8x128xf32>
    %403 = vector.extract_strided_slice %377 {offsets = [0, 0], sizes = [8, 128], strides = [1, 1]} : vector<8x512xf32> to vector<8x128xf32>
    %404 = arith.negf %403 : vector<8x128xf32>
    %405 = math.exp %404 : vector<8x128xf32>
    %cst_110 = arith.constant 1.000000e+00 : f32
    %406 = vector.broadcast %cst_110 : f32 to vector<8x128xf32>
    %407 = arith.addf %406, %405 : vector<8x128xf32>
    %408 = arith.divf %406, %407 : vector<8x128xf32>
    %409 = vector.extract_strided_slice %377 {offsets = [0, 128], sizes = [8, 128], strides = [1, 1]} : vector<8x512xf32> to vector<8x128xf32>
    %410 = arith.negf %409 : vector<8x128xf32>
    %411 = math.exp %410 : vector<8x128xf32>
    %cst_111 = arith.constant 1.000000e+00 : f32
    %412 = vector.broadcast %cst_111 : f32 to vector<8x128xf32>
    %413 = arith.addf %412, %411 : vector<8x128xf32>
    %414 = arith.divf %412, %413 : vector<8x128xf32>
    %415 = vector.extract_strided_slice %377 {offsets = [0, 256], sizes = [8, 128], strides = [1, 1]} : vector<8x512xf32> to vector<8x128xf32>
    %416 = math.tanh %415 : vector<8x128xf32>
    %417 = vector.extract_strided_slice %377 {offsets = [0, 384], sizes = [8, 128], strides = [1, 1]} : vector<8x512xf32> to vector<8x128xf32>
    %418 = arith.negf %417 : vector<8x128xf32>
    %419 = math.exp %418 : vector<8x128xf32>
    %cst_112 = arith.constant 1.000000e+00 : f32
    %420 = vector.broadcast %cst_112 : f32 to vector<8x128xf32>
    %421 = arith.addf %420, %419 : vector<8x128xf32>
    %422 = arith.divf %420, %421 : vector<8x128xf32>
    %423 = arith.mulf %414, %365 : vector<8x128xf32>
    %424 = arith.mulf %408, %416 : vector<8x128xf32>
    %425 = arith.addf %423, %424 : vector<8x128xf32>
    %426 = math.tanh %425 : vector<8x128xf32>
    %427 = arith.mulf %422, %426 : vector<8x128xf32>
    %c56_113 = arith.constant 56 : index
    %c0_114 = arith.constant 0 : index
    %428 = vector.load %arg5[%c56_113, %c0_114] : memref<64x1024xf32, #tpu.memory_space<vmem>>, vector<8x512xf32>
    %429 = arith.truncf %402 : vector<8x128xf32> to vector<8x128xbf16>
    %c0_115 = arith.constant 0 : index
    %c0_116 = arith.constant 0 : index
    %430 = vector.load %arg2[%c0_115, %c0_116] : memref<128x512xbf16, #tpu.memory_space<vmem>>, vector<128x512xbf16>
    %cst_117 = arith.constant dense<0.000000e+00> : vector<8x512xf32>
    %431 = tpu.matmul %429, %430, %cst_117 {dimension_numbers = #tpu.dot_dimension_numbers<[1], [0], [0], [1], [0, 0, 1, 1], [], []>} : vector<8x128xbf16>, vector<128x512xbf16>, vector<8x512xf32> -> vector<8x512xf32>
    %432 = arith.addf %428, %431 : vector<8x512xf32>
    %c0_118 = arith.constant 0 : index
    %c512_119 = arith.constant 512 : index
    %433 = vector.load %arg5[%c0_118, %c512_119] : memref<64x1024xf32, #tpu.memory_space<vmem>>, vector<8x512xf32>
    %434 = arith.truncf %427 : vector<8x128xf32> to vector<8x128xbf16>
    %c0_120 = arith.constant 0 : index
    %c0_121 = arith.constant 0 : index
    %435 = vector.load %arg3[%c0_120, %c0_121] : memref<128x512xbf16, #tpu.memory_space<vmem>>, vector<128x512xbf16>
    %cst_122 = arith.constant dense<0.000000e+00> : vector<8x512xf32>
    %436 = tpu.matmul %434, %435, %cst_122 {dimension_numbers = #tpu.dot_dimension_numbers<[1], [0], [0], [1], [0, 0, 1, 1], [], []>} : vector<8x128xbf16>, vector<128x512xbf16>, vector<8x512xf32> -> vector<8x512xf32>
    %437 = arith.addf %433, %436 : vector<8x512xf32>
    %438 = vector.extract_strided_slice %432 {offsets = [0, 0], sizes = [8, 128], strides = [1, 1]} : vector<8x512xf32> to vector<8x128xf32>
    %439 = arith.negf %438 : vector<8x128xf32>
    %440 = math.exp %439 : vector<8x128xf32>
    %cst_123 = arith.constant 1.000000e+00 : f32
    %441 = vector.broadcast %cst_123 : f32 to vector<8x128xf32>
    %442 = arith.addf %441, %440 : vector<8x128xf32>
    %443 = arith.divf %441, %442 : vector<8x128xf32>
    %444 = vector.extract_strided_slice %432 {offsets = [0, 128], sizes = [8, 128], strides = [1, 1]} : vector<8x512xf32> to vector<8x128xf32>
    %445 = arith.negf %444 : vector<8x128xf32>
    %446 = math.exp %445 : vector<8x128xf32>
    %cst_124 = arith.constant 1.000000e+00 : f32
    %447 = vector.broadcast %cst_124 : f32 to vector<8x128xf32>
    %448 = arith.addf %447, %446 : vector<8x128xf32>
    %449 = arith.divf %447, %448 : vector<8x128xf32>
    %450 = vector.extract_strided_slice %432 {offsets = [0, 256], sizes = [8, 128], strides = [1, 1]} : vector<8x512xf32> to vector<8x128xf32>
    %451 = math.tanh %450 : vector<8x128xf32>
    %452 = vector.extract_strided_slice %432 {offsets = [0, 384], sizes = [8, 128], strides = [1, 1]} : vector<8x512xf32> to vector<8x128xf32>
    %453 = arith.negf %452 : vector<8x128xf32>
    %454 = math.exp %453 : vector<8x128xf32>
    %cst_125 = arith.constant 1.000000e+00 : f32
    %455 = vector.broadcast %cst_125 : f32 to vector<8x128xf32>
    %456 = arith.addf %455, %454 : vector<8x128xf32>
    %457 = arith.divf %455, %456 : vector<8x128xf32>
    %458 = arith.mulf %449, %400 : vector<8x128xf32>
    %459 = arith.mulf %443, %451 : vector<8x128xf32>
    %460 = arith.addf %458, %459 : vector<8x128xf32>
    %461 = math.tanh %460 : vector<8x128xf32>
    %462 = arith.mulf %457, %461 : vector<8x128xf32>
    %463 = vector.extract_strided_slice %437 {offsets = [0, 0], sizes = [8, 128], strides = [1, 1]} : vector<8x512xf32> to vector<8x128xf32>
    %464 = arith.negf %463 : vector<8x128xf32>
    %465 = math.exp %464 : vector<8x128xf32>
    %cst_126 = arith.constant 1.000000e+00 : f32
    %466 = vector.broadcast %cst_126 : f32 to vector<8x128xf32>
    %467 = arith.addf %466, %465 : vector<8x128xf32>
    %468 = arith.divf %466, %467 : vector<8x128xf32>
    %469 = vector.extract_strided_slice %437 {offsets = [0, 128], sizes = [8, 128], strides = [1, 1]} : vector<8x512xf32> to vector<8x128xf32>
    %470 = arith.negf %469 : vector<8x128xf32>
    %471 = math.exp %470 : vector<8x128xf32>
    %cst_127 = arith.constant 1.000000e+00 : f32
    %472 = vector.broadcast %cst_127 : f32 to vector<8x128xf32>
    %473 = arith.addf %472, %471 : vector<8x128xf32>
    %474 = arith.divf %472, %473 : vector<8x128xf32>
    %475 = vector.extract_strided_slice %437 {offsets = [0, 256], sizes = [8, 128], strides = [1, 1]} : vector<8x512xf32> to vector<8x128xf32>
    %476 = math.tanh %475 : vector<8x128xf32>
    %477 = vector.extract_strided_slice %437 {offsets = [0, 384], sizes = [8, 128], strides = [1, 1]} : vector<8x512xf32> to vector<8x128xf32>
    %478 = arith.negf %477 : vector<8x128xf32>
    %479 = math.exp %478 : vector<8x128xf32>
    %cst_128 = arith.constant 1.000000e+00 : f32
    %480 = vector.broadcast %cst_128 : f32 to vector<8x128xf32>
    %481 = arith.addf %480, %479 : vector<8x128xf32>
    %482 = arith.divf %480, %481 : vector<8x128xf32>
    %483 = arith.mulf %474, %425 : vector<8x128xf32>
    %484 = arith.mulf %468, %476 : vector<8x128xf32>
    %485 = arith.addf %483, %484 : vector<8x128xf32>
    %486 = math.tanh %485 : vector<8x128xf32>
    %487 = arith.mulf %482, %486 : vector<8x128xf32>
    %c0_129 = arith.constant 0 : index
    %c0_130 = arith.constant 0 : index
    %488 = vector.load %arg4[%c0_129, %c0_130] : memref<8x256xf32, #tpu.memory_space<vmem>>, vector<8x128xf32>
    tpu.vector_store %arg4[%c0_129, %c0_130], %462 {strides = array<i32>} : memref<8x256xf32, #tpu.memory_space<vmem>>, vector<8x128xf32>,
    %c0_131 = arith.constant 0 : index
    %c128 = arith.constant 128 : index
    %489 = vector.load %arg4[%c0_131, %c128] : memref<8x256xf32, #tpu.memory_space<vmem>>, vector<8x128xf32>
    tpu.vector_store %arg4[%c0_131, %c128], %487 {strides = array<i32>} : memref<8x256xf32, #tpu.memory_space<vmem>>, vector<8x128xf32>,
    return
  }
}

</mosaic_0001>

<llo_original>
// kernel: tpu_custom_call.1
$region0: #{tpu_custom_call.1}
  #allocation0 [shape = 'u32[]', space=smem, size = 0x4, offset = 0x4, fixed_abs, tag = 'smem constant byte address 0x4 - core index']
  #allocation1 [shape = 'u32[144,128]{1,0:T(1,128)}', space=vmem, size = 0x12000, scoped, tag = 'internal scratch']
  #allocation2 [shape = 'f32[64,1024]{1,0:T(8,128)}', space=vmem, size = 0x40000, scoped, tag = 'scratch operand']
  %s0 = inlined_call_operand.hbm [shape: bf16[64,128], index: 0, kind: input, shape index: {}]
  %s1 = inlined_call_operand.hbm [shape: bf16[128,1024], index: 1, kind: input, shape index: {}]
  %s2 = inlined_call_operand.hbm [shape: bf16[128,512], index: 2, kind: input, shape index: {}]
  %s3 = inlined_call_operand.hbm [shape: bf16[128,512], index: 3, kind: input, shape index: {}]
  %s4 = inlined_call_operand.hbm [shape: f32[8,256], index: 4, kind: output, shape index: {}]
  %s5 = sld [smem:[#allocation0]]
  $region42: #{tpu_custom_call.1} parent=0
    _
  %s7 = ssub.s32 1, %s5
  %s8 = scalar_select 0, %s7, %s5
  $region1: #{tpu_custom_call.1} parent=0
    #allocation3 [shape = 'u8[16384]{0}', space=vmem, size = 0x4000, scoped, tag = 'input window, operand 0, single buffered']
    #allocation4 [shape = 's32[1]{0}', space=sflag, size = 0x4, scoped, tag = 'scoped memory for tpu_custom_call.1']
    #allocation5 [shape = 's32[1]{0}', space=sflag, size = 0x4, scoped, tag = 'scoped memory for tpu_custom_call.1']
    #allocation6 [shape = 'u8[262144]{0}', space=vmem, size = 0x40000, scoped, tag = 'input window, operand 1, single buffered']
    #allocation7 [shape = 's32[1]{0}', space=sflag, size = 0x4, scoped, tag = 'scoped memory for tpu_custom_call.1']
    #allocation8 [shape = 'u8[131072]{0}', space=vmem, size = 0x20000, scoped, tag = 'input window, operand 2, single buffered']
    #allocation9 [shape = 'u8[131072]{0}', space=vmem, size = 0x20000, scoped, tag = 'input window, operand 3, single buffered']
    #allocation10 [shape = 's32[1]{0}', space=sflag, size = 0x4, scoped, tag = 'scoped memory for tpu_custom_call.1']
    #allocation11 [shape = 'u8[8192]{0}', space=vmem, size = 0x2000, scoped, tag = 'output window, operand 0, single buffered']
    %9 = vsyncpa [#allocation4], 0
    %10 = vsyncpa [#allocation7], 0
    %11 = vsyncpa [#allocation10], 0
    %12 = vsyncpa [#allocation5], 0
    // Predicated region
    $region2: #{tpu_custom_call.1} parent=1 // pred_check
      _
    $region3: #{tpu_custom_call.1} parent=1 // pred_check_branch
      %14 = sbr.rel (0) target = $region5
    $region4: #{tpu_custom_call.1} parent=1 // pred_region
      %s16 = ssub.s32 512, 512
      %17 = vsyncadd [#allocation4], %s16
      %s18 = sshll.u32 [#allocation3], 4
      %s19 = int_to_ptr.vmem [resolvable:$true] %s18
      %24 = dma.hbm_to_vmem [thread:$0]  %s0, 512, %s19, [#allocation4], 64, 64, 4
    $region5: #{tpu_custom_call.1} parent=1 // pred_fallthru
      _
    // Predicated region
    $region6: #{tpu_custom_call.1} parent=1 // pred_check
      _
    $region7: #{tpu_custom_call.1} parent=1 // pred_check_branch
      %26 = sbr.rel (0) target = $region9
    $region8: #{tpu_custom_call.1} parent=1 // pred_region
      %s28 = ssub.s32 8192, 8192
      %29 = vsyncadd [#allocation7], %s28
      %s30 = sshll.u32 [#allocation6], 4
      %s31 = int_to_ptr.vmem [resolvable:$true] %s30
      %36 = dma.hbm_to_vmem [thread:$0]  %s1, 8192, %s31, [#allocation7], 512, 512, 32
    $region9: #{tpu_custom_call.1} parent=1 // pred_fallthru
      _
    // Predicated region
    $region10: #{tpu_custom_call.1} parent=1 // pred_check
      _
    $region11: #{tpu_custom_call.1} parent=1 // pred_check_branch
      %38 = sbr.rel (0) target = $region13
    $region12: #{tpu_custom_call.1} parent=1 // pred_region
      %s40 = ssub.s32 4096, 4096
      %41 = vsyncadd [#allocation7], %s40
      %s42 = sshll.u32 [#allocation8], 4
      %s43 = int_to_ptr.vmem [resolvable:$true] %s42
      %48 = dma.hbm_to_vmem [thread:$0]  %s2, 4096, %s43, [#allocation7], 256, 256, 16
    $region13: #{tpu_custom_call.1} parent=1 // pred_fallthru
      _
    // Predicated region
    $region14: #{tpu_custom_call.1} parent=1 // pred_check
      _
    $region15: #{tpu_custom_call.1} parent=1 // pred_check_branch
      %50 = sbr.rel (0) target = $region17
    $region16: #{tpu_custom_call.1} parent=1 // pred_region
      %s52 = ssub.s32 4096, 4096
      %53 = vsyncadd [#allocation10], %s52
      %s54 = sshll.u32 [#allocation9], 4
      %s55 = int_to_ptr.vmem [resolvable:$true] %s54
      %60 = dma.hbm_to_vmem [thread:$0]  %s3, 4096, %s55, [#allocation10], 256, 256, 16
    $region17: #{tpu_custom_call.1} parent=1 // pred_fallthru
      _
    // Predicated region
    $region18: #{tpu_custom_call.1} parent=1 // pred_check
      _
    $region19: #{tpu_custom_call.1} parent=1 // pred_check_branch
      %62 = sbr.rel (0) target = $region21
    $region20: #{tpu_custom_call.1} parent=1 // pred_region
      %63 = dma.done [#allocation4], 512
    $region21: #{tpu_custom_call.1} parent=1 // pred_fallthru
      _
    // Predicated region
    $region22: #{tpu_custom_call.1} parent=1 // pred_check
      _
    $region23: #{tpu_custom_call.1} parent=1 // pred_check_branch
      %65 = sbr.rel (0) target = $region25
    $region24: #{tpu_custom_call.1} parent=1 // pred_region
      %66 = dma.done [#allocation7], 8192
    $region25: #{tpu_custom_call.1} parent=1 // pred_fallthru
      _
    // Predicated region
    $region26: #{tpu_custom_call.1} parent=1 // pred_check
      _
    $region27: #{tpu_custom_call.1} parent=1 // pred_check_branch
      %68 = sbr.rel (0) target = $region29
    $region28: #{tpu_custom_call.1} parent=1 // pred_region
      %69 = dma.done [#allocation7], 4096
    $region29: #{tpu_custom_call.1} parent=1 // pred_fallthru
      _
    // Predicated region
    $region30: #{tpu_custom_call.1} parent=1 // pred_check
      _
    $region31: #{tpu_custom_call.1} parent=1 // pred_check_branch
      %71 = sbr.rel (0) target = $region33
    $region32: #{tpu_custom_call.1} parent=1 // pred_region
      %72 = dma.done [#allocation10], 4096
    $region33: #{tpu_custom_call.1} parent=1 // pred_fallthru
      _
    %v74 = vld [vmem:[#allocation3] sm:$0xf]
    %v75 = vld [vmem:[#allocation3 + $0x4] sm:$0xf]
    %v76 = vld [vmem:[#allocation3 + $0x8] sm:$0xf]
    %v77 = vld [vmem:[#allocation3 + $0xc] sm:$0xf]
    %v78 = vld [vmem:[#allocation3 + $0x10] sm:$0xf]
    %v79 = vld [vmem:[#allocation3 + $0x14] sm:$0xf]
    %v80 = vld [vmem:[#allocation3 + $0x18] sm:$0xf]
    %v81 = vld [vmem:[#allocation3 + $0x1c] sm:$0xf]
    %v82 = vld [vmem:[#allocation6] sm:$0xff]
    %v83 = vld [vmem:[#allocation6 + $0x8] sm:$0xff]
    %v84 = vld [vmem:[#allocation6 + $0x10] sm:$0xff]
    %v85 = vld [vmem:[#allocation6 + $0x18] sm:$0xff]
    %v86 = vld [vmem:[#allocation6 + $0x20] sm:$0xff]
    %v87 = vld [vmem:[#allocation6 + $0x28] sm:$0xff]
    %v88 = vld [vmem:[#allocation6 + $0x30] sm:$0xff]
    %v89 = vld [vmem:[#allocation6 + $0x38] sm:$0xff]
    %v90 = vld [vmem:[#allocation6 + $0x40] sm:$0xff]
    %v91 = vld [vmem:[#allocation6 + $0x48] sm:$0xff]
    %v92 = vld [vmem:[#allocation6 + $0x50] sm:$0xff]
    %v93 = vld [vmem:[#allocation6 + $0x58] sm:$0xff]
    %v94 = vld [vmem:[#allocation6 + $0x60] sm:$0xff]
    %v95 = vld [vmem:[#allocation6 + $0x68] sm:$0xff]
    %v96 = vld [vmem:[#allocation6 + $0x70] sm:$0xff]
    %v97 = vld [vmem:[#allocation6 + $0x78] sm:$0xff]
    %v98 = vld [vmem:[#allocation6 + $0x80] sm:$0xff]
    %v99 = vld [vmem:[#allocation6 + $0x88] sm:$0xff]
    %v100 = vld [vmem:[#allocation6 + $0x90] sm:$0xff]
    %v101 = vld [vmem:[#allocation6 + $0x98] sm:$0xff]
    %v102 = vld [vmem:[#allocation6 + $0xa0] sm:$0xff]
    %v103 = vld [vmem:[#allocation6 + $0xa8] sm:$0xff]
    %v104 = vld [vmem:[#allocation6 + $0xb0] sm:$0xff]
    %v105 = vld [vmem:[#allocation6 + $0xb8] sm:$0xff]
    %v106 = vld [vmem:[#allocation6 + $0xc0] sm:$0xff]
    %v107 = vld [vmem:[#allocation6 + $0xc8] sm:$0xff]
    %v108 = vld [vmem:[#allocation6 + $0xd0] sm:$0xff]
    %v109 = vld [vmem:[#allocation6 + $0xd8] sm:$0xff]
    %v110 = vld [vmem:[#allocation6 + $0xe0] sm:$0xff]
    %v111 = vld [vmem:[#allocation6 + $0xe8] sm:$0xff]
    %v112 = vld [vmem:[#allocation6 + $0xf0] sm:$0xff]
    %v113 = vld [vmem:[#allocation6 + $0xf8] sm:$0xff]
    %v114 = vld [vmem:[#allocation6 + $0x100] sm:$0xff]
    %v115 = vld [vmem:[#allocation6 + $0x108] sm:$0xff]
    %v116 = vld [vmem:[#allocation6 + $0x110] sm:$0xff]
    %v117 = vld [vmem:[#allocation6 + $0x118] sm:$0xff]
    %v118 = vld [vmem:[#allocation6 + $0x120] sm:$0xff]
    %v119 = vld [vmem:[#allocation6 + $0x128] sm:$0xff]
    %v120 = vld [vmem:[#allocation6 + $0x130] sm:$0xff]
    %v121 = vld [vmem:[#allocation6 + $0x138] sm:$0xff]
    %v122 = vld [vmem:[#allocation6 + $0x140] sm:$0xff]
    %v123 = vld [vmem:[#allocation6 + $0x148] sm:$0xff]
    %v124 = vld [vmem:[#allocation6 + $0x150] sm:$0xff]
    %v125 = vld [vmem:[#allocation6 + $0x158] sm:$0xff]
    %v126 = vld [vmem:[#allocation6 + $0x160] sm:$0xff]
    %v127 = vld [vmem:[#allocation6 + $0x168] sm:$0xff]
    %v128 = vld [vmem:[#allocation6 + $0x170] sm:$0xff]
    %v129 = vld [vmem:[#allocation6 + $0x178] sm:$0xff]
    %v130 = vld [vmem:[#allocation6 + $0x180] sm:$0xff]
    %v131 = vld [vmem:[#allocation6 + $0x188] sm:$0xff]
    %v132 = vld [vmem:[#allocation6 + $0x190] sm:$0xff]
    %v133 = vld [vmem:[#allocation6 + $0x198] sm:$0xff]
    %v134 = vld [vmem:[#allocation6 + $0x1a0] sm:$0xff]
    %v135 = vld [vmem:[#allocation6 + $0x1a8] sm:$0xff]
    %v136 = vld [vmem:[#allocation6 + $0x1b0] sm:$0xff]
    %v137 = vld [vmem:[#allocation6 + $0x1b8] sm:$0xff]
    %v138 = vld [vmem:[#allocation6 + $0x1c0] sm:$0xff]
    %v139 = vld [vmem:[#allocation6 + $0x1c8] sm:$0xff]
    %v140 = vld [vmem:[#allocation6 + $0x1d0] sm:$0xff]
    %v141 = vld [vmem:[#allocation6 + $0x1d8] sm:$0xff]
    %v142 = vld [vmem:[#allocation6 + $0x1e0] sm:$0xff]
    %v143 = vld [vmem:[#allocation6 + $0x1e8] sm:$0xff]
    %v144 = vld [vmem:[#allocation6 + $0x1f0] sm:$0xff]
    %v145 = vld [vmem:[#allocation6 + $0x1f8] sm:$0xff]
    %v154 = vunpack.c.l.b16 %v74
    %v155 = vunpack.c.l.b16 %v75
    %v156 = vunpack.c.l.b16 %v76
    %v157 = vunpack.c.l.b16 %v77
    %v158 = vunpack.c.l.b16 %v78
    %v159 = vunpack.c.l.b16 %v79
    %v160 = vunpack.c.l.b16 %v80
    %v161 = vunpack.c.l.b16 %v81
    %v162 = vpack.c.b16 %v155, %v154
    %v163 = vpack.c.b16 %v157, %v156
    %v164 = vpack.c.b16 %v159, %v158
    %v165 = vpack.c.b16 %v161, %v160
    %v234 = vunpack.c.l.b16 %v82
    %v235 = vunpack.c.h.b16 %v82
    %v236 = vunpack.c.l.b16 %v83
    %v237 = vunpack.c.h.b16 %v83
    %v238 = vunpack.c.l.b16 %v84
    %v239 = vunpack.c.h.b16 %v84
    %v240 = vunpack.c.l.b16 %v85
    %v241 = vunpack.c.h.b16 %v85
    %v242 = vunpack.c.l.b16 %v86
    %v243 = vunpack.c.h.b16 %v86
    %v244 = vunpack.c.l.b16 %v87
    %v245 = vunpack.c.h.b16 %v87
    %v246 = vunpack.c.l.b16 %v88
    %v247 = vunpack.c.h.b16 %v88
    %v248 = vunpack.c.l.b16 %v89
    %v249 = vunpack.c.h.b16 %v89
    %v250 = vunpack.c.l.b16 %v90
    %v251 = vunpack.c.h.b16 %v90
    %v252 = vunpack.c.l.b16 %v91
    %v253 = vunpack.c.h.b16 %v91
    %v254 = vunpack.c.l.b16 %v92
    %v255 = vunpack.c.h.b16 %v92
    %v256 = vunpack.c.l.b16 %v93
    %v257 = vunpack.c.h.b16 %v93
    %v258 = vunpack.c.l.b16 %v94
    %v259 = vunpack.c.h.b16 %v94
    %v260 = vunpack.c.l.b16 %v95
    %v261 = vunpack.c.h.b16 %v95
    %v262 = vunpack.c.l.b16 %v96
    %v263 = vunpack.c.h.b16 %v96
    %v264 = vunpack.c.l.b16 %v97
    %v265 = vunpack.c.h.b16 %v97
    %v266 = vunpack.c.l.b16 %v98
    %v267 = vunpack.c.h.b16 %v98
    %v268 = vunpack.c.l.b16 %v99
    %v269 = vunpack.c.h.b16 %v99
    %v270 = vunpack.c.l.b16 %v100
    %v271 = vunpack.c.h.b16 %v100
    %v272 = vunpack.c.l.b16 %v101
    %v273 = vunpack.c.h.b16 %v101
    %v274 = vunpack.c.l.b16 %v102
    %v275 = vunpack.c.h.b16 %v102
    %v276 = vunpack.c.l.b16 %v103
    %v277 = vunpack.c.h.b16 %v103
    %v278 = vunpack.c.l.b16 %v104
    %v279 = vunpack.c.h.b16 %v104
    %v280 = vunpack.c.l.b16 %v105
    %v281 = vunpack.c.h.b16 %v105
    %v282 = vunpack.c.l.b16 %v106
    %v283 = vunpack.c.h.b16 %v106
    %v284 = vunpack.c.l.b16 %v107
    %v285 = vunpack.c.h.b16 %v107
    %v286 = vunpack.c.l.b16 %v108
    %v287 = vunpack.c.h.b16 %v108
    %v288 = vunpack.c.l.b16 %v109
    %v289 = vunpack.c.h.b16 %v109
    %v290 = vunpack.c.l.b16 %v110
    %v291 = vunpack.c.h.b16 %v110
    %v292 = vunpack.c.l.b16 %v111
    %v293 = vunpack.c.h.b16 %v111
    %v294 = vunpack.c.l.b16 %v112
    %v295 = vunpack.c.h.b16 %v112
    %v296 = vunpack.c.l.b16 %v113
    %v297 = vunpack.c.h.b16 %v113
    %v298 = vunpack.c.l.b16 %v114
    %v299 = vunpack.c.h.b16 %v114
    %v300 = vunpack.c.l.b16 %v115
    %v301 = vunpack.c.h.b16 %v115
    %v302 = vunpack.c.l.b16 %v116
    %v303 = vunpack.c.h.b16 %v116
    %v304 = vunpack.c.l.b16 %v117
    %v305 = vunpack.c.h.b16 %v117
    %v306 = vunpack.c.l.b16 %v118
    %v307 = vunpack.c.h.b16 %v118
    %v308 = vunpack.c.l.b16 %v119
    %v309 = vunpack.c.h.b16 %v119
    %v310 = vunpack.c.l.b16 %v120
    %v311 = vunpack.c.h.b16 %v120
    %v312 = vunpack.c.l.b16 %v121
    %v313 = vunpack.c.h.b16 %v121
    %v314 = vunpack.c.l.b16 %v122
    %v315 = vunpack.c.h.b16 %v122
    %v316 = vunpack.c.l.b16 %v123
    %v317 = vunpack.c.h.b16 %v123
    %v318 = vunpack.c.l.b16 %v124
    %v319 = vunpack.c.h.b16 %v124
    %v320 = vunpack.c.l.b16 %v125
    %v321 = vunpack.c.h.b16 %v125
    %v322 = vunpack.c.l.b16 %v126
    %v323 = vunpack.c.h.b16 %v126
    %v324 = vunpack.c.l.b16 %v127
    %v325 = vunpack.c.h.b16 %v127
    %v326 = vunpack.c.l.b16 %v128
    %v327 = vunpack.c.h.b16 %v128
    %v328 = vunpack.c.l.b16 %v129
    %v329 = vunpack.c.h.b16 %v129
    %v330 = vunpack.c.l.b16 %v130
    %v331 = vunpack.c.h.b16 %v130
    %v332 = vunpack.c.l.b16 %v131
    %v333 = vunpack.c.h.b16 %v131
    %v334 = vunpack.c.l.b16 %v132
    %v335 = vunpack.c.h.b16 %v132
    %v336 = vunpack.c.l.b16 %v133
    %v337 = vunpack.c.h.b16 %v133
    %v338 = vunpack.c.l.b16 %v134
    %v339 = vunpack.c.h.b16 %v134
    %v340 = vunpack.c.l.b16 %v135
    %v341 = vunpack.c.h.b16 %v135
    %v342 = vunpack.c.l.b16 %v136
    %v343 = vunpack.c.h.b16 %v136
    %v344 = vunpack.c.l.b16 %v137
    %v345 = vunpack.c.h.b16 %v137
    %v346 = vunpack.c.l.b16 %v138
    %v347 = vunpack.c.h.b16 %v138
    %v348 = vunpack.c.l.b16 %v139
    %v349 = vunpack.c.h.b16 %v139
    %v350 = vunpack.c.l.b16 %v140
    %v351 = vunpack.c.h.b16 %v140
    %v352 = vunpack.c.l.b16 %v141
    %v353 = vunpack.c.h.b16 %v141
    %v354 = vunpack.c.l.b16 %v142
    %v355 = vunpack.c.h.b16 %v142
    %v356 = vunpack.c.l.b16 %v143
    %v357 = vunpack.c.h.b16 %v143
    %v358 = vunpack.c.l.b16 %v144
    %v359 = vunpack.c.h.b16 %v144
    %v360 = vunpack.c.l.b16 %v145
    %v361 = vunpack.c.h.b16 %v145
    %v362 = vpack.c.b16 %v242, %v234
    %v363 = vpack.c.b16 %v243, %v235
    %v364 = vpack.c.b16 %v244, %v236
    %v365 = vpack.c.b16 %v245, %v237
    %v366 = vpack.c.b16 %v246, %v238
    %v367 = vpack.c.b16 %v247, %v239
    %v368 = vpack.c.b16 %v248, %v240
    %v369 = vpack.c.b16 %v249, %v241
    %v370 = vpack.c.b16 %v258, %v250
    %v371 = vpack.c.b16 %v259, %v251
    %v372 = vpack.c.b16 %v260, %v252
    %v373 = vpack.c.b16 %v261, %v253
    %v374 = vpack.c.b16 %v262, %v254
    %v375 = vpack.c.b16 %v263, %v255
    %v376 = vpack.c.b16 %v264, %v256
    %v377 = vpack.c.b16 %v265, %v257
    %v378 = vpack.c.b16 %v274, %v266
    %v379 = vpack.c.b16 %v275, %v267
    %v380 = vpack.c.b16 %v276, %v268
    %v381 = vpack.c.b16 %v277, %v269
    %v382 = vpack.c.b16 %v278, %v270
    %v383 = vpack.c.b16 %v279, %v271
    %v384 = vpack.c.b16 %v280, %v272
    %v385 = vpack.c.b16 %v281, %v273
    %v386 = vpack.c.b16 %v290, %v282
    %v387 = vpack.c.b16 %v291, %v283
    %v388 = vpack.c.b16 %v292, %v284
    %v389 = vpack.c.b16 %v293, %v285
    %v390 = vpack.c.b16 %v294, %v286
    %v391 = vpack.c.b16 %v295, %v287
    %v392 = vpack.c.b16 %v296, %v288
    %v393 = vpack.c.b16 %v297, %v289
    %v394 = vpack.c.b16 %v306, %v298
    %v395 = vpack.c.b16 %v307, %v299
    %v396 = vpack.c.b16 %v308, %v300
    %v397 = vpack.c.b16 %v309, %v301
    %v398 = vpack.c.b16 %v310, %v302
    %v399 = vpack.c.b16 %v311, %v303
    %v400 = vpack.c.b16 %v312, %v304
    %v401 = vpack.c.b16 %v313, %v305
    %v402 = vpack.c.b16 %v322, %v314
    %v403 = vpack.c.b16 %v323, %v315
    %v404 = vpack.c.b16 %v324, %v316
    %v405 = vpack.c.b16 %v325, %v317
    %v406 = vpack.c.b16 %v326, %v318
    %v407 = vpack.c.b16 %v327, %v319
    %v408 = vpack.c.b16 %v328, %v320
    %v409 = vpack.c.b16 %v329, %v321
    %v410 = vpack.c.b16 %v338, %v330
    %v411 = vpack.c.b16 %v339, %v331
    %v412 = vpack.c.b16 %v340, %v332
    %v413 = vpack.c.b16 %v341, %v333
    %v414 = vpack.c.b16 %v342, %v334
    %v415 = vpack.c.b16 %v343, %v335
    %v416 = vpack.c.b16 %v344, %v336
    %v417 = vpack.c.b16 %v345, %v337
    %v418 = vpack.c.b16 %v354, %v346
    %v419 = vpack.c.b16 %v355, %v347
    %v420 = vpack.c.b16 %v356, %v348
    %v421 = vpack.c.b16 %v357, %v349
    %v422 = vpack.c.b16 %v358, %v350
    %v423 = vpack.c.b16 %v359, %v351
    %v424 = vpack.c.b16 %v360, %v352
    %v425 = vpack.c.b16 %v361, %v353
    %490 = vmatprep.subr.bf16.mxu0 %v363
    %491 = vmatpush1.bf16.msra.mxu0 %v362
    %492 = vmatprep.subr.bf16.mxu0 %v371
    %493 = vmatpush1.bf16.msra.mxu0 %v370
    %494 = vmatprep.subr.bf16.mxu0 %v379
    %495 = vmatpush1.bf16.msra.mxu0 %v378
    %496 = vmatprep.subr.bf16.mxu0 %v387
    %497 = vmatpush1.bf16.msra.mxu0 %v386
    %498 = vmatprep.subr.bf16.mxu0 %v395
    %499 = vmatpush1.bf16.msra.mxu0 %v394
    %500 = vmatprep.subr.bf16.mxu0 %v403
    %501 = vmatpush1.bf16.msra.mxu0 %v402
    %502 = vmatprep.subr.bf16.mxu0 %v411
    %503 = vmatpush1.bf16.msra.mxu0 %v410
    %504 = vmatprep.subr.bf16.mxu0 %v419
    %505 = vmatpush1.bf16.msra.mxu0 %v418
    %506 = vmatprep.subr.bf16.mxu0 0
    %507 = vmatpush1.bf16.msra.mxu0 0
    %508 = vmatprep.subr.bf16.mxu0 0
    %509 = vmatpush1.bf16.msra.mxu0 0
    %510 = vmatprep.subr.bf16.mxu0 0
    %511 = vmatpush1.bf16.msra.mxu0 0
    %512 = vmatprep.subr.bf16.mxu0 0
    %513 = vmatpush1.bf16.msra.mxu0 0
    %514 = vmatprep.subr.bf16.mxu0 0
    %515 = vmatpush1.bf16.msra.mxu0 0
    %516 = vmatprep.subr.bf16.mxu0 0
    %517 = vmatpush1.bf16.msra.mxu0 0
    %518 = vmatprep.subr.bf16.mxu0 0
    %519 = vmatpush1.bf16.msra.mxu0 0
    %520 = vmatprep.subr.bf16.mxu0 0
    %521 = vmatpush1.bf16.msra.mxu0 0
    %522 = vmatprep.mubr.bf16.mxu0 0
    %523 = vmatmul.mubr.bf16.gmra.mrb[0].mxu0 %v162
    %v524 = vpop.f32.mrb[0].mxu0
    %v525 = vadd.f32 0.0, %v524
    %v526 = vpop.f32.mrb[0].mxu0
    %v527 = vadd.f32 0.0, %v526
    %v528 = vpop.f32.mrb[0].mxu0
    %v529 = vadd.f32 0.0, %v528
    %v530 = vpop.f32.mrb[0].mxu0
    %v531 = vadd.f32 0.0, %v530
    %532 = vmatprep.mubr.bf16.mxu0 0
    %533 = vmatmul.mubr.bf16.gmra.mrb[0].mxu0 %v163
    %v534 = vpop.f32.mrb[0].mxu0
    %v535 = vadd.f32 0.0, %v534
    %v536 = vpop.f32.mrb[0].mxu0
    %v537 = vadd.f32 0.0, %v536
    %v538 = vpop.f32.mrb[0].mxu0
    %v539 = vadd.f32 0.0, %v538
    %v540 = vpop.f32.mrb[0].mxu0
    %v541 = vadd.f32 0.0, %v540
    %542 = vmatprep.mubr.bf16.mxu0 0
    %543 = vmatmul.mubr.bf16.gmra.mrb[0].mxu0 %v164
    %v544 = vpop.f32.mrb[0].mxu0
    %v545 = vadd.f32 0.0, %v544
    %v546 = vpop.f32.mrb[0].mxu0
    %v547 = vadd.f32 0.0, %v546
    %v548 = vpop.f32.mrb[0].mxu0
    %v549 = vadd.f32 0.0, %v548
    %v550 = vpop.f32.mrb[0].mxu0
    %v551 = vadd.f32 0.0, %v550
    %552 = vmatprep.mubr.bf16.mxu0 0
    %553 = vmatmul.mubr.bf16.gmra.mrb[0].mxu0 %v165
    %v554 = vpop.f32.mrb[0].mxu0
    %v555 = vadd.f32 0.0, %v554
    %v556 = vpop.f32.mrb[0].mxu0
    %v557 = vadd.f32 0.0, %v556
    %v558 = vpop.f32.mrb[0].mxu0
    %v559 = vadd.f32 0.0, %v558
    %v560 = vpop.f32.mrb[0].mxu0
    %v561 = vadd.f32 0.0, %v560
    %562 = vdwg.mxu0
    %563 = vmatprep.subr.bf16.mxu0 %v365
    %564 = vmatpush1.bf16.msra.mxu0 %v364
    %565 = vmatprep.subr.bf16.mxu0 %v373
    %566 = vmatpush1.bf16.msra.mxu0 %v372
    %567 = vmatprep.subr.bf16.mxu0 %v381
    %568 = vmatpush1.bf16.msra.mxu0 %v380
    %569 = vmatprep.subr.bf16.mxu0 %v389
    %570 = vmatpush1.bf16.msra.mxu0 %v388
    %571 = vmatprep.subr.bf16.mxu0 %v397
    %572 = vmatpush1.bf16.msra.mxu0 %v396
    %573 = vmatprep.subr.bf16.mxu0 %v405
    %574 = vmatpush1.bf16.msra.mxu0 %v404
    %575 = vmatprep.subr.bf16.mxu0 %v413
    %576 = vmatpush1.bf16.msra.mxu0 %v412
    %577 = vmatprep.subr.bf16.mxu0 %v421
    %578 = vmatpush1.bf16.msra.mxu0 %v420
    %579 = vmatprep.subr.bf16.mxu0 0
    %580 = vmatpush1.bf16.msra.mxu0 0
    %581 = vmatprep.subr.bf16.mxu0 0
    %582 = vmatpush1.bf16.msra.mxu0 0
    %583 = vmatprep.subr.bf16.mxu0 0
    %584 = vmatpush1.bf16.msra.mxu0 0
    %585 = vmatprep.subr.bf16.mxu0 0
    %586 = vmatpush1.bf16.msra.mxu0 0
    %587 = vmatprep.subr.bf16.mxu0 0
    %588 = vmatpush1.bf16.msra.mxu0 0
    %589 = vmatprep.subr.bf16.mxu0 0
    %590 = vmatpush1.bf16.msra.mxu0 0
    %591 = vmatprep.subr.bf16.mxu0 0
    %592 = vmatpush1.bf16.msra.mxu0 0
    %593 = vmatprep.subr.bf16.mxu0 0
    %594 = vmatpush1.bf16.msra.mxu0 0
    %595 = vmatprep.mubr.bf16.mxu0 0
    %596 = vmatmul.mubr.bf16.gmra.mrb[0].mxu0 %v162
    %v597 = vpop.f32.mrb[0].mxu0
    %v598 = vadd.f32 0.0, %v597
    %v599 = vpop.f32.mrb[0].mxu0
    %v600 = vadd.f32 0.0, %v599
    %v601 = vpop.f32.mrb[0].mxu0
    %v602 = vadd.f32 0.0, %v601
    %v603 = vpop.f32.mrb[0].mxu0
    %v604 = vadd.f32 0.0, %v603
    %605 = vmatprep.mubr.bf16.mxu0 0
    %606 = vmatmul.mubr.bf16.gmra.mrb[0].mxu0 %v163
    %v607 = vpop.f32.mrb[0].mxu0
    %v608 = vadd.f32 0.0, %v607
    %v609 = vpop.f32.mrb[0].mxu0
    %v610 = vadd.f32 0.0, %v609
    %v611 = vpop.f32.mrb[0].mxu0
    %v612 = vadd.f32 0.0, %v611
    %v613 = vpop.f32.mrb[0].mxu0
    %v614 = vadd.f32 0.0, %v613
    %615 = vmatprep.mubr.bf16.mxu0 0
    %616 = vmatmul.mubr.bf16.gmra.mrb[0].mxu0 %v164
    %v617 = vpop.f32.mrb[0].mxu0
    %v618 = vadd.f32 0.0, %v617
    %v619 = vpop.f32.mrb[0].mxu0
    %v620 = vadd.f32 0.0, %v619
    %v621 = vpop.f32.mrb[0].mxu0
    %v622 = vadd.f32 0.0, %v621
    %v623 = vpop.f32.mrb[0].mxu0
    %v624 = vadd.f32 0.0, %v623
    %625 = vmatprep.mubr.bf16.mxu0 0
    %626 = vmatmul.mubr.bf16.gmra.mrb[0].mxu0 %v165
    %v627 = vpop.f32.mrb[0].mxu0
    %v628 = vadd.f32 0.0, %v627
    %v629 = vpop.f32.mrb[0].mxu0
    %v630 = vadd.f32 0.0, %v629
    %v631 = vpop.f32.mrb[0].mxu0
    %v632 = vadd.f32 0.0, %v631
    %v633 = vpop.f32.mrb[0].mxu0
    %v634 = vadd.f32 0.0, %v633
    %635 = vdwg.mxu0
    %636 = vmatprep.subr.bf16.mxu0 %v367
    %637 = vmatpush1.bf16.msra.mxu0 %v366
    %638 = vmatprep.subr.bf16.mxu0 %v375
    %639 = vmatpush1.bf16.msra.mxu0 %v374
    %640 = vmatprep.subr.bf16.mxu0 %v383
    %641 = vmatpush1.bf16.msra.mxu0 %v382
    %642 = vmatprep.subr.bf16.mxu0 %v391
    %643 = vmatpush1.bf16.msra.mxu0 %v390
    %644 = vmatprep.subr.bf16.mxu0 %v399
    %645 = vmatpush1.bf16.msra.mxu0 %v398
    %646 = vmatprep.subr.bf16.mxu0 %v407
    %647 = vmatpush1.bf16.msra.mxu0 %v406
    %648 = vmatprep.subr.bf16.mxu0 %v415
    %649 = vmatpush1.bf16.msra.mxu0 %v414
    %650 = vmatprep.subr.bf16.mxu0 %v423
    %651 = vmatpush1.bf16.msra.mxu0 %v422
    %652 = vmatprep.subr.bf16.mxu0 0
    %653 = vmatpush1.bf16.msra.mxu0 0
    %654 = vmatprep.subr.bf16.mxu0 0
    %655 = vmatpush1.bf16.msra.mxu0 0
    %656 = vmatprep.subr.bf16.mxu0 0
    %657 = vmatpush1.bf16.msra.mxu0 0
    %658 = vmatprep.subr.bf16.mxu0 0
    %659 = vmatpush1.bf16.msra.mxu0 0
    %660 = vmatprep.subr.bf16.mxu0 0
    %661 = vmatpush1.bf16.msra.mxu0 0
    %662 = vmatprep.subr.bf16.mxu0 0
    %663 = vmatpush1.bf16.msra.mxu0 0
    %664 = vmatprep.subr.bf16.mxu0 0
    %665 = vmatpush1.bf16.msra.mxu0 0
    %666 = vmatprep.subr.bf16.mxu0 0
    %667 = vmatpush1.bf16.msra.mxu0 0
    %668 = vmatprep.mubr.bf16.mxu0 0
    %669 = vmatmul.mubr.bf16.gmra.mrb[0].mxu0 %v162
    %v670 = vpop.f32.mrb[0].mxu0
    %v671 = vadd.f32 0.0, %v670
    %v672 = vpop.f32.mrb[0].mxu0
    %v673 = vadd.f32 0.0, %v672
    %v674 = vpop.f32.mrb[0].mxu0
    %v675 = vadd.f32 0.0, %v674
    %v676 = vpop.f32.mrb[0].mxu0
    %v677 = vadd.f32 0.0, %v676
    %678 = vmatprep.mubr.bf16.mxu0 0
    %679 = vmatmul.mubr.bf16.gmra.mrb[0].mxu0 %v163
    %v680 = vpop.f32.mrb[0].mxu0
    %v681 = vadd.f32 0.0, %v680
    %v682 = vpop.f32.mrb[0].mxu0
    %v683 = vadd.f32 0.0, %v682
    %v684 = vpop.f32.mrb[0].mxu0
    %v685 = vadd.f32 0.0, %v684
    %v686 = vpop.f32.mrb[0].mxu0
    %v687 = vadd.f32 0.0, %v686
    %688 = vmatprep.mubr.bf16.mxu0 0
    %689 = vmatmul.mubr.bf16.gmra.mrb[0].mxu0 %v164
    %v690 = vpop.f32.mrb[0].mxu0
    %v691 = vadd.f32 0.0, %v690
    %v692 = vpop.f32.mrb[0].mxu0
    %v693 = vadd.f32 0.0, %v692
    %v694 = vpop.f32.mrb[0].mxu0
    %v695 = vadd.f32 0.0, %v694
    %v696 = vpop.f32.mrb[0].mxu0
    %v697 = vadd.f32 0.0, %v696
    %698 = vmatprep.mubr.bf16.mxu0 0
    %699 = vmatmul.mubr.bf16.gmra.mrb[0].mxu0 %v165
    %v700 = vpop.f32.mrb[0].mxu0
    %v701 = vadd.f32 0.0, %v700
    %v702 = vpop.f32.mrb[0].mxu0
    %v703 = vadd.f32 0.0, %v702
    %v704 = vpop.f32.mrb[0].mxu0
    %v705 = vadd.f32 0.0, %v704
    %v706 = vpop.f32.mrb[0].mxu0
    %v707 = vadd.f32 0.0, %v706
    %708 = vdwg.mxu0
    %709 = vmatprep.subr.bf16.mxu0 %v369
    %710 = vmatpush1.bf16.msra.mxu0 %v368
    %711 = vmatprep.subr.bf16.mxu0 %v377
    %712 = vmatpush1.bf16.msra.mxu0 %v376
    %713 = vmatprep.subr.bf16.mxu0 %v385
    %714 = vmatpush1.bf16.msra.mxu0 %v384
    %715 = vmatprep.subr.bf16.mxu0 %v393
    %716 = vmatpush1.bf16.msra.mxu0 %v392
    %717 = vmatprep.subr.bf16.mxu0 %v401
    %718 = vmatpush1.bf16.msra.mxu0 %v400
    %719 = vmatprep.subr.bf16.mxu0 %v409
    %720 = vmatpush1.bf16.msra.mxu0 %v408
    %721 = vmatprep.subr.bf16.mxu0 %v417
    %722 = vmatpush1.bf16.msra.mxu0 %v416
    %723 = vmatprep.subr.bf16.mxu0 %v425
    %724 = vmatpush1.bf16.msra.mxu0 %v424
    %725 = vmatprep.subr.bf16.mxu0 0
    %726 = vmatpush1.bf16.msra.mxu0 0
    %727 = vmatprep.subr.bf16.mxu0 0
    %728 = vmatpush1.bf16.msra.mxu0 0
    %729 = vmatprep.subr.bf16.mxu0 0
    %730 = vmatpush1.bf16.msra.mxu0 0
    %731 = vmatprep.subr.bf16.mxu0 0
    %732 = vmatpush1.bf16.msra.mxu0 0
    %733 = vmatprep.subr.bf16.mxu0 0
    %734 = vmatpush1.bf16.msra.mxu0 0
    %735 = vmatprep.subr.bf16.mxu0 0
    %736 = vmatpush1.bf16.msra.mxu0 0
    %737 = vmatprep.subr.bf16.mxu0 0
    %738 = vmatpush1.bf16.msra.mxu0 0
    %739 = vmatprep.subr.bf16.mxu0 0
    %740 = vmatpush1.bf16.msra.mxu0 0
    %741 = vmatprep.mubr.bf16.mxu0 0
    %742 = vmatmul.mubr.bf16.gmra.mrb[0].mxu0 %v162
    %v743 = vpop.f32.mrb[0].mxu0
    %v744 = vadd.f32 0.0, %v743
    %v745 = vpop.f32.mrb[0].mxu0
    %v746 = vadd.f32 0.0, %v745
    %v747 = vpop.f32.mrb[0].mxu0
    %v748 = vadd.f32 0.0, %v747
    %v749 = vpop.f32.mrb[0].mxu0
    %v750 = vadd.f32 0.0, %v749
    %751 = vmatprep.mubr.bf16.mxu0 0
    %752 = vmatmul.mubr.bf16.gmra.mrb[0].mxu0 %v163
    %v753 = vpop.f32.mrb[0].mxu0
    %v754 = vadd.f32 0.0, %v753
    %v755 = vpop.f32.mrb[0].mxu0
    %v756 = vadd.f32 0.0, %v755
    %v757 = vpop.f32.mrb[0].mxu0
    %v758 = vadd.f32 0.0, %v757
    %v759 = vpop.f32.mrb[0].mxu0
    %v760 = vadd.f32 0.0, %v759
    %761 = vmatprep.mubr.bf16.mxu0 0
    %762 = vmatmul.mubr.bf16.gmra.mrb[0].mxu0 %v164
    %v763 = vpop.f32.mrb[0].mxu0
    %v764 = vadd.f32 0.0, %v763
    %v765 = vpop.f32.mrb[0].mxu0
    %v766 = vadd.f32 0.0, %v765
    %v767 = vpop.f32.mrb[0].mxu0
    %v768 = vadd.f32 0.0, %v767
    %v769 = vpop.f32.mrb[0].mxu0
    %v770 = vadd.f32 0.0, %v769
    %771 = vmatprep.mubr.bf16.mxu0 0
    %772 = vmatmul.mubr.bf16.gmra.mrb[0].mxu0 %v165
    %v773 = vpop.f32.mrb[0].mxu0
    %v774 = vadd.f32 0.0, %v773
    %v775 = vpop.f32.mrb[0].mxu0
    %v776 = vadd.f32 0.0, %v775
    %v777 = vpop.f32.mrb[0].mxu0
    %v778 = vadd.f32 0.0, %v777
    %v779 = vpop.f32.mrb[0].mxu0
    %v780 = vadd.f32 0.0, %v779
    %781 = vdwg.mxu0
    %782 = vst [vmem:[#allocation2] sm:$0xff] %v525
    %783 = vst [vmem:[#allocation2 + $0x8] sm:$0xff] %v527
    %784 = vst [vmem:[#allocation2 + $0x10] sm:$0xff] %v598
    %785 = vst [vmem:[#allocation2 + $0x18] sm:$0xff] %v600
    %786 = vst [vmem:[#allocation2 + $0x20] sm:$0xff] %v671
    %787 = vst [vmem:[#allocation2 + $0x28] sm:$0xff] %v673
    %788 = vst [vmem:[#allocation2 + $0x30] sm:$0xff] %v744
    %789 = vst [vmem:[#allocation2 + $0x38] sm:$0xff] %v746
    %790 = vst [vmem:[#allocation2 + $0x40] sm:$0xff] %v529
    %791 = vst [vmem:[#allocation2 + $0x48] sm:$0xff] %v531
    %792 = vst [vmem:[#allocation2 + $0x50] sm:$0xff] %v602
    %793 = vst [vmem:[#allocation2 + $0x58] sm:$0xff] %v604
    %794 = vst [vmem:[#allocation2 + $0x60] sm:$0xff] %v675
    %795 = vst [vmem:[#allocation2 + $0x68] sm:$0xff] %v677
    %796 = vst [vmem:[#allocation2 + $0x70] sm:$0xff] %v748
    %797 = vst [vmem:[#allocation2 + $0x78] sm:$0xff] %v750
    %798 = vst [vmem:[#allocation2 + $0x80] sm:$0xff] %v535
    %799 = vst [vmem:[#allocation2 + $0x88] sm:$0xff] %v537
    %800 = vst [vmem:[#allocation2 + $0x90] sm:$0xff] %v608
    %801 = vst [vmem:[#allocation2 + $0x98] sm:$0xff] %v610
    %802 = vst [vmem:[#allocation2 + $0xa0] sm:$0xff] %v681
    %803 = vst [vmem:[#allocation2 + $0xa8] sm:$0xff] %v683
    %804 = vst [vmem:[#allocation2 + $0xb0] sm:$0xff] %v754
    %805 = vst [vmem:[#allocation2 + $0xb8] sm:$0xff] %v756
    %806 = vst [vmem:[#allocation2 + $0xc0] sm:$0xff] %v539
    %807 = vst [vmem:[#allocation2 + $0xc8] sm:$0xff] %v541
    %808 = vst [vmem:[#allocation2 + $0xd0] sm:$0xff] %v612
    %809 = vst [vmem:[#allocation2 + $0xd8] sm:$0xff] %v614
    %810 = vst [vmem:[#allocation2 + $0xe0] sm:$0xff] %v685
    %811 = vst [vmem:[#allocation2 + $0xe8] sm:$0xff] %v687
    %812 = vst [vmem:[#allocation2 + $0xf0] sm:$0xff] %v758
    %813 = vst [vmem:[#allocation2 + $0xf8] sm:$0xff] %v760
    %814 = vst [vmem:[#allocation2 + $0x100] sm:$0xff] %v545
    %815 = vst [vmem:[#allocation2 + $0x108] sm:$0xff] %v547
    %816 = vst [vmem:[#allocation2 + $0x110] sm:$0xff] %v618
    %817 = vst [vmem:[#allocation2 + $0x118] sm:$0xff] %v620
    %818 = vst [vmem:[#allocation2 + $0x120] sm:$0xff] %v691
    %819 = vst [vmem:[#allocation2 + $0x128] sm:$0xff] %v693
    %820 = vst [vmem:[#allocation2 + $0x130] sm:$0xff] %v764
    %821 = vst [vmem:[#allocation2 + $0x138] sm:$0xff] %v766
    %822 = vst [vmem:[#allocation2 + $0x140] sm:$0xff] %v549
    %823 = vst [vmem:[#allocation2 + $0x148] sm:$0xff] %v551
    %824 = vst [vmem:[#allocation2 + $0x150] sm:$0xff] %v622
    %825 = vst [vmem:[#allocation2 + $0x158] sm:$0xff] %v624
    %826 = vst [vmem:[#allocation2 + $0x160] sm:$0xff] %v695
    %827 = vst [vmem:[#allocation2 + $0x168] sm:$0xff] %v697
    %828 = vst [vmem:[#allocation2 + $0x170] sm:$0xff] %v768
    %829 = vst [vmem:[#allocation2 + $0x178] sm:$0xff] %v770
    %830 = vst [vmem:[#allocation2 + $0x180] sm:$0xff] %v555
    %831 = vst [vmem:[#allocation2 + $0x188] sm:$0xff] %v557
    %832 = vst [vmem:[#allocation2 + $0x190] sm:$0xff] %v628
    %833 = vst [vmem:[#allocation2 + $0x198] sm:$0xff] %v630
    %834 = vst [vmem:[#allocation2 + $0x1a0] sm:$0xff] %v701
    %835 = vst [vmem:[#allocation2 + $0x1a8] sm:$0xff] %v703
    %836 = vst [vmem:[#allocation2 + $0x1b0] sm:$0xff] %v774
    %837 = vst [vmem:[#allocation2 + $0x1b8] sm:$0xff] %v776
    %838 = vst [vmem:[#allocation2 + $0x1c0] sm:$0xff] %v559
    %839 = vst [vmem:[#allocation2 + $0x1c8] sm:$0xff] %v561
    %840 = vst [vmem:[#allocation2 + $0x1d0] sm:$0xff] %v632
    %841 = vst [vmem:[#allocation2 + $0x1d8] sm:$0xff] %v634
    %842 = vst [vmem:[#allocation2 + $0x1e0] sm:$0xff] %v705
    %843 = vst [vmem:[#allocation2 + $0x1e8] sm:$0xff] %v707
    %844 = vst [vmem:[#allocation2 + $0x1f0] sm:$0xff] %v778
    %845 = vst [vmem:[#allocation2 + $0x1f8] sm:$0xff] %v780
    %v846 = vld [vmem:[#allocation2] sm:$0xff]
    %v847 = vld [vmem:[#allocation2 + $0x8] sm:$0xff]
    %v848 = vld [vmem:[#allocation2 + $0x10] sm:$0xff]
    %v849 = vld [vmem:[#allocation2 + $0x18] sm:$0xff]
    %v850 = vld [vmem:[#allocation8] sm:$0xff]
    %v851 = vld [vmem:[#allocation8 + $0x8] sm:$0xff]
    %v852 = vld [vmem:[#allocation8 + $0x10] sm:$0xff]
    %v853 = vld [vmem:[#allocation8 + $0x18] sm:$0xff]
    %v854 = vld [vmem:[#allocation8 + $0x20] sm:$0xff]
    %v855 = vld [vmem:[#allocation8 + $0x28] sm:$0xff]
    %v856 = vld [vmem:[#allocation8 + $0x30] sm:$0xff]
    %v857 = vld [vmem:[#allocation8 + $0x38] sm:$0xff]
    %v858 = vld [vmem:[#allocation8 + $0x40] sm:$0xff]
    %v859 = vld [vmem:[#allocation8 + $0x48] sm:$0xff]
    %v860 = vld [vmem:[#allocation8 + $0x50] sm:$0xff]
    %v861 = vld [vmem:[#allocation8 + $0x58] sm:$0xff]
    %v862 = vld [vmem:[#allocation8 + $0x60] sm:$0xff]
    %v863 = vld [vmem:[#allocation8 + $0x68] sm:$0xff]
    %v864 = vld [vmem:[#allocation8 + $0x70] sm:$0xff]
    %v865 = vld [vmem:[#allocation8 + $0x78] sm:$0xff]
    %v866 = vld [vmem:[#allocation8 + $0x80] sm:$0xff]
    %v867 = vld [vmem:[#allocation8 + $0x88] sm:$0xff]
    %v868 = vld [vmem:[#allocation8 + $0x90] sm:$0xff]
    %v869 = vld [vmem:[#allocation8 + $0x98] sm:$0xff]
    %v870 = vld [vmem:[#allocation8 + $0xa0] sm:$0xff]
    %v871 = vld [vmem:[#allocation8 + $0xa8] sm:$0xff]
    %v872 = vld [vmem:[#allocation8 + $0xb0] sm:$0xff]
    %v873 = vld [vmem:[#allocation8 + $0xb8] sm:$0xff]
    %v874 = vld [vmem:[#allocation8 + $0xc0] sm:$0xff]
    %v875 = vld [vmem:[#allocation8 + $0xc8] sm:$0xff]
    %v876 = vld [vmem:[#allocation8 + $0xd0] sm:$0xff]
    %v877 = vld [vmem:[#allocation8 + $0xd8] sm:$0xff]
    %v878 = vld [vmem:[#allocation8 + $0xe0] sm:$0xff]
    %v879 = vld [vmem:[#allocation8 + $0xe8] sm:$0xff]
    %v880 = vld [vmem:[#allocation8 + $0xf0] sm:$0xff]
    %v881 = vld [vmem:[#allocation8 + $0xf8] sm:$0xff]
    %v914 = vunpack.c.l.b16 %v850
    %v915 = vunpack.c.h.b16 %v850
    %v916 = vunpack.c.l.b16 %v851
    %v917 = vunpack.c.h.b16 %v851
    %v918 = vunpack.c.l.b16 %v852
    %v919 = vunpack.c.h.b16 %v852
    %v920 = vunpack.c.l.b16 %v853
    %v921 = vunpack.c.h.b16 %v853
    %v922 = vunpack.c.l.b16 %v854
    %v923 = vunpack.c.h.b16 %v854
    %v924 = vunpack.c.l.b16 %v855
    %v925 = vunpack.c.h.b16 %v855
    %v926 = vunpack.c.l.b16 %v856
    %v927 = vunpack.c.h.b16 %v856
    %v928 = vunpack.c.l.b16 %v857
    %v929 = vunpack.c.h.b16 %v857
    %v930 = vunpack.c.l.b16 %v858
    %v931 = vunpack.c.h.b16 %v858
    %v932 = vunpack.c.l.b16 %v859
    %v933 = vunpack.c.h.b16 %v859
    %v934 = vunpack.c.l.b16 %v860
    %v935 = vunpack.c.h.b16 %v860
    %v936 = vunpack.c.l.b16 %v861
    %v937 = vunpack.c.h.b16 %v861
    %v938 = vunpack.c.l.b16 %v862
    %v939 = vunpack.c.h.b16 %v862
    %v940 = vunpack.c.l.b16 %v863
    %v941 = vunpack.c.h.b16 %v863
    %v942 = vunpack.c.l.b16 %v864
    %v943 = vunpack.c.h.b16 %v864
    %v944 = vunpack.c.l.b16 %v865
    %v945 = vunpack.c.h.b16 %v865
    %v946 = vunpack.c.l.b16 %v866
    %v947 = vunpack.c.h.b16 %v866
    %v948 = vunpack.c.l.b16 %v867
    %v949 = vunpack.c.h.b16 %v867
    %v950 = vunpack.c.l.b16 %v868
    %v951 = vunpack.c.h.b16 %v868
    %v952 = vunpack.c.l.b16 %v869
    %v953 = vunpack.c.h.b16 %v869
    %v954 = vunpack.c.l.b16 %v870
    %v955 = vunpack.c.h.b16 %v870
    %v956 = vunpack.c.l.b16 %v871
    %v957 = vunpack.c.h.b16 %v871
    %v958 = vunpack.c.l.b16 %v872
    %v959 = vunpack.c.h.b16 %v872
    %v960 = vunpack.c.l.b16 %v873
    %v961 = vunpack.c.h.b16 %v873
    %v962 = vunpack.c.l.b16 %v874
    %v963 = vunpack.c.h.b16 %v874
    %v964 = vunpack.c.l.b16 %v875
    %v965 = vunpack.c.h.b16 %v875
    %v966 = vunpack.c.l.b16 %v876
    %v967 = vunpack.c.h.b16 %v876
    %v968 = vunpack.c.l.b16 %v877
    %v969 = vunpack.c.h.b16 %v877
    %v970 = vunpack.c.l.b16 %v878
    %v971 = vunpack.c.h.b16 %v878
    %v972 = vunpack.c.l.b16 %v879
    %v973 = vunpack.c.h.b16 %v879
    %v974 = vunpack.c.l.b16 %v880
    %v975 = vunpack.c.h.b16 %v880
    %v976 = vunpack.c.l.b16 %v881
    %v977 = vunpack.c.h.b16 %v881
    %v978 = vpack.c.b16 %v918, %v914
    %v979 = vpack.c.b16 %v919, %v915
    %v980 = vpack.c.b16 %v920, %v916
    %v981 = vpack.c.b16 %v921, %v917
    %v982 = vpack.c.b16 %v926, %v922
    %v983 = vpack.c.b16 %v927, %v923
    %v984 = vpack.c.b16 %v928, %v924
    %v985 = vpack.c.b16 %v929, %v925
    %v986 = vpack.c.b16 %v934, %v930
    %v987 = vpack.c.b16 %v935, %v931
    %v988 = vpack.c.b16 %v936, %v932
    %v989 = vpack.c.b16 %v937, %v933
    %v990 = vpack.c.b16 %v942, %v938
    %v991 = vpack.c.b16 %v943, %v939
    %v992 = vpack.c.b16 %v944, %v940
    %v993 = vpack.c.b16 %v945, %v941
    %v994 = vpack.c.b16 %v950, %v946
    %v995 = vpack.c.b16 %v951, %v947
    %v996 = vpack.c.b16 %v952, %v948
    %v997 = vpack.c.b16 %v953, %v949
    %v998 = vpack.c.b16 %v958, %v954
    %v999 = vpack.c.b16 %v959, %v955
    %v1000 = vpack.c.b16 %v960, %v956
    %v1001 = vpack.c.b16 %v961, %v957
    %v1002 = vpack.c.b16 %v966, %v962
    %v1003 = vpack.c.b16 %v967, %v963
    %v1004 = vpack.c.b16 %v968, %v964
    %v1005 = vpack.c.b16 %v969, %v965
    %v1006 = vpack.c.b16 %v974, %v970
    %v1007 = vpack.c.b16 %v975, %v971
    %v1008 = vpack.c.b16 %v976, %v972
    %v1009 = vpack.c.b16 %v977, %v973
    %1042 = vmatprep.subr.bf16.mxu0 %v979
    %1043 = vmatpush1.bf16.msra.mxu0 %v978
    %1044 = vmatprep.subr.bf16.mxu0 %v983
    %1045 = vmatpush1.bf16.msra.mxu0 %v982
    %1046 = vmatprep.subr.bf16.mxu0 %v987
    %1047 = vmatpush1.bf16.msra.mxu0 %v986
    %1048 = vmatprep.subr.bf16.mxu0 %v991
    %1049 = vmatpush1.bf16.msra.mxu0 %v990
    %1050 = vmatprep.subr.bf16.mxu0 %v995
    %1051 = vmatpush1.bf16.msra.mxu0 %v994
    %1052 = vmatprep.subr.bf16.mxu0 %v999
    %1053 = vmatpush1.bf16.msra.mxu0 %v998
    %1054 = vmatprep.subr.bf16.mxu0 %v1003
    %1055 = vmatpush1.bf16.msra.mxu0 %v1002
    %1056 = vmatprep.subr.bf16.mxu0 %v1007
    %1057 = vmatpush1.bf16.msra.mxu0 %v1006
    %1058 = vmatprep.subr.bf16.mxu0 0
    %1059 = vmatpush1.bf16.msra.mxu0 0
    %1060 = vmatprep.subr.bf16.mxu0 0
    %1061 = vmatpush1.bf16.msra.mxu0 0
    %1062 = vmatprep.subr.bf16.mxu0 0
    %1063 = vmatpush1.bf16.msra.mxu0 0
    %1064 = vmatprep.subr.bf16.mxu0 0
    %1065 = vmatpush1.bf16.msra.mxu0 0
    %1066 = vmatprep.subr.bf16.mxu0 0
    %1067 = vmatpush1.bf16.msra.mxu0 0
    %1068 = vmatprep.subr.bf16.mxu0 0
    %1069 = vmatpush1.bf16.msra.mxu0 0
    %1070 = vmatprep.subr.bf16.mxu0 0
    %1071 = vmatpush1.bf16.msra.mxu0 0
    %1072 = vmatprep.subr.bf16.mxu0 0
    %1073 = vmatpush1.bf16.msra.mxu0 0
    %1074 = vmatprep.mubr.bf16.mxu0 0
    %1075 = vmatmul.mubr.bf16.gmra.mrb[0].mxu0 0
    %v1076 = vpop.f32.mrb[0].mxu0
    %v1077 = vadd.f32 0.0, %v1076
    %v1078 = vpop.f32.mrb[0].mxu0
    %v1079 = vadd.f32 0.0, %v1078
    %v1080 = vpop.f32.mrb[0].mxu0
    %v1081 = vpop.f32.mrb[0].mxu0
    %1082 = vdwg.mxu0
    %1083 = vmatprep.subr.bf16.mxu0 %v981
    %1084 = vmatpush1.bf16.msra.mxu0 %v980
    %1085 = vmatprep.subr.bf16.mxu0 %v985
    %1086 = vmatpush1.bf16.msra.mxu0 %v984
    %1087 = vmatprep.subr.bf16.mxu0 %v989
    %1088 = vmatpush1.bf16.msra.mxu0 %v988
    %1089 = vmatprep.subr.bf16.mxu0 %v993
    %1090 = vmatpush1.bf16.msra.mxu0 %v992
    %1091 = vmatprep.subr.bf16.mxu0 %v997
    %1092 = vmatpush1.bf16.msra.mxu0 %v996
    %1093 = vmatprep.subr.bf16.mxu0 %v1001
    %1094 = vmatpush1.bf16.msra.mxu0 %v1000
    %1095 = vmatprep.subr.bf16.mxu0 %v1005
    %1096 = vmatpush1.bf16.msra.mxu0 %v1004
    %1097 = vmatprep.subr.bf16.mxu0 %v1009
    %1098 = vmatpush1.bf16.msra.mxu0 %v1008
    %1099 = vmatprep.subr.bf16.mxu0 0
    %1100 = vmatpush1.bf16.msra.mxu0 0
    %1101 = vmatprep.subr.bf16.mxu0 0
    %1102 = vmatpush1.bf16.msra.mxu0 0
    %1103 = vmatprep.subr.bf16.mxu0 0
    %1104 = vmatpush1.bf16.msra.mxu0 0
    %1105 = vmatprep.subr.bf16.mxu0 0
    %1106 = vmatpush1.bf16.msra.mxu0 0
    %1107 = vmatprep.subr.bf16.mxu0 0
    %1108 = vmatpush1.bf16.msra.mxu0 0
    %1109 = vmatprep.subr.bf16.mxu0 0
    %1110 = vmatpush1.bf16.msra.mxu0 0
    %1111 = vmatprep.subr.bf16.mxu0 0
    %1112 = vmatpush1.bf16.msra.mxu0 0
    %1113 = vmatprep.subr.bf16.mxu0 0
    %1114 = vmatpush1.bf16.msra.mxu0 0
    %1115 = vmatprep.mubr.bf16.mxu0 0
    %1116 = vmatmul.mubr.bf16.gmra.mrb[0].mxu0 0
    %v1117 = vpop.f32.mrb[0].mxu0
    %v1118 = vadd.f32 0.0, %v1117
    %v1119 = vpop.f32.mrb[0].mxu0
    %v1120 = vadd.f32 0.0, %v1119
    %v1121 = vpop.f32.mrb[0].mxu0
    %v1122 = vpop.f32.mrb[0].mxu0
    %1123 = vdwg.mxu0
    %v1124 = vadd.f32 %v846, %v1077
    %v1125 = vadd.f32 %v847, %v1079
    %v1126 = vadd.f32 %v848, %v1118
    %v1127 = vadd.f32 %v849, %v1120
    %v1128 = vld [vmem:[#allocation2 + $0x1e0] sm:$0xff]
    %v1129 = vld [vmem:[#allocation2 + $0x1e8] sm:$0xff]
    %v1130 = vld [vmem:[#allocation2 + $0x1f0] sm:$0xff]
    %v1131 = vld [vmem:[#allocation2 + $0x1f8] sm:$0xff]
    %v1132 = vld [vmem:[#allocation9] sm:$0xff]
    %v1133 = vld [vmem:[#allocation9 + $0x8] sm:$0xff]
    %v1134 = vld [vmem:[#allocation9 + $0x10] sm:$0xff]
    %v1135 = vld [vmem:[#allocation9 + $0x18] sm:$0xff]
    %v1136 = vld [vmem:[#allocation9 + $0x20] sm:$0xff]
    %v1137 = vld [vmem:[#allocation9 + $0x28] sm:$0xff]
    %v1138 = vld [vmem:[#allocation9 + $0x30] sm:$0xff]
    %v1139 = vld [vmem:[#allocation9 + $0x38] sm:$0xff]
    %v1140 = vld [vmem:[#allocation9 + $0x40] sm:$0xff]
    %v1141 = vld [vmem:[#allocation9 + $0x48] sm:$0xff]
    %v1142 = vld [vmem:[#allocation9 + $0x50] sm:$0xff]
    %v1143 = vld [vmem:[#allocation9 + $0x58] sm:$0xff]
    %v1144 = vld [vmem:[#allocation9 + $0x60] sm:$0xff]
    %v1145 = vld [vmem:[#allocation9 + $0x68] sm:$0xff]
    %v1146 = vld [vmem:[#allocation9 + $0x70] sm:$0xff]
    %v1147 = vld [vmem:[#allocation9 + $0x78] sm:$0xff]
    %v1148 = vld [vmem:[#allocation9 + $0x80] sm:$0xff]
    %v1149 = vld [vmem:[#allocation9 + $0x88] sm:$0xff]
    %v1150 = vld [vmem:[#allocation9 + $0x90] sm:$0xff]
    %v1151 = vld [vmem:[#allocation9 + $0x98] sm:$0xff]
    %v1152 = vld [vmem:[#allocation9 + $0xa0] sm:$0xff]
    %v1153 = vld [vmem:[#allocation9 + $0xa8] sm:$0xff]
    %v1154 = vld [vmem:[#allocation9 + $0xb0] sm:$0xff]
    %v1155 = vld [vmem:[#allocation9 + $0xb8] sm:$0xff]
    %v1156 = vld [vmem:[#allocation9 + $0xc0] sm:$0xff]
    %v1157 = vld [vmem:[#allocation9 + $0xc8] sm:$0xff]
    %v1158 = vld [vmem:[#allocation9 + $0xd0] sm:$0xff]
    %v1159 = vld [vmem:[#allocation9 + $0xd8] sm:$0xff]
    %v1160 = vld [vmem:[#allocation9 + $0xe0] sm:$0xff]
    %v1161 = vld [vmem:[#allocation9 + $0xe8] sm:$0xff]
    %v1162 = vld [vmem:[#allocation9 + $0xf0] sm:$0xff]
    %v1163 = vld [vmem:[#allocation9 + $0xf8] sm:$0xff]
    %v1196 = vunpack.c.l.b16 %v1132
    %v1197 = vunpack.c.h.b16 %v1132
    %v1198 = vunpack.c.l.b16 %v1133
    %v1199 = vunpack.c.h.b16 %v1133
    %v1200 = vunpack.c.l.b16 %v1134
    %v1201 = vunpack.c.h.b16 %v1134
    %v1202 = vunpack.c.l.b16 %v1135
    %v1203 = vunpack.c.h.b16 %v1135
    %v1204 = vunpack.c.l.b16 %v1136
    %v1205 = vunpack.c.h.b16 %v1136
    %v1206 = vunpack.c.l.b16 %v1137
    %v1207 = vunpack.c.h.b16 %v1137
    %v1208 = vunpack.c.l.b16 %v1138
    %v1209 = vunpack.c.h.b16 %v1138
    %v1210 = vunpack.c.l.b16 %v1139
    %v1211 = vunpack.c.h.b16 %v1139
    %v1212 = vunpack.c.l.b16 %v1140
    %v1213 = vunpack.c.h.b16 %v1140
    %v1214 = vunpack.c.l.b16 %v1141
    %v1215 = vunpack.c.h.b16 %v1141
    %v1216 = vunpack.c.l.b16 %v1142
    %v1217 = vunpack.c.h.b16 %v1142
    %v1218 = vunpack.c.l.b16 %v1143
    %v1219 = vunpack.c.h.b16 %v1143
    %v1220 = vunpack.c.l.b16 %v1144
    %v1221 = vunpack.c.h.b16 %v1144
    %v1222 = vunpack.c.l.b16 %v1145
    %v1223 = vunpack.c.h.b16 %v1145
    %v1224 = vunpack.c.l.b16 %v1146
    %v1225 = vunpack.c.h.b16 %v1146
    %v1226 = vunpack.c.l.b16 %v1147
    %v1227 = vunpack.c.h.b16 %v1147
    %v1228 = vunpack.c.l.b16 %v1148
    %v1229 = vunpack.c.h.b16 %v1148
    %v1230 = vunpack.c.l.b16 %v1149
    %v1231 = vunpack.c.h.b16 %v1149
    %v1232 = vunpack.c.l.b16 %v1150
    %v1233 = vunpack.c.h.b16 %v1150
    %v1234 = vunpack.c.l.b16 %v1151
    %v1235 = vunpack.c.h.b16 %v1151
    %v1236 = vunpack.c.l.b16 %v1152
    %v1237 = vunpack.c.h.b16 %v1152
    %v1238 = vunpack.c.l.b16 %v1153
    %v1239 = vunpack.c.h.b16 %v1153
    %v1240 = vunpack.c.l.b16 %v1154
    %v1241 = vunpack.c.h.b16 %v1154
    %v1242 = vunpack.c.l.b16 %v1155
    %v1243 = vunpack.c.h.b16 %v1155
    %v1244 = vunpack.c.l.b16 %v1156
    %v1245 = vunpack.c.h.b16 %v1156
    %v1246 = vunpack.c.l.b16 %v1157
    %v1247 = vunpack.c.h.b16 %v1157
    %v1248 = vunpack.c.l.b16 %v1158
    %v1249 = vunpack.c.h.b16 %v1158
    %v1250 = vunpack.c.l.b16 %v1159
    %v1251 = vunpack.c.h.b16 %v1159
    %v1252 = vunpack.c.l.b16 %v1160
    %v1253 = vunpack.c.h.b16 %v1160
    %v1254 = vunpack.c.l.b16 %v1161
    %v1255 = vunpack.c.h.b16 %v1161
    %v1256 = vunpack.c.l.b16 %v1162
    %v1257 = vunpack.c.h.b16 %v1162
    %v1258 = vunpack.c.l.b16 %v1163
    %v1259 = vunpack.c.h.b16 %v1163
    %v1260 = vpack.c.b16 %v1200, %v1196
    %v1261 = vpack.c.b16 %v1201, %v1197
    %v1262 = vpack.c.b16 %v1202, %v1198
    %v1263 = vpack.c.b16 %v1203, %v1199
    %v1264 = vpack.c.b16 %v1208, %v1204
    %v1265 = vpack.c.b16 %v1209, %v1205
    %v1266 = vpack.c.b16 %v1210, %v1206
    %v1267 = vpack.c.b16 %v1211, %v1207
    %v1268 = vpack.c.b16 %v1216, %v1212
    %v1269 = vpack.c.b16 %v1217, %v1213
    %v1270 = vpack.c.b16 %v1218, %v1214
    %v1271 = vpack.c.b16 %v1219, %v1215
    %v1272 = vpack.c.b16 %v1224, %v1220
    %v1273 = vpack.c.b16 %v1225, %v1221
    %v1274 = vpack.c.b16 %v1226, %v1222
    %v1275 = vpack.c.b16 %v1227, %v1223
    %v1276 = vpack.c.b16 %v1232, %v1228
    %v1277 = vpack.c.b16 %v1233, %v1229
    %v1278 = vpack.c.b16 %v1234, %v1230
    %v1279 = vpack.c.b16 %v1235, %v1231
    %v1280 = vpack.c.b16 %v1240, %v1236
    %v1281 = vpack.c.b16 %v1241, %v1237
    %v1282 = vpack.c.b16 %v1242, %v1238
    %v1283 = vpack.c.b16 %v1243, %v1239
    %v1284 = vpack.c.b16 %v1248, %v1244
    %v1285 = vpack.c.b16 %v1249, %v1245
    %v1286 = vpack.c.b16 %v1250, %v1246
    %v1287 = vpack.c.b16 %v1251, %v1247
    %v1288 = vpack.c.b16 %v1256, %v1252
    %v1289 = vpack.c.b16 %v1257, %v1253
    %v1290 = vpack.c.b16 %v1258, %v1254
    %v1291 = vpack.c.b16 %v1259, %v1255
    %1324 = vmatprep.subr.bf16.mxu0 %v1261
    %1325 = vmatpush1.bf16.msra.mxu0 %v1260
    %1326 = vmatprep.subr.bf16.mxu0 %v1265
    %1327 = vmatpush1.bf16.msra.mxu0 %v1264
    %1328 = vmatprep.subr.bf16.mxu0 %v1269
    %1329 = vmatpush1.bf16.msra.mxu0 %v1268
    %1330 = vmatprep.subr.bf16.mxu0 %v1273
    %1331 = vmatpush1.bf16.msra.mxu0 %v1272
    %1332 = vmatprep.subr.bf16.mxu0 %v1277
    %1333 = vmatpush1.bf16.msra.mxu0 %v1276
    %1334 = vmatprep.subr.bf16.mxu0 %v1281
    %1335 = vmatpush1.bf16.msra.mxu0 %v1280
    %1336 = vmatprep.subr.bf16.mxu0 %v1285
    %1337 = vmatpush1.bf16.msra.mxu0 %v1284
    %1338 = vmatprep.subr.bf16.mxu0 %v1289
    %1339 = vmatpush1.bf16.msra.mxu0 %v1288
    %1340 = vmatprep.subr.bf16.mxu0 0
    %1341 = vmatpush1.bf16.msra.mxu0 0
    %1342 = vmatprep.subr.bf16.mxu0 0
    %1343 = vmatpush1.bf16.msra.mxu0 0
    %1344 = vmatprep.subr.bf16.mxu0 0
    %1345 = vmatpush1.bf16.msra.mxu0 0
    %1346 = vmatprep.subr.bf16.mxu0 0
    %1347 = vmatpush1.bf16.msra.mxu0 0
    %1348 = vmatprep.subr.bf16.mxu0 0
    %1349 = vmatpush1.bf16.msra.mxu0 0
    %1350 = vmatprep.subr.bf16.mxu0 0
    %1351 = vmatpush1.bf16.msra.mxu0 0
    %1352 = vmatprep.subr.bf16.mxu0 0
    %1353 = vmatpush1.bf16.msra.mxu0 0
    %1354 = vmatprep.subr.bf16.mxu0 0
    %1355 = vmatpush1.bf16.msra.mxu0 0
    %1356 = vmatprep.mubr.bf16.mxu0 0
    %1357 = vmatmul.mubr.bf16.gmra.mrb[0].mxu0 0
    %v1358 = vpop.f32.mrb[0].mxu0
    %v1359 = vadd.f32 0.0, %v1358
    %v1360 = vpop.f32.mrb[0].mxu0
    %v1361 = vadd.f32 0.0, %v1360
    %v1362 = vpop.f32.mrb[0].mxu0
    %v1363 = vpop.f32.mrb[0].mxu0
    %1364 = vdwg.mxu0
    %1365 = vmatprep.subr.bf16.mxu0 %v1263
    %1366 = vmatpush1.bf16.msra.mxu0 %v1262
    %1367 = vmatprep.subr.bf16.mxu0 %v1267
    %1368 = vmatpush1.bf16.msra.mxu0 %v1266
    %1369 = vmatprep.subr.bf16.mxu0 %v1271
    %1370 = vmatpush1.bf16.msra.mxu0 %v1270
    %1371 = vmatprep.subr.bf16.mxu0 %v1275
    %1372 = vmatpush1.bf16.msra.mxu0 %v1274
    %1373 = vmatprep.subr.bf16.mxu0 %v1279
    %1374 = vmatpush1.bf16.msra.mxu0 %v1278
    %1375 = vmatprep.subr.bf16.mxu0 %v1283
    %1376 = vmatpush1.bf16.msra.mxu0 %v1282
    %1377 = vmatprep.subr.bf16.mxu0 %v1287
    %1378 = vmatpush1.bf16.msra.mxu0 %v1286
    %1379 = vmatprep.subr.bf16.mxu0 %v1291
    %1380 = vmatpush1.bf16.msra.mxu0 %v1290
    %1381 = vmatprep.subr.bf16.mxu0 0
    %1382 = vmatpush1.bf16.msra.mxu0 0
    %1383 = vmatprep.subr.bf16.mxu0 0
    %1384 = vmatpush1.bf16.msra.mxu0 0
    %1385 = vmatprep.subr.bf16.mxu0 0
    %1386 = vmatpush1.bf16.msra.mxu0 0
    %1387 = vmatprep.subr.bf16.mxu0 0
    %1388 = vmatpush1.bf16.msra.mxu0 0
    %1389 = vmatprep.subr.bf16.mxu0 0
    %1390 = vmatpush1.bf16.msra.mxu0 0
    %1391 = vmatprep.subr.bf16.mxu0 0
    %1392 = vmatpush1.bf16.msra.mxu0 0
    %1393 = vmatprep.subr.bf16.mxu0 0
    %1394 = vmatpush1.bf16.msra.mxu0 0
    %1395 = vmatprep.subr.bf16.mxu0 0
    %1396 = vmatpush1.bf16.msra.mxu0 0
    %1397 = vmatprep.mubr.bf16.mxu0 0
    %1398 = vmatmul.mubr.bf16.gmra.mrb[0].mxu0 0
    %v1399 = vpop.f32.mrb[0].mxu0
    %v1400 = vadd.f32 0.0, %v1399
    %v1401 = vpop.f32.mrb[0].mxu0
    %v1402 = vadd.f32 0.0, %v1401
    %v1403 = vpop.f32.mrb[0].mxu0
    %v1404 = vpop.f32.mrb[0].mxu0
    %1405 = vdwg.mxu0
    %v1406 = vadd.f32 %v1128, %v1359
    %v1407 = vadd.f32 %v1129, %v1361
    %v1408 = vadd.f32 %v1130, %v1400
    %v1409 = vadd.f32 %v1131, %v1402
    %v1410 = vxor.u32 %v1124, 2147483648
    %v1411 = vmul.f32 %v1410, 1.442695
    %v1412 = vpow.pop %v1411
    %v1413 = vadd.f32 %v1412, 1.0
    %v1414 = vrcp.pop %v1413
    %v1415 = vmul.f32 1.0, %v1414
    %v1416 = vxor.u32 %v1125, 2147483648
    %v1417 = vmul.f32 %v1416, 1.442695
    %v1418 = vpow.pop %v1417
    %v1419 = vadd.f32 %v1418, 1.0
    %v1420 = vrcp.pop %v1419
    %v1421 = vmul.f32 1.0, %v1420
    %v1422 = vtanh.pop %v1126
    %v1423 = vxor.u32 %v1127, 2147483648
    %v1424 = vmul.f32 %v1423, 1.442695
    %v1425 = vpow.pop %v1424
    %v1426 = vadd.f32 %v1425, 1.0
    %v1427 = vrcp.pop %v1426
    %v1428 = vmul.f32 1.0, %v1427
    %v1429 = vmul.f32 %v1421, 0.0
    %v1430 = vmul.f32 %v1415, %v1422
    %v1431 = vadd.f32 %v1429, %v1430
    %v1432 = vtanh.pop %v1431
    %v1433 = vmul.f32 %v1428, %v1432
    %v1434 = vxor.u32 %v1406, 2147483648
    %v1435 = vmul.f32 %v1434, 1.442695
    %v1436 = vpow.pop %v1435
    %v1437 = vadd.f32 %v1436, 1.0
    %v1438 = vrcp.pop %v1437
    %v1439 = vmul.f32 1.0, %v1438
    %v1440 = vxor.u32 %v1407, 2147483648
    %v1441 = vmul.f32 %v1440, 1.442695
    %v1442 = vpow.pop %v1441
    %v1443 = vadd.f32 %v1442, 1.0
    %v1444 = vrcp.pop %v1443
    %v1445 = vmul.f32 1.0, %v1444
    %v1446 = vtanh.pop %v1408
    %v1447 = vxor.u32 %v1409, 2147483648
    %v1448 = vmul.f32 %v1447, 1.442695
    %v1449 = vpow.pop %v1448
    %v1450 = vadd.f32 %v1449, 1.0
    %v1451 = vrcp.pop %v1450
    %v1452 = vmul.f32 1.0, %v1451
    %v1453 = vmul.f32 %v1445, 0.0
    %v1454 = vmul.f32 %v1439, %v1446
    %v1455 = vadd.f32 %v1453, %v1454
    %v1456 = vtanh.pop %v1455
    %v1457 = vmul.f32 %v1452, %v1456
    %v1458 = vld [vmem:[#allocation2 + $0x40] sm:$0xff]
    %v1459 = vld [vmem:[#allocation2 + $0x48] sm:$0xff]
    %v1460 = vld [vmem:[#allocation2 + $0x50] sm:$0xff]
    %v1461 = vld [vmem:[#allocation2 + $0x58] sm:$0xff]
    %v1462 = vpack.c.bf16 %v1433, %v1433
    %1463 = vmatprep.subr.bf16.mxu0 %v979
    %1464 = vmatpush1.bf16.msra.mxu0 %v978
    %1465 = vmatprep.subr.bf16.mxu0 %v983
    %1466 = vmatpush1.bf16.msra.mxu0 %v982
    %1467 = vmatprep.subr.bf16.mxu0 %v987
    %1468 = vmatpush1.bf16.msra.mxu0 %v986
    %1469 = vmatprep.subr.bf16.mxu0 %v991
    %1470 = vmatpush1.bf16.msra.mxu0 %v990
    %1471 = vmatprep.subr.bf16.mxu0 %v995
    %1472 = vmatpush1.bf16.msra.mxu0 %v994
    %1473 = vmatprep.subr.bf16.mxu0 %v999
    %1474 = vmatpush1.bf16.msra.mxu0 %v998
    %1475 = vmatprep.subr.bf16.mxu0 %v1003
    %1476 = vmatpush1.bf16.msra.mxu0 %v1002
    %1477 = vmatprep.subr.bf16.mxu0 %v1007
    %1478 = vmatpush1.bf16.msra.mxu0 %v1006
    %1479 = vmatprep.subr.bf16.mxu0 0
    %1480 = vmatpush1.bf16.msra.mxu0 0
    %1481 = vmatprep.subr.bf16.mxu0 0
    %1482 = vmatpush1.bf16.msra.mxu0 0
    %1483 = vmatprep.subr.bf16.mxu0 0
    %1484 = vmatpush1.bf16.msra.mxu0 0
    %1485 = vmatprep.subr.bf16.mxu0 0
    %1486 = vmatpush1.bf16.msra.mxu0 0
    %1487 = vmatprep.subr.bf16.mxu0 0
    %1488 = vmatpush1.bf16.msra.mxu0 0
    %1489 = vmatprep.subr.bf16.mxu0 0
    %1490 = vmatpush1.bf16.msra.mxu0 0
    %1491 = vmatprep.subr.bf16.mxu0 0
    %1492 = vmatpush1.bf16.msra.mxu0 0
    %1493 = vmatprep.subr.bf16.mxu0 0
    %1494 = vmatpush1.bf16.msra.mxu0 0
    %1495 = vmatprep.mubr.bf16.mxu0 0
    %1496 = vmatmul.mubr.bf16.gmra.mrb[0].mxu0 %v1462
    %v1497 = vpop.f32.mrb[0].mxu0
    %v1498 = vadd.f32 0.0, %v1497
    %v1499 = vpop.f32.mrb[0].mxu0
    %v1500 = vadd.f32 0.0, %v1499
    %v1501 = vpop.f32.mrb[0].mxu0
    %v1502 = vpop.f32.mrb[0].mxu0
    %1503 = vdwg.mxu0
    %1504 = vmatprep.subr.bf16.mxu0 %v981
    %1505 = vmatpush1.bf16.msra.mxu0 %v980
    %1506 = vmatprep.subr.bf16.mxu0 %v985
    %1507 = vmatpush1.bf16.msra.mxu0 %v984
    %1508 = vmatprep.subr.bf16.mxu0 %v989
    %1509 = vmatpush1.bf16.msra.mxu0 %v988
    %1510 = vmatprep.subr.bf16.mxu0 %v993
    %1511 = vmatpush1.bf16.msra.mxu0 %v992
    %1512 = vmatprep.subr.bf16.mxu0 %v997
    %1513 = vmatpush1.bf16.msra.mxu0 %v996
    %1514 = vmatprep.subr.bf16.mxu0 %v1001
    %1515 = vmatpush1.bf16.msra.mxu0 %v1000
    %1516 = vmatprep.subr.bf16.mxu0 %v1005
    %1517 = vmatpush1.bf16.msra.mxu0 %v1004
    %1518 = vmatprep.subr.bf16.mxu0 %v1009
    %1519 = vmatpush1.bf16.msra.mxu0 %v1008
    %1520 = vmatprep.subr.bf16.mxu0 0
    %1521 = vmatpush1.bf16.msra.mxu0 0
    %1522 = vmatprep.subr.bf16.mxu0 0
    %1523 = vmatpush1.bf16.msra.mxu0 0
    %1524 = vmatprep.subr.bf16.mxu0 0
    %1525 = vmatpush1.bf16.msra.mxu0 0
    %1526 = vmatprep.subr.bf16.mxu0 0
    %1527 = vmatpush1.bf16.msra.mxu0 0
    %1528 = vmatprep.subr.bf16.mxu0 0
    %1529 = vmatpush1.bf16.msra.mxu0 0
    %1530 = vmatprep.subr.bf16.mxu0 0
    %1531 = vmatpush1.bf16.msra.mxu0 0
    %1532 = vmatprep.subr.bf16.mxu0 0
    %1533 = vmatpush1.bf16.msra.mxu0 0
    %1534 = vmatprep.subr.bf16.mxu0 0
    %1535 = vmatpush1.bf16.msra.mxu0 0
    %1536 = vmatprep.mubr.bf16.mxu0 0
    %1537 = vmatmul.mubr.bf16.gmra.mrb[0].mxu0 %v1462
    %v1538 = vpop.f32.mrb[0].mxu0
    %v1539 = vadd.f32 0.0, %v1538
    %v1540 = vpop.f32.mrb[0].mxu0
    %v1541 = vadd.f32 0.0, %v1540
    %v1542 = vpop.f32.mrb[0].mxu0
    %v1543 = vpop.f32.mrb[0].mxu0
    %1544 = vdwg.mxu0
    %v1545 = vadd.f32 %v1458, %v1498
    %v1546 = vadd.f32 %v1459, %v1500
    %v1547 = vadd.f32 %v1460, %v1539
    %v1548 = vadd.f32 %v1461, %v1541
    %v1549 = vld [vmem:[#allocation2 + $0x1a0] sm:$0xff]
    %v1550 = vld [vmem:[#allocation2 + $0x1a8] sm:$0xff]
    %v1551 = vld [vmem:[#allocation2 + $0x1b0] sm:$0xff]
    %v1552 = vld [vmem:[#allocation2 + $0x1b8] sm:$0xff]
    %v1553 = vpack.c.bf16 %v1457, %v1457
    %1554 = vmatprep.subr.bf16.mxu0 %v1261
    %1555 = vmatpush1.bf16.msra.mxu0 %v1260
    %1556 = vmatprep.subr.bf16.mxu0 %v1265
    %1557 = vmatpush1.bf16.msra.mxu0 %v1264
    %1558 = vmatprep.subr.bf16.mxu0 %v1269
    %1559 = vmatpush1.bf16.msra.mxu0 %v1268
    %1560 = vmatprep.subr.bf16.mxu0 %v1273
    %1561 = vmatpush1.bf16.msra.mxu0 %v1272
    %1562 = vmatprep.subr.bf16.mxu0 %v1277
    %1563 = vmatpush1.bf16.msra.mxu0 %v1276
    %1564 = vmatprep.subr.bf16.mxu0 %v1281
    %1565 = vmatpush1.bf16.msra.mxu0 %v1280
    %1566 = vmatprep.subr.bf16.mxu0 %v1285
    %1567 = vmatpush1.bf16.msra.mxu0 %v1284
    %1568 = vmatprep.subr.bf16.mxu0 %v1289
    %1569 = vmatpush1.bf16.msra.mxu0 %v1288
    %1570 = vmatprep.subr.bf16.mxu0 0
    %1571 = vmatpush1.bf16.msra.mxu0 0
    %1572 = vmatprep.subr.bf16.mxu0 0
    %1573 = vmatpush1.bf16.msra.mxu0 0
    %1574 = vmatprep.subr.bf16.mxu0 0
    %1575 = vmatpush1.bf16.msra.mxu0 0
    %1576 = vmatprep.subr.bf16.mxu0 0
    %1577 = vmatpush1.bf16.msra.mxu0 0
    %1578 = vmatprep.subr.bf16.mxu0 0
    %1579 = vmatpush1.bf16.msra.mxu0 0
    %1580 = vmatprep.subr.bf16.mxu0 0
    %1581 = vmatpush1.bf16.msra.mxu0 0
    %1582 = vmatprep.subr.bf16.mxu0 0
    %1583 = vmatpush1.bf16.msra.mxu0 0
    %1584 = vmatprep.subr.bf16.mxu0 0
    %1585 = vmatpush1.bf16.msra.mxu0 0
    %1586 = vmatprep.mubr.bf16.mxu0 0
    %1587 = vmatmul.mubr.bf16.gmra.mrb[0].mxu0 %v1553
    %v1588 = vpop.f32.mrb[0].mxu0
    %v1589 = vadd.f32 0.0, %v1588
    %v1590 = vpop.f32.mrb[0].mxu0
    %v1591 = vadd.f32 0.0, %v1590
    %v1592 = vpop.f32.mrb[0].mxu0
    %v1593 = vpop.f32.mrb[0].mxu0
    %1594 = vdwg.mxu0
    %1595 = vmatprep.subr.bf16.mxu0 %v1263
    %1596 = vmatpush1.bf16.msra.mxu0 %v1262
    %1597 = vmatprep.subr.bf16.mxu0 %v1267
    %1598 = vmatpush1.bf16.msra.mxu0 %v1266
    %1599 = vmatprep.subr.bf16.mxu0 %v1271
    %1600 = vmatpush1.bf16.msra.mxu0 %v1270
    %1601 = vmatprep.subr.bf16.mxu0 %v1275
    %1602 = vmatpush1.bf16.msra.mxu0 %v1274
    %1603 = vmatprep.subr.bf16.mxu0 %v1279
    %1604 = vmatpush1.bf16.msra.mxu0 %v1278
    %1605 = vmatprep.subr.bf16.mxu0 %v1283
    %1606 = vmatpush1.bf16.msra.mxu0 %v1282
    %1607 = vmatprep.subr.bf16.mxu0 %v1287
    %1608 = vmatpush1.bf16.msra.mxu0 %v1286
    %1609 = vmatprep.subr.bf16.mxu0 %v1291
    %1610 = vmatpush1.bf16.msra.mxu0 %v1290
    %1611 = vmatprep.subr.bf16.mxu0 0
    %1612 = vmatpush1.bf16.msra.mxu0 0
    %1613 = vmatprep.subr.bf16.mxu0 0
    %1614 = vmatpush1.bf16.msra.mxu0 0
    %1615 = vmatprep.subr.bf16.mxu0 0
    %1616 = vmatpush1.bf16.msra.mxu0 0
    %1617 = vmatprep.subr.bf16.mxu0 0
    %1618 = vmatpush1.bf16.msra.mxu0 0
    %1619 = vmatprep.subr.bf16.mxu0 0
    %1620 = vmatpush1.bf16.msra.mxu0 0
    %1621 = vmatprep.subr.bf16.mxu0 0
    %1622 = vmatpush1.bf16.msra.mxu0 0
    %1623 = vmatprep.subr.bf16.mxu0 0
    %1624 = vmatpush1.bf16.msra.mxu0 0
    %1625 = vmatprep.subr.bf16.mxu0 0
    %1626 = vmatpush1.bf16.msra.mxu0 0
    %1627 = vmatprep.mubr.bf16.mxu0 0
    %1628 = vmatmul.mubr.bf16.gmra.mrb[0].mxu0 %v1553
    %v1629 = vpop.f32.mrb[0].mxu0
    %v1630 = vadd.f32 0.0, %v1629
    %v1631 = vpop.f32.mrb[0].mxu0
    %v1632 = vadd.f32 0.0, %v1631
    %v1633 = vpop.f32.mrb[0].mxu0
    %v1634 = vpop.f32.mrb[0].mxu0
    %1635 = vdwg.mxu0
    %v1636 = vadd.f32 %v1549, %v1589
    %v1637 = vadd.f32 %v1550, %v1591
    %v1638 = vadd.f32 %v1551, %v1630
    %v1639 = vadd.f32 %v1552, %v1632
    %v1640 = vxor.u32 %v1545, 2147483648
    %v1641 = vmul.f32 %v1640, 1.442695
    %v1642 = vpow.pop %v1641
    %v1643 = vadd.f32 %v1642, 1.0
    %v1644 = vrcp.pop %v1643
    %v1645 = vmul.f32 1.0, %v1644
    %v1646 = vxor.u32 %v1546, 2147483648
    %v1647 = vmul.f32 %v1646, 1.442695
    %v1648 = vpow.pop %v1647
    %v1649 = vadd.f32 %v1648, 1.0
    %v1650 = vrcp.pop %v1649
    %v1651 = vmul.f32 1.0, %v1650
    %v1652 = vtanh.pop %v1547
    %v1653 = vxor.u32 %v1548, 2147483648
    %v1654 = vmul.f32 %v1653, 1.442695
    %v1655 = vpow.pop %v1654
    %v1656 = vadd.f32 %v1655, 1.0
    %v1657 = vrcp.pop %v1656
    %v1658 = vmul.f32 1.0, %v1657
    %v1659 = vmul.f32 %v1651, %v1431
    %v1660 = vmul.f32 %v1645, %v1652
    %v1661 = vadd.f32 %v1659, %v1660
    %v1662 = vtanh.pop %v1661
    %v1663 = vmul.f32 %v1658, %v1662
    %v1664 = vxor.u32 %v1636, 2147483648
    %v1665 = vmul.f32 %v1664, 1.442695
    %v1666 = vpow.pop %v1665
    %v1667 = vadd.f32 %v1666, 1.0
    %v1668 = vrcp.pop %v1667
    %v1669 = vmul.f32 1.0, %v1668
    %v1670 = vxor.u32 %v1637, 2147483648
    %v1671 = vmul.f32 %v1670, 1.442695
    %v1672 = vpow.pop %v1671
    %v1673 = vadd.f32 %v1672, 1.0
    %v1674 = vrcp.pop %v1673
    %v1675 = vmul.f32 1.0, %v1674
    %v1676 = vtanh.pop %v1638
    %v1677 = vxor.u32 %v1639, 2147483648
    %v1678 = vmul.f32 %v1677, 1.442695
    %v1679 = vpow.pop %v1678
    %v1680 = vadd.f32 %v1679, 1.0
    %v1681 = vrcp.pop %v1680
    %v1682 = vmul.f32 1.0, %v1681
    %v1683 = vmul.f32 %v1675, %v1455
    %v1684 = vmul.f32 %v1669, %v1676
    %v1685 = vadd.f32 %v1683, %v1684
    %v1686 = vtanh.pop %v1685
    %v1687 = vmul.f32 %v1682, %v1686
    %v1688 = vld [vmem:[#allocation2 + $0x80] sm:$0xff]
    %v1689 = vld [vmem:[#allocation2 + $0x88] sm:$0xff]
    %v1690 = vld [vmem:[#allocation2 + $0x90] sm:$0xff]
    %v1691 = vld [vmem:[#allocation2 + $0x98] sm:$0xff]
    %v1692 = vpack.c.bf16 %v1663, %v1663
    %1693 = vmatprep.subr.bf16.mxu0 %v979
    %1694 = vmatpush1.bf16.msra.mxu0 %v978
    %1695 = vmatprep.subr.bf16.mxu0 %v983
    %1696 = vmatpush1.bf16.msra.mxu0 %v982
    %1697 = vmatprep.subr.bf16.mxu0 %v987
    %1698 = vmatpush1.bf16.msra.mxu0 %v986
    %1699 = vmatprep.subr.bf16.mxu0 %v991
    %1700 = vmatpush1.bf16.msra.mxu0 %v990
    %1701 = vmatprep.subr.bf16.mxu0 %v995
    %1702 = vmatpush1.bf16.msra.mxu0 %v994
    %1703 = vmatprep.subr.bf16.mxu0 %v999
    %1704 = vmatpush1.bf16.msra.mxu0 %v998
    %1705 = vmatprep.subr.bf16.mxu0 %v1003
    %1706 = vmatpush1.bf16.msra.mxu0 %v1002
    %1707 = vmatprep.subr.bf16.mxu0 %v1007
    %1708 = vmatpush1.bf16.msra.mxu0 %v1006
    %1709 = vmatprep.subr.bf16.mxu0 0
    %1710 = vmatpush1.bf16.msra.mxu0 0
    %1711 = vmatprep.subr.bf16.mxu0 0
    %1712 = vmatpush1.bf16.msra.mxu0 0
    %1713 = vmatprep.subr.bf16.mxu0 0
    %1714 = vmatpush1.bf16.msra.mxu0 0
    %1715 = vmatprep.subr.bf16.mxu0 0
    %1716 = vmatpush1.bf16.msra.mxu0 0
    %1717 = vmatprep.subr.bf16.mxu0 0
    %1718 = vmatpush1.bf16.msra.mxu0 0
    %1719 = vmatprep.subr.bf16.mxu0 0
    %1720 = vmatpush1.bf16.msra.mxu0 0
    %1721 = vmatprep.subr.bf16.mxu0 0
    %1722 = vmatpush1.bf16.msra.mxu0 0
    %1723 = vmatprep.subr.bf16.mxu0 0
    %1724 = vmatpush1.bf16.msra.mxu0 0
    %1725 = vmatprep.mubr.bf16.mxu0 0
    %1726 = vmatmul.mubr.bf16.gmra.mrb[0].mxu0 %v1692
    %v1727 = vpop.f32.mrb[0].mxu0
    %v1728 = vadd.f32 0.0, %v1727
    %v1729 = vpop.f32.mrb[0].mxu0
    %v1730 = vadd.f32 0.0, %v1729
    %v1731 = vpop.f32.mrb[0].mxu0
    %v1732 = vpop.f32.mrb[0].mxu0
    %1733 = vdwg.mxu0
    %1734 = vmatprep.subr.bf16.mxu0 %v981
    %1735 = vmatpush1.bf16.msra.mxu0 %v980
    %1736 = vmatprep.subr.bf16.mxu0 %v985
    %1737 = vmatpush1.bf16.msra.mxu0 %v984
    %1738 = vmatprep.subr.bf16.mxu0 %v989
    %1739 = vmatpush1.bf16.msra.mxu0 %v988
    %1740 = vmatprep.subr.bf16.mxu0 %v993
    %1741 = vmatpush1.bf16.msra.mxu0 %v992
    %1742 = vmatprep.subr.bf16.mxu0 %v997
    %1743 = vmatpush1.bf16.msra.mxu0 %v996
    %1744 = vmatprep.subr.bf16.mxu0 %v1001
    %1745 = vmatpush1.bf16.msra.mxu0 %v1000
    %1746 = vmatprep.subr.bf16.mxu0 %v1005
    %1747 = vmatpush1.bf16.msra.mxu0 %v1004
    %1748 = vmatprep.subr.bf16.mxu0 %v1009
    %1749 = vmatpush1.bf16.msra.mxu0 %v1008
    %1750 = vmatprep.subr.bf16.mxu0 0
    %1751 = vmatpush1.bf16.msra.mxu0 0
    %1752 = vmatprep.subr.bf16.mxu0 0
    %1753 = vmatpush1.bf16.msra.mxu0 0
    %1754 = vmatprep.subr.bf16.mxu0 0
    %1755 = vmatpush1.bf16.msra.mxu0 0
    %1756 = vmatprep.subr.bf16.mxu0 0
    %1757 = vmatpush1.bf16.msra.mxu0 0
    %1758 = vmatprep.subr.bf16.mxu0 0
    %1759 = vmatpush1.bf16.msra.mxu0 0
    %1760 = vmatprep.subr.bf16.mxu0 0
    %1761 = vmatpush1.bf16.msra.mxu0 0
    %1762 = vmatprep.subr.bf16.mxu0 0
    %1763 = vmatpush1.bf16.msra.mxu0 0
    %1764 = vmatprep.subr.bf16.mxu0 0
    %1765 = vmatpush1.bf16.msra.mxu0 0
    %1766 = vmatprep.mubr.bf16.mxu0 0
    %1767 = vmatmul.mubr.bf16.gmra.mrb[0].mxu0 %v1692
    %v1768 = vpop.f32.mrb[0].mxu0
    %v1769 = vadd.f32 0.0, %v1768
    %v1770 = vpop.f32.mrb[0].mxu0
    %v1771 = vadd.f32 0.0, %v1770
    %v1772 = vpop.f32.mrb[0].mxu0
    %v1773 = vpop.f32.mrb[0].mxu0
    %1774 = vdwg.mxu0
    %v1775 = vadd.f32 %v1688, %v1728
    %v1776 = vadd.f32 %v1689, %v1730
    %v1777 = vadd.f32 %v1690, %v1769
    %v1778 = vadd.f32 %v1691, %v1771
    %v1779 = vld [vmem:[#allocation2 + $0x160] sm:$0xff]
    %v1780 = vld [vmem:[#allocation2 + $0x168] sm:$0xff]
    %v1781 = vld [vmem:[#allocation2 + $0x170] sm:$0xff]
    %v1782 = vld [vmem:[#allocation2 + $0x178] sm:$0xff]
    %v1783 = vpack.c.bf16 %v1687, %v1687
    %1784 = vmatprep.subr.bf16.mxu0 %v1261
    %1785 = vmatpush1.bf16.msra.mxu0 %v1260
    %1786 = vmatprep.subr.bf16.mxu0 %v1265
    %1787 = vmatpush1.bf16.msra.mxu0 %v1264
    %1788 = vmatprep.subr.bf16.mxu0 %v1269
    %1789 = vmatpush1.bf16.msra.mxu0 %v1268
    %1790 = vmatprep.subr.bf16.mxu0 %v1273
    %1791 = vmatpush1.bf16.msra.mxu0 %v1272
    %1792 = vmatprep.subr.bf16.mxu0 %v1277
    %1793 = vmatpush1.bf16.msra.mxu0 %v1276
    %1794 = vmatprep.subr.bf16.mxu0 %v1281
    %1795 = vmatpush1.bf16.msra.mxu0 %v1280
    %1796 = vmatprep.subr.bf16.mxu0 %v1285
    %1797 = vmatpush1.bf16.msra.mxu0 %v1284
    %1798 = vmatprep.subr.bf16.mxu0 %v1289
    %1799 = vmatpush1.bf16.msra.mxu0 %v1288
    %1800 = vmatprep.subr.bf16.mxu0 0
    %1801 = vmatpush1.bf16.msra.mxu0 0
    %1802 = vmatprep.subr.bf16.mxu0 0
    %1803 = vmatpush1.bf16.msra.mxu0 0
    %1804 = vmatprep.subr.bf16.mxu0 0
    %1805 = vmatpush1.bf16.msra.mxu0 0
    %1806 = vmatprep.subr.bf16.mxu0 0
    %1807 = vmatpush1.bf16.msra.mxu0 0
    %1808 = vmatprep.subr.bf16.mxu0 0
    %1809 = vmatpush1.bf16.msra.mxu0 0
    %1810 = vmatprep.subr.bf16.mxu0 0
    %1811 = vmatpush1.bf16.msra.mxu0 0
    %1812 = vmatprep.subr.bf16.mxu0 0
    %1813 = vmatpush1.bf16.msra.mxu0 0
    %1814 = vmatprep.subr.bf16.mxu0 0
    %1815 = vmatpush1.bf16.msra.mxu0 0
    %1816 = vmatprep.mubr.bf16.mxu0 0
    %1817 = vmatmul.mubr.bf16.gmra.mrb[0].mxu0 %v1783
    %v1818 = vpop.f32.mrb[0].mxu0
    %v1819 = vadd.f32 0.0, %v1818
    %v1820 = vpop.f32.mrb[0].mxu0
    %v1821 = vadd.f32 0.0, %v1820
    %v1822 = vpop.f32.mrb[0].mxu0
    %v1823 = vpop.f32.mrb[0].mxu0
    %1824 = vdwg.mxu0
    %1825 = vmatprep.subr.bf16.mxu0 %v1263
    %1826 = vmatpush1.bf16.msra.mxu0 %v1262
    %1827 = vmatprep.subr.bf16.mxu0 %v1267
    %1828 = vmatpush1.bf16.msra.mxu0 %v1266
    %1829 = vmatprep.subr.bf16.mxu0 %v1271
    %1830 = vmatpush1.bf16.msra.mxu0 %v1270
    %1831 = vmatprep.subr.bf16.mxu0 %v1275
    %1832 = vmatpush1.bf16.msra.mxu0 %v1274
    %1833 = vmatprep.subr.bf16.mxu0 %v1279
    %1834 = vmatpush1.bf16.msra.mxu0 %v1278
    %1835 = vmatprep.subr.bf16.mxu0 %v1283
    %1836 = vmatpush1.bf16.msra.mxu0 %v1282
    %1837 = vmatprep.subr.bf16.mxu0 %v1287
    %1838 = vmatpush1.bf16.msra.mxu0 %v1286
    %1839 = vmatprep.subr.bf16.mxu0 %v1291
    %1840 = vmatpush1.bf16.msra.mxu0 %v1290
    %1841 = vmatprep.subr.bf16.mxu0 0
    %1842 = vmatpush1.bf16.msra.mxu0 0
    %1843 = vmatprep.subr.bf16.mxu0 0
    %1844 = vmatpush1.bf16.msra.mxu0 0
    %1845 = vmatprep.subr.bf16.mxu0 0
    %1846 = vmatpush1.bf16.msra.mxu0 0
    %1847 = vmatprep.subr.bf16.mxu0 0
    %1848 = vmatpush1.bf16.msra.mxu0 0
    %1849 = vmatprep.subr.bf16.mxu0 0
    %1850 = vmatpush1.bf16.msra.mxu0 0
    %1851 = vmatprep.subr.bf16.mxu0 0
    %1852 = vmatpush1.bf16.msra.mxu0 0
    %1853 = vmatprep.subr.bf16.mxu0 0
    %1854 = vmatpush1.bf16.msra.mxu0 0
    %1855 = vmatprep.subr.bf16.mxu0 0
    %1856 = vmatpush1.bf16.msra.mxu0 0
    %1857 = vmatprep.mubr.bf16.mxu0 0
    %1858 = vmatmul.mubr.bf16.gmra.mrb[0].mxu0 %v1783
    %v1859 = vpop.f32.mrb[0].mxu0
    %v1860 = vadd.f32 0.0, %v1859
    %v1861 = vpop.f32.mrb[0].mxu0
    %v1862 = vadd.f32 0.0, %v1861
    %v1863 = vpop.f32.mrb[0].mxu0
    %v1864 = vpop.f32.mrb[0].mxu0
    %1865 = vdwg.mxu0
    %v1866 = vadd.f32 %v1779, %v1819
    %v1867 = vadd.f32 %v1780, %v1821
    %v1868 = vadd.f32 %v1781, %v1860
    %v1869 = vadd.f32 %v1782, %v1862
    %v1870 = vxor.u32 %v1775, 2147483648
    %v1871 = vmul.f32 %v1870, 1.442695
    %v1872 = vpow.pop %v1871
    %v1873 = vadd.f32 %v1872, 1.0
    %v1874 = vrcp.pop %v1873
    %v1875 = vmul.f32 1.0, %v1874
    %v1876 = vxor.u32 %v1776, 2147483648
    %v1877 = vmul.f32 %v1876, 1.442695
    %v1878 = vpow.pop %v1877
    %v1879 = vadd.f32 %v1878, 1.0
    %v1880 = vrcp.pop %v1879
    %v1881 = vmul.f32 1.0, %v1880
    %v1882 = vtanh.pop %v1777
    %v1883 = vxor.u32 %v1778, 2147483648
    %v1884 = vmul.f32 %v1883, 1.442695
    %v1885 = vpow.pop %v1884
    %v1886 = vadd.f32 %v1885, 1.0
    %v1887 = vrcp.pop %v1886
    %v1888 = vmul.f32 1.0, %v1887
    %v1889 = vmul.f32 %v1881, %v1661
    %v1890 = vmul.f32 %v1875, %v1882
    %v1891 = vadd.f32 %v1889, %v1890
    %v1892 = vtanh.pop %v1891
    %v1893 = vmul.f32 %v1888, %v1892
    %v1894 = vxor.u32 %v1866, 2147483648
    %v1895 = vmul.f32 %v1894, 1.442695
    %v1896 = vpow.pop %v1895
    %v1897 = vadd.f32 %v1896, 1.0
    %v1898 = vrcp.pop %v1897
    %v1899 = vmul.f32 1.0, %v1898
    %v1900 = vxor.u32 %v1867, 2147483648
    %v1901 = vmul.f32 %v1900, 1.442695
    %v1902 = vpow.pop %v1901
    %v1903 = vadd.f32 %v1902, 1.0
    %v1904 = vrcp.pop %v1903
    %v1905 = vmul.f32 1.0, %v1904
    %v1906 = vtanh.pop %v1868
    %v1907 = vxor.u32 %v1869, 2147483648
    %v1908 = vmul.f32 %v1907, 1.442695
    %v1909 = vpow.pop %v1908
    %v1910 = vadd.f32 %v1909, 1.0
    %v1911 = vrcp.pop %v1910
    %v1912 = vmul.f32 1.0, %v1911
    %v1913 = vmul.f32 %v1905, %v1685
    %v1914 = vmul.f32 %v1899, %v1906
    %v1915 = vadd.f32 %v1913, %v1914
    %v1916 = vtanh.pop %v1915
    %v1917 = vmul.f32 %v1912, %v1916
    %v1918 = vld [vmem:[#allocation2 + $0xc0] sm:$0xff]
    %v1919 = vld [vmem:[#allocation2 + $0xc8] sm:$0xff]
    %v1920 = vld [vmem:[#allocation2 + $0xd0] sm:$0xff]
    %v1921 = vld [vmem:[#allocation2 + $0xd8] sm:$0xff]
    %v1922 = vpack.c.bf16 %v1893, %v1893
    %1923 = vmatprep.subr.bf16.mxu0 %v979
    %1924 = vmatpush1.bf16.msra.mxu0 %v978
    %1925 = vmatprep.subr.bf16.mxu0 %v983
    %1926 = vmatpush1.bf16.msra.mxu0 %v982
    %1927 = vmatprep.subr.bf16.mxu0 %v987
    %1928 = vmatpush1.bf16.msra.mxu0 %v986
    %1929 = vmatprep.subr.bf16.mxu0 %v991
    %1930 = vmatpush1.bf16.msra.mxu0 %v990
    %1931 = vmatprep.subr.bf16.mxu0 %v995
    %1932 = vmatpush1.bf16.msra.mxu0 %v994
    %1933 = vmatprep.subr.bf16.mxu0 %v999
    %1934 = vmatpush1.bf16.msra.mxu0 %v998
    %1935 = vmatprep.subr.bf16.mxu0 %v1003
    %1936 = vmatpush1.bf16.msra.mxu0 %v1002
    %1937 = vmatprep.subr.bf16.mxu0 %v1007
    %1938 = vmatpush1.bf16.msra.mxu0 %v1006
    %1939 = vmatprep.subr.bf16.mxu0 0
    %1940 = vmatpush1.bf16.msra.mxu0 0
    %1941 = vmatprep.subr.bf16.mxu0 0
    %1942 = vmatpush1.bf16.msra.mxu0 0
    %1943 = vmatprep.subr.bf16.mxu0 0
    %1944 = vmatpush1.bf16.msra.mxu0 0
    %1945 = vmatprep.subr.bf16.mxu0 0
    %1946 = vmatpush1.bf16.msra.mxu0 0
    %1947 = vmatprep.subr.bf16.mxu0 0
    %1948 = vmatpush1.bf16.msra.mxu0 0
    %1949 = vmatprep.subr.bf16.mxu0 0
    %1950 = vmatpush1.bf16.msra.mxu0 0
    %1951 = vmatprep.subr.bf16.mxu0 0
    %1952 = vmatpush1.bf16.msra.mxu0 0
    %1953 = vmatprep.subr.bf16.mxu0 0
    %1954 = vmatpush1.bf16.msra.mxu0 0
    %1955 = vmatprep.mubr.bf16.mxu0 0
    %1956 = vmatmul.mubr.bf16.gmra.mrb[0].mxu0 %v1922
    %v1957 = vpop.f32.mrb[0].mxu0
    %v1958 = vadd.f32 0.0, %v1957
    %v1959 = vpop.f32.mrb[0].mxu0
    %v1960 = vadd.f32 0.0, %v1959
    %v1961 = vpop.f32.mrb[0].mxu0
    %v1962 = vpop.f32.mrb[0].mxu0
    %1963 = vdwg.mxu0
    %1964 = vmatprep.subr.bf16.mxu0 %v981
    %1965 = vmatpush1.bf16.msra.mxu0 %v980
    %1966 = vmatprep.subr.bf16.mxu0 %v985
    %1967 = vmatpush1.bf16.msra.mxu0 %v984
    %1968 = vmatprep.subr.bf16.mxu0 %v989
    %1969 = vmatpush1.bf16.msra.mxu0 %v988
    %1970 = vmatprep.subr.bf16.mxu0 %v993
    %1971 = vmatpush1.bf16.msra.mxu0 %v992
    %1972 = vmatprep.subr.bf16.mxu0 %v997
    %1973 = vmatpush1.bf16.msra.mxu0 %v996
    %1974 = vmatprep.subr.bf16.mxu0 %v1001
    %1975 = vmatpush1.bf16.msra.mxu0 %v1000
    %1976 = vmatprep.subr.bf16.mxu0 %v1005
    %1977 = vmatpush1.bf16.msra.mxu0 %v1004
    %1978 = vmatprep.subr.bf16.mxu0 %v1009
    %1979 = vmatpush1.bf16.msra.mxu0 %v1008
    %1980 = vmatprep.subr.bf16.mxu0 0
    %1981 = vmatpush1.bf16.msra.mxu0 0
    %1982 = vmatprep.subr.bf16.mxu0 0
    %1983 = vmatpush1.bf16.msra.mxu0 0
    %1984 = vmatprep.subr.bf16.mxu0 0
    %1985 = vmatpush1.bf16.msra.mxu0 0
    %1986 = vmatprep.subr.bf16.mxu0 0
    %1987 = vmatpush1.bf16.msra.mxu0 0
    %1988 = vmatprep.subr.bf16.mxu0 0
    %1989 = vmatpush1.bf16.msra.mxu0 0
    %1990 = vmatprep.subr.bf16.mxu0 0
    %1991 = vmatpush1.bf16.msra.mxu0 0
    %1992 = vmatprep.subr.bf16.mxu0 0
    %1993 = vmatpush1.bf16.msra.mxu0 0
    %1994 = vmatprep.subr.bf16.mxu0 0
    %1995 = vmatpush1.bf16.msra.mxu0 0
    %1996 = vmatprep.mubr.bf16.mxu0 0
    %1997 = vmatmul.mubr.bf16.gmra.mrb[0].mxu0 %v1922
    %v1998 = vpop.f32.mrb[0].mxu0
    %v1999 = vadd.f32 0.0, %v1998
    %v2000 = vpop.f32.mrb[0].mxu0
    %v2001 = vadd.f32 0.0, %v2000
    %v2002 = vpop.f32.mrb[0].mxu0
    %v2003 = vpop.f32.mrb[0].mxu0
    %2004 = vdwg.mxu0
    %v2005 = vadd.f32 %v1918, %v1958
    %v2006 = vadd.f32 %v1919, %v1960
    %v2007 = vadd.f32 %v1920, %v1999
    %v2008 = vadd.f32 %v1921, %v2001
    %v2009 = vld [vmem:[#allocation2 + $0x120] sm:$0xff]
    %v2010 = vld [vmem:[#allocation2 + $0x128] sm:$0xff]
    %v2011 = vld [vmem:[#allocation2 + $0x130] sm:$0xff]
    %v2012 = vld [vmem:[#allocation2 + $0x138] sm:$0xff]
    %v2013 = vpack.c.bf16 %v1917, %v1917
    %2014 = vmatprep.subr.bf16.mxu0 %v1261
    %2015 = vmatpush1.bf16.msra.mxu0 %v1260
    %2016 = vmatprep.subr.bf16.mxu0 %v1265
    %2017 = vmatpush1.bf16.msra.mxu0 %v1264
    %2018 = vmatprep.subr.bf16.mxu0 %v1269
    %2019 = vmatpush1.bf16.msra.mxu0 %v1268
    %2020 = vmatprep.subr.bf16.mxu0 %v1273
    %2021 = vmatpush1.bf16.msra.mxu0 %v1272
    %2022 = vmatprep.subr.bf16.mxu0 %v1277
    %2023 = vmatpush1.bf16.msra.mxu0 %v1276
    %2024 = vmatprep.subr.bf16.mxu0 %v1281
    %2025 = vmatpush1.bf16.msra.mxu0 %v1280
    %2026 = vmatprep.subr.bf16.mxu0 %v1285
    %2027 = vmatpush1.bf16.msra.mxu0 %v1284
    %2028 = vmatprep.subr.bf16.mxu0 %v1289
    %2029 = vmatpush1.bf16.msra.mxu0 %v1288
    %2030 = vmatprep.subr.bf16.mxu0 0
    %2031 = vmatpush1.bf16.msra.mxu0 0
    %2032 = vmatprep.subr.bf16.mxu0 0
    %2033 = vmatpush1.bf16.msra.mxu0 0
    %2034 = vmatprep.subr.bf16.mxu0 0
    %2035 = vmatpush1.bf16.msra.mxu0 0
    %2036 = vmatprep.subr.bf16.mxu0 0
    %2037 = vmatpush1.bf16.msra.mxu0 0
    %2038 = vmatprep.subr.bf16.mxu0 0
    %2039 = vmatpush1.bf16.msra.mxu0 0
    %2040 = vmatprep.subr.bf16.mxu0 0
    %2041 = vmatpush1.bf16.msra.mxu0 0
    %2042 = vmatprep.subr.bf16.mxu0 0
    %2043 = vmatpush1.bf16.msra.mxu0 0
    %2044 = vmatprep.subr.bf16.mxu0 0
    %2045 = vmatpush1.bf16.msra.mxu0 0
    %2046 = vmatprep.mubr.bf16.mxu0 0
    %2047 = vmatmul.mubr.bf16.gmra.mrb[0].mxu0 %v2013
    %v2048 = vpop.f32.mrb[0].mxu0
    %v2049 = vadd.f32 0.0, %v2048
    %v2050 = vpop.f32.mrb[0].mxu0
    %v2051 = vadd.f32 0.0, %v2050
    %v2052 = vpop.f32.mrb[0].mxu0
    %v2053 = vpop.f32.mrb[0].mxu0
    %2054 = vdwg.mxu0
    %2055 = vmatprep.subr.bf16.mxu0 %v1263
    %2056 = vmatpush1.bf16.msra.mxu0 %v1262
    %2057 = vmatprep.subr.bf16.mxu0 %v1267
    %2058 = vmatpush1.bf16.msra.mxu0 %v1266
    %2059 = vmatprep.subr.bf16.mxu0 %v1271
    %2060 = vmatpush1.bf16.msra.mxu0 %v1270
    %2061 = vmatprep.subr.bf16.mxu0 %v1275
    %2062 = vmatpush1.bf16.msra.mxu0 %v1274
    %2063 = vmatprep.subr.bf16.mxu0 %v1279
    %2064 = vmatpush1.bf16.msra.mxu0 %v1278
    %2065 = vmatprep.subr.bf16.mxu0 %v1283
    %2066 = vmatpush1.bf16.msra.mxu0 %v1282
    %2067 = vmatprep.subr.bf16.mxu0 %v1287
    %2068 = vmatpush1.bf16.msra.mxu0 %v1286
    %2069 = vmatprep.subr.bf16.mxu0 %v1291
    %2070 = vmatpush1.bf16.msra.mxu0 %v1290
    %2071 = vmatprep.subr.bf16.mxu0 0
    %2072 = vmatpush1.bf16.msra.mxu0 0
    %2073 = vmatprep.subr.bf16.mxu0 0
    %2074 = vmatpush1.bf16.msra.mxu0 0
    %2075 = vmatprep.subr.bf16.mxu0 0
    %2076 = vmatpush1.bf16.msra.mxu0 0
    %2077 = vmatprep.subr.bf16.mxu0 0
    %2078 = vmatpush1.bf16.msra.mxu0 0
    %2079 = vmatprep.subr.bf16.mxu0 0
    %2080 = vmatpush1.bf16.msra.mxu0 0
    %2081 = vmatprep.subr.bf16.mxu0 0
    %2082 = vmatpush1.bf16.msra.mxu0 0
    %2083 = vmatprep.subr.bf16.mxu0 0
    %2084 = vmatpush1.bf16.msra.mxu0 0
    %2085 = vmatprep.subr.bf16.mxu0 0
    %2086 = vmatpush1.bf16.msra.mxu0 0
    %2087 = vmatprep.mubr.bf16.mxu0 0
    %2088 = vmatmul.mubr.bf16.gmra.mrb[0].mxu0 %v2013
    %v2089 = vpop.f32.mrb[0].mxu0
    %v2090 = vadd.f32 0.0, %v2089
    %v2091 = vpop.f32.mrb[0].mxu0
    %v2092 = vadd.f32 0.0, %v2091
    %v2093 = vpop.f32.mrb[0].mxu0
    %v2094 = vpop.f32.mrb[0].mxu0
    %2095 = vdwg.mxu0
    %v2096 = vadd.f32 %v2009, %v2049
    %v2097 = vadd.f32 %v2010, %v2051
    %v2098 = vadd.f32 %v2011, %v2090
    %v2099 = vadd.f32 %v2012, %v2092
    %v2100 = vxor.u32 %v2005, 2147483648
    %v2101 = vmul.f32 %v2100, 1.442695
    %v2102 = vpow.pop %v2101
    %v2103 = vadd.f32 %v2102, 1.0
    %v2104 = vrcp.pop %v2103
    %v2105 = vmul.f32 1.0, %v2104
    %v2106 = vxor.u32 %v2006, 2147483648
    %v2107 = vmul.f32 %v2106, 1.442695
    %v2108 = vpow.pop %v2107
    %v2109 = vadd.f32 %v2108, 1.0
    %v2110 = vrcp.pop %v2109
    %v2111 = vmul.f32 1.0, %v2110
    %v2112 = vtanh.pop %v2007
    %v2113 = vxor.u32 %v2008, 2147483648
    %v2114 = vmul.f32 %v2113, 1.442695
    %v2115 = vpow.pop %v2114
    %v2116 = vadd.f32 %v2115, 1.0
    %v2117 = vrcp.pop %v2116
    %v2118 = vmul.f32 1.0, %v2117
    %v2119 = vmul.f32 %v2111, %v1891
    %v2120 = vmul.f32 %v2105, %v2112
    %v2121 = vadd.f32 %v2119, %v2120
    %v2122 = vtanh.pop %v2121
    %v2123 = vmul.f32 %v2118, %v2122
    %v2124 = vxor.u32 %v2096, 2147483648
    %v2125 = vmul.f32 %v2124, 1.442695
    %v2126 = vpow.pop %v2125
    %v2127 = vadd.f32 %v2126, 1.0
    %v2128 = vrcp.pop %v2127
    %v2129 = vmul.f32 1.0, %v2128
    %v2130 = vxor.u32 %v2097, 2147483648
    %v2131 = vmul.f32 %v2130, 1.442695
    %v2132 = vpow.pop %v2131
    %v2133 = vadd.f32 %v2132, 1.0
    %v2134 = vrcp.pop %v2133
    %v2135 = vmul.f32 1.0, %v2134
    %v2136 = vtanh.pop %v2098
    %v2137 = vxor.u32 %v2099, 2147483648
    %v2138 = vmul.f32 %v2137, 1.442695
    %v2139 = vpow.pop %v2138
    %v2140 = vadd.f32 %v2139, 1.0
    %v2141 = vrcp.pop %v2140
    %v2142 = vmul.f32 1.0, %v2141
    %v2143 = vmul.f32 %v2135, %v1915
    %v2144 = vmul.f32 %v2129, %v2136
    %v2145 = vadd.f32 %v2143, %v2144
    %v2146 = vtanh.pop %v2145
    %v2147 = vmul.f32 %v2142, %v2146
    %v2148 = vld [vmem:[#allocation2 + $0x100] sm:$0xff]
    %v2149 = vld [vmem:[#allocation2 + $0x108] sm:$0xff]
    %v2150 = vld [vmem:[#allocation2 + $0x110] sm:$0xff]
    %v2151 = vld [vmem:[#allocation2 + $0x118] sm:$0xff]
    %v2152 = vpack.c.bf16 %v2123, %v2123
    %2153 = vmatprep.subr.bf16.mxu0 %v979
    %2154 = vmatpush1.bf16.msra.mxu0 %v978
    %2155 = vmatprep.subr.bf16.mxu0 %v983
    %2156 = vmatpush1.bf16.msra.mxu0 %v982
    %2157 = vmatprep.subr.bf16.mxu0 %v987
    %2158 = vmatpush1.bf16.msra.mxu0 %v986
    %2159 = vmatprep.subr.bf16.mxu0 %v991
    %2160 = vmatpush1.bf16.msra.mxu0 %v990
    %2161 = vmatprep.subr.bf16.mxu0 %v995
    %2162 = vmatpush1.bf16.msra.mxu0 %v994
    %2163 = vmatprep.subr.bf16.mxu0 %v999
    %2164 = vmatpush1.bf16.msra.mxu0 %v998
    %2165 = vmatprep.subr.bf16.mxu0 %v1003
    %2166 = vmatpush1.bf16.msra.mxu0 %v1002
    %2167 = vmatprep.subr.bf16.mxu0 %v1007
    %2168 = vmatpush1.bf16.msra.mxu0 %v1006
    %2169 = vmatprep.subr.bf16.mxu0 0
    %2170 = vmatpush1.bf16.msra.mxu0 0
    %2171 = vmatprep.subr.bf16.mxu0 0
    %2172 = vmatpush1.bf16.msra.mxu0 0
    %2173 = vmatprep.subr.bf16.mxu0 0
    %2174 = vmatpush1.bf16.msra.mxu0 0
    %2175 = vmatprep.subr.bf16.mxu0 0
    %2176 = vmatpush1.bf16.msra.mxu0 0
    %2177 = vmatprep.subr.bf16.mxu0 0
    %2178 = vmatpush1.bf16.msra.mxu0 0
    %2179 = vmatprep.subr.bf16.mxu0 0
    %2180 = vmatpush1.bf16.msra.mxu0 0
    %2181 = vmatprep.subr.bf16.mxu0 0
    %2182 = vmatpush1.bf16.msra.mxu0 0
    %2183 = vmatprep.subr.bf16.mxu0 0
    %2184 = vmatpush1.bf16.msra.mxu0 0
    %2185 = vmatprep.mubr.bf16.mxu0 0
    %2186 = vmatmul.mubr.bf16.gmra.mrb[0].mxu0 %v2152
    %v2187 = vpop.f32.mrb[0].mxu0
    %v2188 = vadd.f32 0.0, %v2187
    %v2189 = vpop.f32.mrb[0].mxu0
    %v2190 = vadd.f32 0.0, %v2189
    %v2191 = vpop.f32.mrb[0].mxu0
    %v2192 = vpop.f32.mrb[0].mxu0
    %2193 = vdwg.mxu0
    %2194 = vmatprep.subr.bf16.mxu0 %v981
    %2195 = vmatpush1.bf16.msra.mxu0 %v980
    %2196 = vmatprep.subr.bf16.mxu0 %v985
    %2197 = vmatpush1.bf16.msra.mxu0 %v984
    %2198 = vmatprep.subr.bf16.mxu0 %v989
    %2199 = vmatpush1.bf16.msra.mxu0 %v988
    %2200 = vmatprep.subr.bf16.mxu0 %v993
    %2201 = vmatpush1.bf16.msra.mxu0 %v992
    %2202 = vmatprep.subr.bf16.mxu0 %v997
    %2203 = vmatpush1.bf16.msra.mxu0 %v996
    %2204 = vmatprep.subr.bf16.mxu0 %v1001
    %2205 = vmatpush1.bf16.msra.mxu0 %v1000
    %2206 = vmatprep.subr.bf16.mxu0 %v1005
    %2207 = vmatpush1.bf16.msra.mxu0 %v1004
    %2208 = vmatprep.subr.bf16.mxu0 %v1009
    %2209 = vmatpush1.bf16.msra.mxu0 %v1008
    %2210 = vmatprep.subr.bf16.mxu0 0
    %2211 = vmatpush1.bf16.msra.mxu0 0
    %2212 = vmatprep.subr.bf16.mxu0 0
    %2213 = vmatpush1.bf16.msra.mxu0 0
    %2214 = vmatprep.subr.bf16.mxu0 0
    %2215 = vmatpush1.bf16.msra.mxu0 0
    %2216 = vmatprep.subr.bf16.mxu0 0
    %2217 = vmatpush1.bf16.msra.mxu0 0
    %2218 = vmatprep.subr.bf16.mxu0 0
    %2219 = vmatpush1.bf16.msra.mxu0 0
    %2220 = vmatprep.subr.bf16.mxu0 0
    %2221 = vmatpush1.bf16.msra.mxu0 0
    %2222 = vmatprep.subr.bf16.mxu0 0
    %2223 = vmatpush1.bf16.msra.mxu0 0
    %2224 = vmatprep.subr.bf16.mxu0 0
    %2225 = vmatpush1.bf16.msra.mxu0 0
    %2226 = vmatprep.mubr.bf16.mxu0 0
    %2227 = vmatmul.mubr.bf16.gmra.mrb[0].mxu0 %v2152
    %v2228 = vpop.f32.mrb[0].mxu0
    %v2229 = vadd.f32 0.0, %v2228
    %v2230 = vpop.f32.mrb[0].mxu0
    %v2231 = vadd.f32 0.0, %v2230
    %v2232 = vpop.f32.mrb[0].mxu0
    %v2233 = vpop.f32.mrb[0].mxu0
    %2234 = vdwg.mxu0
    %v2235 = vadd.f32 %v2148, %v2188
    %v2236 = vadd.f32 %v2149, %v2190
    %v2237 = vadd.f32 %v2150, %v2229
    %v2238 = vadd.f32 %v2151, %v2231
    %v2239 = vld [vmem:[#allocation2 + $0xe0] sm:$0xff]
    %v2240 = vld [vmem:[#allocation2 + $0xe8] sm:$0xff]
    %v2241 = vld [vmem:[#allocation2 + $0xf0] sm:$0xff]
    %v2242 = vld [vmem:[#allocation2 + $0xf8] sm:$0xff]
    %v2243 = vpack.c.bf16 %v2147, %v2147
    %2244 = vmatprep.subr.bf16.mxu0 %v1261
    %2245 = vmatpush1.bf16.msra.mxu0 %v1260
    %2246 = vmatprep.subr.bf16.mxu0 %v1265
    %2247 = vmatpush1.bf16.msra.mxu0 %v1264
    %2248 = vmatprep.subr.bf16.mxu0 %v1269
    %2249 = vmatpush1.bf16.msra.mxu0 %v1268
    %2250 = vmatprep.subr.bf16.mxu0 %v1273
    %2251 = vmatpush1.bf16.msra.mxu0 %v1272
    %2252 = vmatprep.subr.bf16.mxu0 %v1277
    %2253 = vmatpush1.bf16.msra.mxu0 %v1276
    %2254 = vmatprep.subr.bf16.mxu0 %v1281
    %2255 = vmatpush1.bf16.msra.mxu0 %v1280
    %2256 = vmatprep.subr.bf16.mxu0 %v1285
    %2257 = vmatpush1.bf16.msra.mxu0 %v1284
    %2258 = vmatprep.subr.bf16.mxu0 %v1289
    %2259 = vmatpush1.bf16.msra.mxu0 %v1288
    %2260 = vmatprep.subr.bf16.mxu0 0
    %2261 = vmatpush1.bf16.msra.mxu0 0
    %2262 = vmatprep.subr.bf16.mxu0 0
    %2263 = vmatpush1.bf16.msra.mxu0 0
    %2264 = vmatprep.subr.bf16.mxu0 0
    %2265 = vmatpush1.bf16.msra.mxu0 0
    %2266 = vmatprep.subr.bf16.mxu0 0
    %2267 = vmatpush1.bf16.msra.mxu0 0
    %2268 = vmatprep.subr.bf16.mxu0 0
    %2269 = vmatpush1.bf16.msra.mxu0 0
    %2270 = vmatprep.subr.bf16.mxu0 0
    %2271 = vmatpush1.bf16.msra.mxu0 0
    %2272 = vmatprep.subr.bf16.mxu0 0
    %2273 = vmatpush1.bf16.msra.mxu0 0
    %2274 = vmatprep.subr.bf16.mxu0 0
    %2275 = vmatpush1.bf16.msra.mxu0 0
    %2276 = vmatprep.mubr.bf16.mxu0 0
    %2277 = vmatmul.mubr.bf16.gmra.mrb[0].mxu0 %v2243
    %v2278 = vpop.f32.mrb[0].mxu0
    %v2279 = vadd.f32 0.0, %v2278
    %v2280 = vpop.f32.mrb[0].mxu0
    %v2281 = vadd.f32 0.0, %v2280
    %v2282 = vpop.f32.mrb[0].mxu0
    %v2283 = vpop.f32.mrb[0].mxu0
    %2284 = vdwg.mxu0
    %2285 = vmatprep.subr.bf16.mxu0 %v1263
    %2286 = vmatpush1.bf16.msra.mxu0 %v1262
    %2287 = vmatprep.subr.bf16.mxu0 %v1267
    %2288 = vmatpush1.bf16.msra.mxu0 %v1266
    %2289 = vmatprep.subr.bf16.mxu0 %v1271
    %2290 = vmatpush1.bf16.msra.mxu0 %v1270
    %2291 = vmatprep.subr.bf16.mxu0 %v1275
    %2292 = vmatpush1.bf16.msra.mxu0 %v1274
    %2293 = vmatprep.subr.bf16.mxu0 %v1279
    %2294 = vmatpush1.bf16.msra.mxu0 %v1278
    %2295 = vmatprep.subr.bf16.mxu0 %v1283
    %2296 = vmatpush1.bf16.msra.mxu0 %v1282
    %2297 = vmatprep.subr.bf16.mxu0 %v1287
    %2298 = vmatpush1.bf16.msra.mxu0 %v1286
    %2299 = vmatprep.subr.bf16.mxu0 %v1291
    %2300 = vmatpush1.bf16.msra.mxu0 %v1290
    %2301 = vmatprep.subr.bf16.mxu0 0
    %2302 = vmatpush1.bf16.msra.mxu0 0
    %2303 = vmatprep.subr.bf16.mxu0 0
    %2304 = vmatpush1.bf16.msra.mxu0 0
    %2305 = vmatprep.subr.bf16.mxu0 0
    %2306 = vmatpush1.bf16.msra.mxu0 0
    %2307 = vmatprep.subr.bf16.mxu0 0
    %2308 = vmatpush1.bf16.msra.mxu0 0
    %2309 = vmatprep.subr.bf16.mxu0 0
    %2310 = vmatpush1.bf16.msra.mxu0 0
    %2311 = vmatprep.subr.bf16.mxu0 0
    %2312 = vmatpush1.bf16.msra.mxu0 0
    %2313 = vmatprep.subr.bf16.mxu0 0
    %2314 = vmatpush1.bf16.msra.mxu0 0
    %2315 = vmatprep.subr.bf16.mxu0 0
    %2316 = vmatpush1.bf16.msra.mxu0 0
    %2317 = vmatprep.mubr.bf16.mxu0 0
    %2318 = vmatmul.mubr.bf16.gmra.mrb[0].mxu0 %v2243
    %v2319 = vpop.f32.mrb[0].mxu0
    %v2320 = vadd.f32 0.0, %v2319
    %v2321 = vpop.f32.mrb[0].mxu0
    %v2322 = vadd.f32 0.0, %v2321
    %v2323 = vpop.f32.mrb[0].mxu0
    %v2324 = vpop.f32.mrb[0].mxu0
    %2325 = vdwg.mxu0
    %v2326 = vadd.f32 %v2239, %v2279
    %v2327 = vadd.f32 %v2240, %v2281
    %v2328 = vadd.f32 %v2241, %v2320
    %v2329 = vadd.f32 %v2242, %v2322
    %v2330 = vxor.u32 %v2235, 2147483648
    %v2331 = vmul.f32 %v2330, 1.442695
    %v2332 = vpow.pop %v2331
    %v2333 = vadd.f32 %v2332, 1.0
    %v2334 = vrcp.pop %v2333
    %v2335 = vmul.f32 1.0, %v2334
    %v2336 = vxor.u32 %v2236, 2147483648
    %v2337 = vmul.f32 %v2336, 1.442695
    %v2338 = vpow.pop %v2337
    %v2339 = vadd.f32 %v2338, 1.0
    %v2340 = vrcp.pop %v2339
    %v2341 = vmul.f32 1.0, %v2340
    %v2342 = vtanh.pop %v2237
    %v2343 = vxor.u32 %v2238, 2147483648
    %v2344 = vmul.f32 %v2343, 1.442695
    %v2345 = vpow.pop %v2344
    %v2346 = vadd.f32 %v2345, 1.0
    %v2347 = vrcp.pop %v2346
    %v2348 = vmul.f32 1.0, %v2347
    %v2349 = vmul.f32 %v2341, %v2121
    %v2350 = vmul.f32 %v2335, %v2342
    %v2351 = vadd.f32 %v2349, %v2350
    %v2352 = vtanh.pop %v2351
    %v2353 = vmul.f32 %v2348, %v2352
    %v2354 = vxor.u32 %v2326, 2147483648
    %v2355 = vmul.f32 %v2354, 1.442695
    %v2356 = vpow.pop %v2355
    %v2357 = vadd.f32 %v2356, 1.0
    %v2358 = vrcp.pop %v2357
    %v2359 = vmul.f32 1.0, %v2358
    %v2360 = vxor.u32 %v2327, 2147483648
    %v2361 = vmul.f32 %v2360, 1.442695
    %v2362 = vpow.pop %v2361
    %v2363 = vadd.f32 %v2362, 1.0
    %v2364 = vrcp.pop %v2363
    %v2365 = vmul.f32 1.0, %v2364
    %v2366 = vtanh.pop %v2328
    %v2367 = vxor.u32 %v2329, 2147483648
    %v2368 = vmul.f32 %v2367, 1.442695
    %v2369 = vpow.pop %v2368
    %v2370 = vadd.f32 %v2369, 1.0
    %v2371 = vrcp.pop %v2370
    %v2372 = vmul.f32 1.0, %v2371
    %v2373 = vmul.f32 %v2365, %v2145
    %v2374 = vmul.f32 %v2359, %v2366
    %v2375 = vadd.f32 %v2373, %v2374
    %v2376 = vtanh.pop %v2375
    %v2377 = vmul.f32 %v2372, %v2376
    %v2378 = vld [vmem:[#allocation2 + $0x140] sm:$0xff]
    %v2379 = vld [vmem:[#allocation2 + $0x148] sm:$0xff]
    %v2380 = vld [vmem:[#allocation2 + $0x150] sm:$0xff]
    %v2381 = vld [vmem:[#allocation2 + $0x158] sm:$0xff]
    %v2382 = vpack.c.bf16 %v2353, %v2353
    %2383 = vmatprep.subr.bf16.mxu0 %v979
    %2384 = vmatpush1.bf16.msra.mxu0 %v978
    %2385 = vmatprep.subr.bf16.mxu0 %v983
    %2386 = vmatpush1.bf16.msra.mxu0 %v982
    %2387 = vmatprep.subr.bf16.mxu0 %v987
    %2388 = vmatpush1.bf16.msra.mxu0 %v986
    %2389 = vmatprep.subr.bf16.mxu0 %v991
    %2390 = vmatpush1.bf16.msra.mxu0 %v990
    %2391 = vmatprep.subr.bf16.mxu0 %v995
    %2392 = vmatpush1.bf16.msra.mxu0 %v994
    %2393 = vmatprep.subr.bf16.mxu0 %v999
    %2394 = vmatpush1.bf16.msra.mxu0 %v998
    %2395 = vmatprep.subr.bf16.mxu0 %v1003
    %2396 = vmatpush1.bf16.msra.mxu0 %v1002
    %2397 = vmatprep.subr.bf16.mxu0 %v1007
    %2398 = vmatpush1.bf16.msra.mxu0 %v1006
    %2399 = vmatprep.subr.bf16.mxu0 0
    %2400 = vmatpush1.bf16.msra.mxu0 0
    %2401 = vmatprep.subr.bf16.mxu0 0
    %2402 = vmatpush1.bf16.msra.mxu0 0
    %2403 = vmatprep.subr.bf16.mxu0 0
    %2404 = vmatpush1.bf16.msra.mxu0 0
    %2405 = vmatprep.subr.bf16.mxu0 0
    %2406 = vmatpush1.bf16.msra.mxu0 0
    %2407 = vmatprep.subr.bf16.mxu0 0
    %2408 = vmatpush1.bf16.msra.mxu0 0
    %2409 = vmatprep.subr.bf16.mxu0 0
    %2410 = vmatpush1.bf16.msra.mxu0 0
    %2411 = vmatprep.subr.bf16.mxu0 0
    %2412 = vmatpush1.bf16.msra.mxu0 0
    %2413 = vmatprep.subr.bf16.mxu0 0
    %2414 = vmatpush1.bf16.msra.mxu0 0
    %2415 = vmatprep.mubr.bf16.mxu0 0
    %2416 = vmatmul.mubr.bf16.gmra.mrb[0].mxu0 %v2382
    %v2417 = vpop.f32.mrb[0].mxu0
    %v2418 = vadd.f32 0.0, %v2417
    %v2419 = vpop.f32.mrb[0].mxu0
    %v2420 = vadd.f32 0.0, %v2419
    %v2421 = vpop.f32.mrb[0].mxu0
    %v2422 = vpop.f32.mrb[0].mxu0
    %2423 = vdwg.mxu0
    %2424 = vmatprep.subr.bf16.mxu0 %v981
    %2425 = vmatpush1.bf16.msra.mxu0 %v980
    %2426 = vmatprep.subr.bf16.mxu0 %v985
    %2427 = vmatpush1.bf16.msra.mxu0 %v984
    %2428 = vmatprep.subr.bf16.mxu0 %v989
    %2429 = vmatpush1.bf16.msra.mxu0 %v988
    %2430 = vmatprep.subr.bf16.mxu0 %v993
    %2431 = vmatpush1.bf16.msra.mxu0 %v992
    %2432 = vmatprep.subr.bf16.mxu0 %v997
    %2433 = vmatpush1.bf16.msra.mxu0 %v996
    %2434 = vmatprep.subr.bf16.mxu0 %v1001
    %2435 = vmatpush1.bf16.msra.mxu0 %v1000
    %2436 = vmatprep.subr.bf16.mxu0 %v1005
    %2437 = vmatpush1.bf16.msra.mxu0 %v1004
    %2438 = vmatprep.subr.bf16.mxu0 %v1009
    %2439 = vmatpush1.bf16.msra.mxu0 %v1008
    %2440 = vmatprep.subr.bf16.mxu0 0
    %2441 = vmatpush1.bf16.msra.mxu0 0
    %2442 = vmatprep.subr.bf16.mxu0 0
    %2443 = vmatpush1.bf16.msra.mxu0 0
    %2444 = vmatprep.subr.bf16.mxu0 0
    %2445 = vmatpush1.bf16.msra.mxu0 0
    %2446 = vmatprep.subr.bf16.mxu0 0
    %2447 = vmatpush1.bf16.msra.mxu0 0
    %2448 = vmatprep.subr.bf16.mxu0 0
    %2449 = vmatpush1.bf16.msra.mxu0 0
    %2450 = vmatprep.subr.bf16.mxu0 0
    %2451 = vmatpush1.bf16.msra.mxu0 0
    %2452 = vmatprep.subr.bf16.mxu0 0
    %2453 = vmatpush1.bf16.msra.mxu0 0
    %2454 = vmatprep.subr.bf16.mxu0 0
    %2455 = vmatpush1.bf16.msra.mxu0 0
    %2456 = vmatprep.mubr.bf16.mxu0 0
    %2457 = vmatmul.mubr.bf16.gmra.mrb[0].mxu0 %v2382
    %v2458 = vpop.f32.mrb[0].mxu0
    %v2459 = vadd.f32 0.0, %v2458
    %v2460 = vpop.f32.mrb[0].mxu0
    %v2461 = vadd.f32 0.0, %v2460
    %v2462 = vpop.f32.mrb[0].mxu0
    %v2463 = vpop.f32.mrb[0].mxu0
    %2464 = vdwg.mxu0
    %v2465 = vadd.f32 %v2378, %v2418
    %v2466 = vadd.f32 %v2379, %v2420
    %v2467 = vadd.f32 %v2380, %v2459
    %v2468 = vadd.f32 %v2381, %v2461
    %v2469 = vld [vmem:[#allocation2 + $0xa0] sm:$0xff]
    %v2470 = vld [vmem:[#allocation2 + $0xa8] sm:$0xff]
    %v2471 = vld [vmem:[#allocation2 + $0xb0] sm:$0xff]
    %v2472 = vld [vmem:[#allocation2 + $0xb8] sm:$0xff]
    %v2473 = vpack.c.bf16 %v2377, %v2377
    %2474 = vmatprep.subr.bf16.mxu0 %v1261
    %2475 = vmatpush1.bf16.msra.mxu0 %v1260
    %2476 = vmatprep.subr.bf16.mxu0 %v1265
    %2477 = vmatpush1.bf16.msra.mxu0 %v1264
    %2478 = vmatprep.subr.bf16.mxu0 %v1269
    %2479 = vmatpush1.bf16.msra.mxu0 %v1268
    %2480 = vmatprep.subr.bf16.mxu0 %v1273
    %2481 = vmatpush1.bf16.msra.mxu0 %v1272
    %2482 = vmatprep.subr.bf16.mxu0 %v1277
    %2483 = vmatpush1.bf16.msra.mxu0 %v1276
    %2484 = vmatprep.subr.bf16.mxu0 %v1281
    %2485 = vmatpush1.bf16.msra.mxu0 %v1280
    %2486 = vmatprep.subr.bf16.mxu0 %v1285
    %2487 = vmatpush1.bf16.msra.mxu0 %v1284
    %2488 = vmatprep.subr.bf16.mxu0 %v1289
    %2489 = vmatpush1.bf16.msra.mxu0 %v1288
    %2490 = vmatprep.subr.bf16.mxu0 0
    %2491 = vmatpush1.bf16.msra.mxu0 0
    %2492 = vmatprep.subr.bf16.mxu0 0
    %2493 = vmatpush1.bf16.msra.mxu0 0
    %2494 = vmatprep.subr.bf16.mxu0 0
    %2495 = vmatpush1.bf16.msra.mxu0 0
    %2496 = vmatprep.subr.bf16.mxu0 0
    %2497 = vmatpush1.bf16.msra.mxu0 0
    %2498 = vmatprep.subr.bf16.mxu0 0
    %2499 = vmatpush1.bf16.msra.mxu0 0
    %2500 = vmatprep.subr.bf16.mxu0 0
    %2501 = vmatpush1.bf16.msra.mxu0 0
    %2502 = vmatprep.subr.bf16.mxu0 0
    %2503 = vmatpush1.bf16.msra.mxu0 0
    %2504 = vmatprep.subr.bf16.mxu0 0
    %2505 = vmatpush1.bf16.msra.mxu0 0
    %2506 = vmatprep.mubr.bf16.mxu0 0
    %2507 = vmatmul.mubr.bf16.gmra.mrb[0].mxu0 %v2473
    %v2508 = vpop.f32.mrb[0].mxu0
    %v2509 = vadd.f32 0.0, %v2508
    %v2510 = vpop.f32.mrb[0].mxu0
    %v2511 = vadd.f32 0.0, %v2510
    %v2512 = vpop.f32.mrb[0].mxu0
    %v2513 = vpop.f32.mrb[0].mxu0
    %2514 = vdwg.mxu0
    %2515 = vmatprep.subr.bf16.mxu0 %v1263
    %2516 = vmatpush1.bf16.msra.mxu0 %v1262
    %2517 = vmatprep.subr.bf16.mxu0 %v1267
    %2518 = vmatpush1.bf16.msra.mxu0 %v1266
    %2519 = vmatprep.subr.bf16.mxu0 %v1271
    %2520 = vmatpush1.bf16.msra.mxu0 %v1270
    %2521 = vmatprep.subr.bf16.mxu0 %v1275
    %2522 = vmatpush1.bf16.msra.mxu0 %v1274
    %2523 = vmatprep.subr.bf16.mxu0 %v1279
    %2524 = vmatpush1.bf16.msra.mxu0 %v1278
    %2525 = vmatprep.subr.bf16.mxu0 %v1283
    %2526 = vmatpush1.bf16.msra.mxu0 %v1282
    %2527 = vmatprep.subr.bf16.mxu0 %v1287
    %2528 = vmatpush1.bf16.msra.mxu0 %v1286
    %2529 = vmatprep.subr.bf16.mxu0 %v1291
    %2530 = vmatpush1.bf16.msra.mxu0 %v1290
    %2531 = vmatprep.subr.bf16.mxu0 0
    %2532 = vmatpush1.bf16.msra.mxu0 0
    %2533 = vmatprep.subr.bf16.mxu0 0
    %2534 = vmatpush1.bf16.msra.mxu0 0
    %2535 = vmatprep.subr.bf16.mxu0 0
    %2536 = vmatpush1.bf16.msra.mxu0 0
    %2537 = vmatprep.subr.bf16.mxu0 0
    %2538 = vmatpush1.bf16.msra.mxu0 0
    %2539 = vmatprep.subr.bf16.mxu0 0
    %2540 = vmatpush1.bf16.msra.mxu0 0
    %2541 = vmatprep.subr.bf16.mxu0 0
    %2542 = vmatpush1.bf16.msra.mxu0 0
    %2543 = vmatprep.subr.bf16.mxu0 0
    %2544 = vmatpush1.bf16.msra.mxu0 0
    %2545 = vmatprep.subr.bf16.mxu0 0
    %2546 = vmatpush1.bf16.msra.mxu0 0
    %2547 = vmatprep.mubr.bf16.mxu0 0
    %2548 = vmatmul.mubr.bf16.gmra.mrb[0].mxu0 %v2473
    %v2549 = vpop.f32.mrb[0].mxu0
    %v2550 = vadd.f32 0.0, %v2549
    %v2551 = vpop.f32.mrb[0].mxu0
    %v2552 = vadd.f32 0.0, %v2551
    %v2553 = vpop.f32.mrb[0].mxu0
    %v2554 = vpop.f32.mrb[0].mxu0
    %2555 = vdwg.mxu0
    %v2556 = vadd.f32 %v2469, %v2509
    %v2557 = vadd.f32 %v2470, %v2511
    %v2558 = vadd.f32 %v2471, %v2550
    %v2559 = vadd.f32 %v2472, %v2552
    %v2560 = vxor.u32 %v2465, 2147483648
    %v2561 = vmul.f32 %v2560, 1.442695
    %v2562 = vpow.pop %v2561
    %v2563 = vadd.f32 %v2562, 1.0
    %v2564 = vrcp.pop %v2563
    %v2565 = vmul.f32 1.0, %v2564
    %v2566 = vxor.u32 %v2466, 2147483648
    %v2567 = vmul.f32 %v2566, 1.442695
    %v2568 = vpow.pop %v2567
    %v2569 = vadd.f32 %v2568, 1.0
    %v2570 = vrcp.pop %v2569
    %v2571 = vmul.f32 1.0, %v2570
    %v2572 = vtanh.pop %v2467
    %v2573 = vxor.u32 %v2468, 2147483648
    %v2574 = vmul.f32 %v2573, 1.442695
    %v2575 = vpow.pop %v2574
    %v2576 = vadd.f32 %v2575, 1.0
    %v2577 = vrcp.pop %v2576
    %v2578 = vmul.f32 1.0, %v2577
    %v2579 = vmul.f32 %v2571, %v2351
    %v2580 = vmul.f32 %v2565, %v2572
    %v2581 = vadd.f32 %v2579, %v2580
    %v2582 = vtanh.pop %v2581
    %v2583 = vmul.f32 %v2578, %v2582
    %v2584 = vxor.u32 %v2556, 2147483648
    %v2585 = vmul.f32 %v2584, 1.442695
    %v2586 = vpow.pop %v2585
    %v2587 = vadd.f32 %v2586, 1.0
    %v2588 = vrcp.pop %v2587
    %v2589 = vmul.f32 1.0, %v2588
    %v2590 = vxor.u32 %v2557, 2147483648
    %v2591 = vmul.f32 %v2590, 1.442695
    %v2592 = vpow.pop %v2591
    %v2593 = vadd.f32 %v2592, 1.0
    %v2594 = vrcp.pop %v2593
    %v2595 = vmul.f32 1.0, %v2594
    %v2596 = vtanh.pop %v2558
    %v2597 = vxor.u32 %v2559, 2147483648
    %v2598 = vmul.f32 %v2597, 1.442695
    %v2599 = vpow.pop %v2598
    %v2600 = vadd.f32 %v2599, 1.0
    %v2601 = vrcp.pop %v2600
    %v2602 = vmul.f32 1.0, %v2601
    %v2603 = vmul.f32 %v2595, %v2375
    %v2604 = vmul.f32 %v2589, %v2596
    %v2605 = vadd.f32 %v2603, %v2604
    %v2606 = vtanh.pop %v2605
    %v2607 = vmul.f32 %v2602, %v2606
    %v2608 = vld [vmem:[#allocation2 + $0x180] sm:$0xff]
    %v2609 = vld [vmem:[#allocation2 + $0x188] sm:$0xff]
    %v2610 = vld [vmem:[#allocation2 + $0x190] sm:$0xff]
    %v2611 = vld [vmem:[#allocation2 + $0x198] sm:$0xff]
    %v2612 = vpack.c.bf16 %v2583, %v2583
    %2613 = vmatprep.subr.bf16.mxu0 %v979
    %2614 = vmatpush1.bf16.msra.mxu0 %v978
    %2615 = vmatprep.subr.bf16.mxu0 %v983
    %2616 = vmatpush1.bf16.msra.mxu0 %v982
    %2617 = vmatprep.subr.bf16.mxu0 %v987
    %2618 = vmatpush1.bf16.msra.mxu0 %v986
    %2619 = vmatprep.subr.bf16.mxu0 %v991
    %2620 = vmatpush1.bf16.msra.mxu0 %v990
    %2621 = vmatprep.subr.bf16.mxu0 %v995
    %2622 = vmatpush1.bf16.msra.mxu0 %v994
    %2623 = vmatprep.subr.bf16.mxu0 %v999
    %2624 = vmatpush1.bf16.msra.mxu0 %v998
    %2625 = vmatprep.subr.bf16.mxu0 %v1003
    %2626 = vmatpush1.bf16.msra.mxu0 %v1002
    %2627 = vmatprep.subr.bf16.mxu0 %v1007
    %2628 = vmatpush1.bf16.msra.mxu0 %v1006
    %2629 = vmatprep.subr.bf16.mxu0 0
    %2630 = vmatpush1.bf16.msra.mxu0 0
    %2631 = vmatprep.subr.bf16.mxu0 0
    %2632 = vmatpush1.bf16.msra.mxu0 0
    %2633 = vmatprep.subr.bf16.mxu0 0
    %2634 = vmatpush1.bf16.msra.mxu0 0
    %2635 = vmatprep.subr.bf16.mxu0 0
    %2636 = vmatpush1.bf16.msra.mxu0 0
    %2637 = vmatprep.subr.bf16.mxu0 0
    %2638 = vmatpush1.bf16.msra.mxu0 0
    %2639 = vmatprep.subr.bf16.mxu0 0
    %2640 = vmatpush1.bf16.msra.mxu0 0
    %2641 = vmatprep.subr.bf16.mxu0 0
    %2642 = vmatpush1.bf16.msra.mxu0 0
    %2643 = vmatprep.subr.bf16.mxu0 0
    %2644 = vmatpush1.bf16.msra.mxu0 0
    %2645 = vmatprep.mubr.bf16.mxu0 0
    %2646 = vmatmul.mubr.bf16.gmra.mrb[0].mxu0 %v2612
    %v2647 = vpop.f32.mrb[0].mxu0
    %v2648 = vadd.f32 0.0, %v2647
    %v2649 = vpop.f32.mrb[0].mxu0
    %v2650 = vadd.f32 0.0, %v2649
    %v2651 = vpop.f32.mrb[0].mxu0
    %v2652 = vpop.f32.mrb[0].mxu0
    %2653 = vdwg.mxu0
    %2654 = vmatprep.subr.bf16.mxu0 %v981
    %2655 = vmatpush1.bf16.msra.mxu0 %v980
    %2656 = vmatprep.subr.bf16.mxu0 %v985
    %2657 = vmatpush1.bf16.msra.mxu0 %v984
    %2658 = vmatprep.subr.bf16.mxu0 %v989
    %2659 = vmatpush1.bf16.msra.mxu0 %v988
    %2660 = vmatprep.subr.bf16.mxu0 %v993
    %2661 = vmatpush1.bf16.msra.mxu0 %v992
    %2662 = vmatprep.subr.bf16.mxu0 %v997
    %2663 = vmatpush1.bf16.msra.mxu0 %v996
    %2664 = vmatprep.subr.bf16.mxu0 %v1001
    %2665 = vmatpush1.bf16.msra.mxu0 %v1000
    %2666 = vmatprep.subr.bf16.mxu0 %v1005
    %2667 = vmatpush1.bf16.msra.mxu0 %v1004
    %2668 = vmatprep.subr.bf16.mxu0 %v1009
    %2669 = vmatpush1.bf16.msra.mxu0 %v1008
    %2670 = vmatprep.subr.bf16.mxu0 0
    %2671 = vmatpush1.bf16.msra.mxu0 0
    %2672 = vmatprep.subr.bf16.mxu0 0
    %2673 = vmatpush1.bf16.msra.mxu0 0
    %2674 = vmatprep.subr.bf16.mxu0 0
    %2675 = vmatpush1.bf16.msra.mxu0 0
    %2676 = vmatprep.subr.bf16.mxu0 0
    %2677 = vmatpush1.bf16.msra.mxu0 0
    %2678 = vmatprep.subr.bf16.mxu0 0
    %2679 = vmatpush1.bf16.msra.mxu0 0
    %2680 = vmatprep.subr.bf16.mxu0 0
    %2681 = vmatpush1.bf16.msra.mxu0 0
    %2682 = vmatprep.subr.bf16.mxu0 0
    %2683 = vmatpush1.bf16.msra.mxu0 0
    %2684 = vmatprep.subr.bf16.mxu0 0
    %2685 = vmatpush1.bf16.msra.mxu0 0
    %2686 = vmatprep.mubr.bf16.mxu0 0
    %2687 = vmatmul.mubr.bf16.gmra.mrb[0].mxu0 %v2612
    %v2688 = vpop.f32.mrb[0].mxu0
    %v2689 = vadd.f32 0.0, %v2688
    %v2690 = vpop.f32.mrb[0].mxu0
    %v2691 = vadd.f32 0.0, %v2690
    %v2692 = vpop.f32.mrb[0].mxu0
    %v2693 = vpop.f32.mrb[0].mxu0
    %2694 = vdwg.mxu0
    %v2695 = vadd.f32 %v2608, %v2648
    %v2696 = vadd.f32 %v2609, %v2650
    %v2697 = vadd.f32 %v2610, %v2689
    %v2698 = vadd.f32 %v2611, %v2691
    %v2699 = vld [vmem:[#allocation2 + $0x60] sm:$0xff]
    %v2700 = vld [vmem:[#allocation2 + $0x68] sm:$0xff]
    %v2701 = vld [vmem:[#allocation2 + $0x70] sm:$0xff]
    %v2702 = vld [vmem:[#allocation2 + $0x78] sm:$0xff]
    %v2703 = vpack.c.bf16 %v2607, %v2607
    %2704 = vmatprep.subr.bf16.mxu0 %v1261
    %2705 = vmatpush1.bf16.msra.mxu0 %v1260
    %2706 = vmatprep.subr.bf16.mxu0 %v1265
    %2707 = vmatpush1.bf16.msra.mxu0 %v1264
    %2708 = vmatprep.subr.bf16.mxu0 %v1269
    %2709 = vmatpush1.bf16.msra.mxu0 %v1268
    %2710 = vmatprep.subr.bf16.mxu0 %v1273
    %2711 = vmatpush1.bf16.msra.mxu0 %v1272
    %2712 = vmatprep.subr.bf16.mxu0 %v1277
    %2713 = vmatpush1.bf16.msra.mxu0 %v1276
    %2714 = vmatprep.subr.bf16.mxu0 %v1281
    %2715 = vmatpush1.bf16.msra.mxu0 %v1280
    %2716 = vmatprep.subr.bf16.mxu0 %v1285
    %2717 = vmatpush1.bf16.msra.mxu0 %v1284
    %2718 = vmatprep.subr.bf16.mxu0 %v1289
    %2719 = vmatpush1.bf16.msra.mxu0 %v1288
    %2720 = vmatprep.subr.bf16.mxu0 0
    %2721 = vmatpush1.bf16.msra.mxu0 0
    %2722 = vmatprep.subr.bf16.mxu0 0
    %2723 = vmatpush1.bf16.msra.mxu0 0
    %2724 = vmatprep.subr.bf16.mxu0 0
    %2725 = vmatpush1.bf16.msra.mxu0 0
    %2726 = vmatprep.subr.bf16.mxu0 0
    %2727 = vmatpush1.bf16.msra.mxu0 0
    %2728 = vmatprep.subr.bf16.mxu0 0
    %2729 = vmatpush1.bf16.msra.mxu0 0
    %2730 = vmatprep.subr.bf16.mxu0 0
    %2731 = vmatpush1.bf16.msra.mxu0 0
    %2732 = vmatprep.subr.bf16.mxu0 0
    %2733 = vmatpush1.bf16.msra.mxu0 0
    %2734 = vmatprep.subr.bf16.mxu0 0
    %2735 = vmatpush1.bf16.msra.mxu0 0
    %2736 = vmatprep.mubr.bf16.mxu0 0
    %2737 = vmatmul.mubr.bf16.gmra.mrb[0].mxu0 %v2703
    %v2738 = vpop.f32.mrb[0].mxu0
    %v2739 = vadd.f32 0.0, %v2738
    %v2740 = vpop.f32.mrb[0].mxu0
    %v2741 = vadd.f32 0.0, %v2740
    %v2742 = vpop.f32.mrb[0].mxu0
    %v2743 = vpop.f32.mrb[0].mxu0
    %2744 = vdwg.mxu0
    %2745 = vmatprep.subr.bf16.mxu0 %v1263
    %2746 = vmatpush1.bf16.msra.mxu0 %v1262
    %2747 = vmatprep.subr.bf16.mxu0 %v1267
    %2748 = vmatpush1.bf16.msra.mxu0 %v1266
    %2749 = vmatprep.subr.bf16.mxu0 %v1271
    %2750 = vmatpush1.bf16.msra.mxu0 %v1270
    %2751 = vmatprep.subr.bf16.mxu0 %v1275
    %2752 = vmatpush1.bf16.msra.mxu0 %v1274
    %2753 = vmatprep.subr.bf16.mxu0 %v1279
    %2754 = vmatpush1.bf16.msra.mxu0 %v1278
    %2755 = vmatprep.subr.bf16.mxu0 %v1283
    %2756 = vmatpush1.bf16.msra.mxu0 %v1282
    %2757 = vmatprep.subr.bf16.mxu0 %v1287
    %2758 = vmatpush1.bf16.msra.mxu0 %v1286
    %2759 = vmatprep.subr.bf16.mxu0 %v1291
    %2760 = vmatpush1.bf16.msra.mxu0 %v1290
    %2761 = vmatprep.subr.bf16.mxu0 0
    %2762 = vmatpush1.bf16.msra.mxu0 0
    %2763 = vmatprep.subr.bf16.mxu0 0
    %2764 = vmatpush1.bf16.msra.mxu0 0
    %2765 = vmatprep.subr.bf16.mxu0 0
    %2766 = vmatpush1.bf16.msra.mxu0 0
    %2767 = vmatprep.subr.bf16.mxu0 0
    %2768 = vmatpush1.bf16.msra.mxu0 0
    %2769 = vmatprep.subr.bf16.mxu0 0
    %2770 = vmatpush1.bf16.msra.mxu0 0
    %2771 = vmatprep.subr.bf16.mxu0 0
    %2772 = vmatpush1.bf16.msra.mxu0 0
    %2773 = vmatprep.subr.bf16.mxu0 0
    %2774 = vmatpush1.bf16.msra.mxu0 0
    %2775 = vmatprep.subr.bf16.mxu0 0
    %2776 = vmatpush1.bf16.msra.mxu0 0
    %2777 = vmatprep.mubr.bf16.mxu0 0
    %2778 = vmatmul.mubr.bf16.gmra.mrb[0].mxu0 %v2703
    %v2779 = vpop.f32.mrb[0].mxu0
    %v2780 = vadd.f32 0.0, %v2779
    %v2781 = vpop.f32.mrb[0].mxu0
    %v2782 = vadd.f32 0.0, %v2781
    %v2783 = vpop.f32.mrb[0].mxu0
    %v2784 = vpop.f32.mrb[0].mxu0
    %2785 = vdwg.mxu0
    %v2786 = vadd.f32 %v2699, %v2739
    %v2787 = vadd.f32 %v2700, %v2741
    %v2788 = vadd.f32 %v2701, %v2780
    %v2789 = vadd.f32 %v2702, %v2782
    %v2790 = vxor.u32 %v2695, 2147483648
    %v2791 = vmul.f32 %v2790, 1.442695
    %v2792 = vpow.pop %v2791
    %v2793 = vadd.f32 %v2792, 1.0
    %v2794 = vrcp.pop %v2793
    %v2795 = vmul.f32 1.0, %v2794
    %v2796 = vxor.u32 %v2696, 2147483648
    %v2797 = vmul.f32 %v2796, 1.442695
    %v2798 = vpow.pop %v2797
    %v2799 = vadd.f32 %v2798, 1.0
    %v2800 = vrcp.pop %v2799
    %v2801 = vmul.f32 1.0, %v2800
    %v2802 = vtanh.pop %v2697
    %v2803 = vxor.u32 %v2698, 2147483648
    %v2804 = vmul.f32 %v2803, 1.442695
    %v2805 = vpow.pop %v2804
    %v2806 = vadd.f32 %v2805, 1.0
    %v2807 = vrcp.pop %v2806
    %v2808 = vmul.f32 1.0, %v2807
    %v2809 = vmul.f32 %v2801, %v2581
    %v2810 = vmul.f32 %v2795, %v2802
    %v2811 = vadd.f32 %v2809, %v2810
    %v2812 = vtanh.pop %v2811
    %v2813 = vmul.f32 %v2808, %v2812
    %v2814 = vxor.u32 %v2786, 2147483648
    %v2815 = vmul.f32 %v2814, 1.442695
    %v2816 = vpow.pop %v2815
    %v2817 = vadd.f32 %v2816, 1.0
    %v2818 = vrcp.pop %v2817
    %v2819 = vmul.f32 1.0, %v2818
    %v2820 = vxor.u32 %v2787, 2147483648
    %v2821 = vmul.f32 %v2820, 1.442695
    %v2822 = vpow.pop %v2821
    %v2823 = vadd.f32 %v2822, 1.0
    %v2824 = vrcp.pop %v2823
    %v2825 = vmul.f32 1.0, %v2824
    %v2826 = vtanh.pop %v2788
    %v2827 = vxor.u32 %v2789, 2147483648
    %v2828 = vmul.f32 %v2827, 1.442695
    %v2829 = vpow.pop %v2828
    %v2830 = vadd.f32 %v2829, 1.0
    %v2831 = vrcp.pop %v2830
    %v2832 = vmul.f32 1.0, %v2831
    %v2833 = vmul.f32 %v2825, %v2605
    %v2834 = vmul.f32 %v2819, %v2826
    %v2835 = vadd.f32 %v2833, %v2834
    %v2836 = vtanh.pop %v2835
    %v2837 = vmul.f32 %v2832, %v2836
    %v2838 = vld [vmem:[#allocation2 + $0x1c0] sm:$0xff]
    %v2839 = vld [vmem:[#allocation2 + $0x1c8] sm:$0xff]
    %v2840 = vld [vmem:[#allocation2 + $0x1d0] sm:$0xff]
    %v2841 = vld [vmem:[#allocation2 + $0x1d8] sm:$0xff]
    %v2842 = vpack.c.bf16 %v2813, %v2813
    %2843 = vmatprep.subr.bf16.mxu0 %v979
    %2844 = vmatpush1.bf16.msra.mxu0 %v978
    %2845 = vmatprep.subr.bf16.mxu0 %v983
    %2846 = vmatpush1.bf16.msra.mxu0 %v982
    %2847 = vmatprep.subr.bf16.mxu0 %v987
    %2848 = vmatpush1.bf16.msra.mxu0 %v986
    %2849 = vmatprep.subr.bf16.mxu0 %v991
    %2850 = vmatpush1.bf16.msra.mxu0 %v990
    %2851 = vmatprep.subr.bf16.mxu0 %v995
    %2852 = vmatpush1.bf16.msra.mxu0 %v994
    %2853 = vmatprep.subr.bf16.mxu0 %v999
    %2854 = vmatpush1.bf16.msra.mxu0 %v998
    %2855 = vmatprep.subr.bf16.mxu0 %v1003
    %2856 = vmatpush1.bf16.msra.mxu0 %v1002
    %2857 = vmatprep.subr.bf16.mxu0 %v1007
    %2858 = vmatpush1.bf16.msra.mxu0 %v1006
    %2859 = vmatprep.subr.bf16.mxu0 0
    %2860 = vmatpush1.bf16.msra.mxu0 0
    %2861 = vmatprep.subr.bf16.mxu0 0
    %2862 = vmatpush1.bf16.msra.mxu0 0
    %2863 = vmatprep.subr.bf16.mxu0 0
    %2864 = vmatpush1.bf16.msra.mxu0 0
    %2865 = vmatprep.subr.bf16.mxu0 0
    %2866 = vmatpush1.bf16.msra.mxu0 0
    %2867 = vmatprep.subr.bf16.mxu0 0
    %2868 = vmatpush1.bf16.msra.mxu0 0
    %2869 = vmatprep.subr.bf16.mxu0 0
    %2870 = vmatpush1.bf16.msra.mxu0 0
    %2871 = vmatprep.subr.bf16.mxu0 0
    %2872 = vmatpush1.bf16.msra.mxu0 0
    %2873 = vmatprep.subr.bf16.mxu0 0
    %2874 = vmatpush1.bf16.msra.mxu0 0
    %2875 = vmatprep.mubr.bf16.mxu0 0
    %2876 = vmatmul.mubr.bf16.gmra.mrb[0].mxu0 %v2842
    %v2877 = vpop.f32.mrb[0].mxu0
    %v2878 = vadd.f32 0.0, %v2877
    %v2879 = vpop.f32.mrb[0].mxu0
    %v2880 = vadd.f32 0.0, %v2879
    %v2881 = vpop.f32.mrb[0].mxu0
    %v2882 = vpop.f32.mrb[0].mxu0
    %2883 = vdwg.mxu0
    %2884 = vmatprep.subr.bf16.mxu0 %v981
    %2885 = vmatpush1.bf16.msra.mxu0 %v980
    %2886 = vmatprep.subr.bf16.mxu0 %v985
    %2887 = vmatpush1.bf16.msra.mxu0 %v984
    %2888 = vmatprep.subr.bf16.mxu0 %v989
    %2889 = vmatpush1.bf16.msra.mxu0 %v988
    %2890 = vmatprep.subr.bf16.mxu0 %v993
    %2891 = vmatpush1.bf16.msra.mxu0 %v992
    %2892 = vmatprep.subr.bf16.mxu0 %v997
    %2893 = vmatpush1.bf16.msra.mxu0 %v996
    %2894 = vmatprep.subr.bf16.mxu0 %v1001
    %2895 = vmatpush1.bf16.msra.mxu0 %v1000
    %2896 = vmatprep.subr.bf16.mxu0 %v1005
    %2897 = vmatpush1.bf16.msra.mxu0 %v1004
    %2898 = vmatprep.subr.bf16.mxu0 %v1009
    %2899 = vmatpush1.bf16.msra.mxu0 %v1008
    %2900 = vmatprep.subr.bf16.mxu0 0
    %2901 = vmatpush1.bf16.msra.mxu0 0
    %2902 = vmatprep.subr.bf16.mxu0 0
    %2903 = vmatpush1.bf16.msra.mxu0 0
    %2904 = vmatprep.subr.bf16.mxu0 0
    %2905 = vmatpush1.bf16.msra.mxu0 0
    %2906 = vmatprep.subr.bf16.mxu0 0
    %2907 = vmatpush1.bf16.msra.mxu0 0
    %2908 = vmatprep.subr.bf16.mxu0 0
    %2909 = vmatpush1.bf16.msra.mxu0 0
    %2910 = vmatprep.subr.bf16.mxu0 0
    %2911 = vmatpush1.bf16.msra.mxu0 0
    %2912 = vmatprep.subr.bf16.mxu0 0
    %2913 = vmatpush1.bf16.msra.mxu0 0
    %2914 = vmatprep.subr.bf16.mxu0 0
    %2915 = vmatpush1.bf16.msra.mxu0 0
    %2916 = vmatprep.mubr.bf16.mxu0 0
    %2917 = vmatmul.mubr.bf16.gmra.mrb[0].mxu0 %v2842
    %v2918 = vpop.f32.mrb[0].mxu0
    %v2919 = vadd.f32 0.0, %v2918
    %v2920 = vpop.f32.mrb[0].mxu0
    %v2921 = vadd.f32 0.0, %v2920
    %v2922 = vpop.f32.mrb[0].mxu0
    %v2923 = vpop.f32.mrb[0].mxu0
    %2924 = vdwg.mxu0
    %v2925 = vadd.f32 %v2838, %v2878
    %v2926 = vadd.f32 %v2839, %v2880
    %v2927 = vadd.f32 %v2840, %v2919
    %v2928 = vadd.f32 %v2841, %v2921
    %v2929 = vld [vmem:[#allocation2 + $0x20] sm:$0xff]
    %v2930 = vld [vmem:[#allocation2 + $0x28] sm:$0xff]
    %v2931 = vld [vmem:[#allocation2 + $0x30] sm:$0xff]
    %v2932 = vld [vmem:[#allocation2 + $0x38] sm:$0xff]
    %v2933 = vpack.c.bf16 %v2837, %v2837
    %2934 = vmatprep.subr.bf16.mxu0 %v1261
    %2935 = vmatpush1.bf16.msra.mxu0 %v1260
    %2936 = vmatprep.subr.bf16.mxu0 %v1265
    %2937 = vmatpush1.bf16.msra.mxu0 %v1264
    %2938 = vmatprep.subr.bf16.mxu0 %v1269
    %2939 = vmatpush1.bf16.msra.mxu0 %v1268
    %2940 = vmatprep.subr.bf16.mxu0 %v1273
    %2941 = vmatpush1.bf16.msra.mxu0 %v1272
    %2942 = vmatprep.subr.bf16.mxu0 %v1277
    %2943 = vmatpush1.bf16.msra.mxu0 %v1276
    %2944 = vmatprep.subr.bf16.mxu0 %v1281
    %2945 = vmatpush1.bf16.msra.mxu0 %v1280
    %2946 = vmatprep.subr.bf16.mxu0 %v1285
    %2947 = vmatpush1.bf16.msra.mxu0 %v1284
    %2948 = vmatprep.subr.bf16.mxu0 %v1289
    %2949 = vmatpush1.bf16.msra.mxu0 %v1288
    %2950 = vmatprep.subr.bf16.mxu0 0
    %2951 = vmatpush1.bf16.msra.mxu0 0
    %2952 = vmatprep.subr.bf16.mxu0 0
    %2953 = vmatpush1.bf16.msra.mxu0 0
    %2954 = vmatprep.subr.bf16.mxu0 0
    %2955 = vmatpush1.bf16.msra.mxu0 0
    %2956 = vmatprep.subr.bf16.mxu0 0
    %2957 = vmatpush1.bf16.msra.mxu0 0
    %2958 = vmatprep.subr.bf16.mxu0 0
    %2959 = vmatpush1.bf16.msra.mxu0 0
    %2960 = vmatprep.subr.bf16.mxu0 0
    %2961 = vmatpush1.bf16.msra.mxu0 0
    %2962 = vmatprep.subr.bf16.mxu0 0
    %2963 = vmatpush1.bf16.msra.mxu0 0
    %2964 = vmatprep.subr.bf16.mxu0 0
    %2965 = vmatpush1.bf16.msra.mxu0 0
    %2966 = vmatprep.mubr.bf16.mxu0 0
    %2967 = vmatmul.mubr.bf16.gmra.mrb[0].mxu0 %v2933
    %v2968 = vpop.f32.mrb[0].mxu0
    %v2969 = vadd.f32 0.0, %v2968
    %v2970 = vpop.f32.mrb[0].mxu0
    %v2971 = vadd.f32 0.0, %v2970
    %v2972 = vpop.f32.mrb[0].mxu0
    %v2973 = vpop.f32.mrb[0].mxu0
    %2974 = vdwg.mxu0
    %2975 = vmatprep.subr.bf16.mxu0 %v1263
    %2976 = vmatpush1.bf16.msra.mxu0 %v1262
    %2977 = vmatprep.subr.bf16.mxu0 %v1267
    %2978 = vmatpush1.bf16.msra.mxu0 %v1266
    %2979 = vmatprep.subr.bf16.mxu0 %v1271
    %2980 = vmatpush1.bf16.msra.mxu0 %v1270
    %2981 = vmatprep.subr.bf16.mxu0 %v1275
    %2982 = vmatpush1.bf16.msra.mxu0 %v1274
    %2983 = vmatprep.subr.bf16.mxu0 %v1279
    %2984 = vmatpush1.bf16.msra.mxu0 %v1278
    %2985 = vmatprep.subr.bf16.mxu0 %v1283
    %2986 = vmatpush1.bf16.msra.mxu0 %v1282
    %2987 = vmatprep.subr.bf16.mxu0 %v1287
    %2988 = vmatpush1.bf16.msra.mxu0 %v1286
    %2989 = vmatprep.subr.bf16.mxu0 %v1291
    %2990 = vmatpush1.bf16.msra.mxu0 %v1290
    %2991 = vmatprep.subr.bf16.mxu0 0
    %2992 = vmatpush1.bf16.msra.mxu0 0
    %2993 = vmatprep.subr.bf16.mxu0 0
    %2994 = vmatpush1.bf16.msra.mxu0 0
    %2995 = vmatprep.subr.bf16.mxu0 0
    %2996 = vmatpush1.bf16.msra.mxu0 0
    %2997 = vmatprep.subr.bf16.mxu0 0
    %2998 = vmatpush1.bf16.msra.mxu0 0
    %2999 = vmatprep.subr.bf16.mxu0 0
    %3000 = vmatpush1.bf16.msra.mxu0 0
    %3001 = vmatprep.subr.bf16.mxu0 0
    %3002 = vmatpush1.bf16.msra.mxu0 0
    %3003 = vmatprep.subr.bf16.mxu0 0
    %3004 = vmatpush1.bf16.msra.mxu0 0
    %3005 = vmatprep.subr.bf16.mxu0 0
    %3006 = vmatpush1.bf16.msra.mxu0 0
    %3007 = vmatprep.mubr.bf16.mxu0 0
    %3008 = vmatmul.mubr.bf16.gmra.mrb[0].mxu0 %v2933
    %v3009 = vpop.f32.mrb[0].mxu0
    %v3010 = vadd.f32 0.0, %v3009
    %v3011 = vpop.f32.mrb[0].mxu0
    %v3012 = vadd.f32 0.0, %v3011
    %v3013 = vpop.f32.mrb[0].mxu0
    %v3014 = vpop.f32.mrb[0].mxu0
    %3015 = vdwg.mxu0
    %v3016 = vadd.f32 %v2929, %v2969
    %v3017 = vadd.f32 %v2930, %v2971
    %v3018 = vadd.f32 %v2931, %v3010
    %v3019 = vadd.f32 %v2932, %v3012
    %v3020 = vxor.u32 %v2925, 2147483648
    %v3021 = vmul.f32 %v3020, 1.442695
    %v3022 = vpow.pop %v3021
    %v3023 = vadd.f32 %v3022, 1.0
    %v3024 = vrcp.pop %v3023
    %v3025 = vmul.f32 1.0, %v3024
    %v3026 = vxor.u32 %v2926, 2147483648
    %v3027 = vmul.f32 %v3026, 1.442695
    %v3028 = vpow.pop %v3027
    %v3029 = vadd.f32 %v3028, 1.0
    %v3030 = vrcp.pop %v3029
    %v3031 = vmul.f32 1.0, %v3030
    %v3032 = vtanh.pop %v2927
    %v3033 = vxor.u32 %v2928, 2147483648
    %v3034 = vmul.f32 %v3033, 1.442695
    %v3035 = vpow.pop %v3034
    %v3036 = vadd.f32 %v3035, 1.0
    %v3037 = vrcp.pop %v3036
    %v3038 = vmul.f32 1.0, %v3037
    %v3039 = vmul.f32 %v3031, %v2811
    %v3040 = vmul.f32 %v3025, %v3032
    %v3041 = vadd.f32 %v3039, %v3040
    %v3042 = vtanh.pop %v3041
    %v3043 = vmul.f32 %v3038, %v3042
    %v3044 = vxor.u32 %v3016, 2147483648
    %v3045 = vmul.f32 %v3044, 1.442695
    %v3046 = vpow.pop %v3045
    %v3047 = vadd.f32 %v3046, 1.0
    %v3048 = vrcp.pop %v3047
    %v3049 = vmul.f32 1.0, %v3048
    %v3050 = vxor.u32 %v3017, 2147483648
    %v3051 = vmul.f32 %v3050, 1.442695
    %v3052 = vpow.pop %v3051
    %v3053 = vadd.f32 %v3052, 1.0
    %v3054 = vrcp.pop %v3053
    %v3055 = vmul.f32 1.0, %v3054
    %v3056 = vtanh.pop %v3018
    %v3057 = vxor.u32 %v3019, 2147483648
    %v3058 = vmul.f32 %v3057, 1.442695
    %v3059 = vpow.pop %v3058
    %v3060 = vadd.f32 %v3059, 1.0
    %v3061 = vrcp.pop %v3060
    %v3062 = vmul.f32 1.0, %v3061
    %v3063 = vmul.f32 %v3055, %v2835
    %v3064 = vmul.f32 %v3049, %v3056
    %v3065 = vadd.f32 %v3063, %v3064
    %v3066 = vtanh.pop %v3065
    %v3067 = vmul.f32 %v3062, %v3066
    %3068 = vst [vmem:[#allocation11] sm:$0xff] %v3043
    %3069 = vst [vmem:[#allocation11 + $0x8] sm:$0xff] %v3067
    // Predicated region
    $region34: #{tpu_custom_call.1} parent=1 // pred_check
      _
    $region35: #{tpu_custom_call.1} parent=1 // pred_check_branch
      %3071 = sbr.rel (0) target = $region37
    $region36: #{tpu_custom_call.1} parent=1 // pred_region
      %s3073 = ssub.s32 256, 256
      %3074 = vsyncadd [#allocation5], %s3073
      %s3076 = sshll.u32 [#allocation11], 4
      %s3077 = int_to_ptr.vmem [resolvable:$true] %s3076
      %3079 = dma.vmem_to_hbm [thread:$0]  %s3077, 256, %s4, [#allocation5]
    $region37: #{tpu_custom_call.1} parent=1 // pred_fallthru
      _
    // Predicated region
    $region38: #{tpu_custom_call.1} parent=1 // pred_check
      _
    $region39: #{tpu_custom_call.1} parent=1 // pred_check_branch
      %3081 = sbr.rel (0) target = $region41
    $region40: #{tpu_custom_call.1} parent=1 // pred_region
      %3082 = dma.done [#allocation5], 256
    $region41: #{tpu_custom_call.1} parent=1 // pred_fallthru
      _
    %3083 = vsyncpa [#allocation4], 1
    %3084 = vsyncpa [#allocation7], 1
    %3085 = vsyncpa [#allocation10], 1
    %3086 = vsyncpa [#allocation5], 1

</llo_original>
